<compile_context>
chip_gen: v5e
topology: v5e:2x2
jax: 0.10.0
libtpu: 0.0.40
codegen_flags: <defaults>
</compile_context>

<pallas_src>
import jax
import jax.numpy as jnp
from jax import lax
from jax.experimental import pallas as pl
from jax.experimental.pallas import tpu as pltpu


def _round_up(x, m):
    return (x + m - 1) // m * m


def recommender_kernel(user_ref, anime_ref, genre_ref, tag_ref,
                       studio_ref, rel_ref,
                       w1_ref, b1_ref, w2_ref, b2_ref,
                       out_ref):
    # ---- pooling reductions (VPU, sublane-axis reduces) ----
    genre_pool = jnp.mean(genre_ref[...], axis=1)      # (TB, D)
    tag_pool = jnp.mean(tag_ref[...], axis=1)          # (TB, D)
    studio_pool = jnp.sum(studio_ref[...], axis=1)     # (TB, D)  weights pre-folded
    rel_pool = jnp.sum(rel_ref[...], axis=1)           # (TB, D)  weights pre-folded

    # ---- build (TB, F_pad) feature matrix with a lane concat ----
    tb = user_ref.shape[0]
    parts = [user_ref[...], anime_ref[...], genre_pool, tag_pool,
             studio_pool, rel_pool]
    f = sum(p.shape[-1] for p in parts)
    f_pad = w1_ref.shape[0]
    if f_pad > f:  # static trace-time branch (unused when 6*D is 128-aligned)
        parts.append(jnp.zeros((tb, f_pad - f), jnp.float32))
    feat = jnp.concatenate(parts, axis=-1)             # (TB, F_pad)

    # ---- layer 1: single fused MXU matmul over the concatenated K ----
    h = jnp.dot(feat, w1_ref[...], preferred_element_type=jnp.float32) + b1_ref[...]
    h = jnp.maximum(h, 0.0)                            # (TB, H)

    # ---- layer 2: NT matmul (8, H) x (TB, H)^T -> (8, TB); batch on lanes ----
    logits = lax.dot_general(
        w2_ref[...], h, (((1,), (1,)), ((), ())),
        preferred_element_type=jnp.float32) + b2_ref[0, 0]
    out_ref[...] = jax.nn.sigmoid(logits)              # dense (8, TB) store


def recommender_forward(params, user_idx, anime_idx, genre_indices, tag_indices,
                        studio_indices, studio_weights, relation_indices,
                        relation_weights, *, block_b=128):
    B = user_idx.shape[0]
    B_pad = _round_up(B, block_b)
    pad = B_pad - B

    def _pad_rows(x):
        if pad == 0:
            return x
        return jnp.pad(x, ((0, pad),) + ((0, 0),) * (x.ndim - 1))

    user_idx = _pad_rows(user_idx)
    anime_idx = _pad_rows(anime_idx)
    genre_indices = _pad_rows(genre_indices)
    tag_indices = _pad_rows(tag_indices)
    studio_indices = _pad_rows(studio_indices)
    studio_weights = _pad_rows(studio_weights.astype(jnp.float32))
    relation_indices = _pad_rows(relation_indices)
    relation_weights = _pad_rows(relation_weights.astype(jnp.float32))

    # Embedding gathers in plain JAX; per-item weights folded into the gathered
    # rows so the kernel never sees narrow (B, 2)/(B, 3) tensors.
    user_e = params["user_emb"][user_idx]                                  # (Bp, D)
    anime_e = params["anime_emb"][anime_idx]                               # (Bp, D)
    genre_e = params["genre_emb"][genre_indices]                           # (Bp, G, D)
    tag_e = params["tag_emb"][tag_indices]                                 # (Bp, T, D)
    studio_e = params["studio_emb"][studio_indices] * studio_weights[:, :, None]
    rel_e = params["relation_emb"][relation_indices] * relation_weights[:, :, None]

    D = user_e.shape[-1]
    G, T = genre_e.shape[1], tag_e.shape[1]
    S, R = studio_e.shape[1], rel_e.shape[1]
    F_pad, H = params["w1"].shape
    NB = B_pad // block_b

    # Pad w2 to 8 rows (one sublane) so layer 2 is a full-sublane MXU matmul;
    # only row 0 carries the real score head.
    w2_mat = jnp.pad(params["w2"], ((0, 7), (0, 0)))                       # (8, H)

    out = pl.pallas_call(
        recommender_kernel,
        out_shape=jax.ShapeDtypeStruct((8, B_pad), jnp.float32),
        grid=(NB,),
        in_specs=[
            pl.BlockSpec((block_b, D), lambda i: (i, 0)),          # user
            pl.BlockSpec((block_b, D), lambda i: (i, 0)),          # anime
            pl.BlockSpec((block_b, G, D), lambda i: (i, 0, 0)),    # genre
            pl.BlockSpec((block_b, T, D), lambda i: (i, 0, 0)),    # tag
            pl.BlockSpec((block_b, S, D), lambda i: (i, 0, 0)),    # studio (pre-scaled)
            pl.BlockSpec((block_b, R, D), lambda i: (i, 0, 0)),    # relation (pre-scaled)
            pl.BlockSpec((F_pad, H), lambda i: (0, 0)),            # fused W1 (resident)
            pl.BlockSpec((1, H), lambda i: (0, 0)),                # b1 (resident)
            pl.BlockSpec((8, H), lambda i: (0, 0)),                # w2 rows (resident)
            pl.BlockSpec(memory_space=pltpu.MemorySpace.SMEM),     # b2 scalar
        ],
        out_specs=pl.BlockSpec((8, block_b), lambda i: (0, i)),
        compiler_params=pltpu.CompilerParams(
            dimension_semantics=("parallel",)),
    )(user_e, anime_e, genre_e, tag_e, studio_e, rel_e,
      params["w1"], params["b1"], w2_mat, params["b2"])

    return out[0, :B][:, None]                                             # (B, 1)


def init_params(key, n_users, n_anime, n_genres, n_tags, n_studios,
                n_relations, emb_dim, hidden):
    ks = jax.random.split(key, 8)
    s = 0.1
    f = 6 * emb_dim
    f_pad = _round_up(f, 128)
    w1 = s * jax.random.normal(ks[6], (f_pad, hidden), jnp.float32)
    if f_pad > f:
        w1 = w1.at[f:, :].set(0.0)   # rows multiplying the zero feature pad
    return {
        "user_emb": s * jax.random.normal(ks[0], (n_users, emb_dim), jnp.float32),
        "anime_emb": s * jax.random.normal(ks[1], (n_anime, emb_dim), jnp.float32),
        "genre_emb": s * jax.random.normal(ks[2], (n_genres, emb_dim), jnp.float32),
        "tag_emb": s * jax.random.normal(ks[3], (n_tags, emb_dim), jnp.float32),
        "studio_emb": s * jax.random.normal(ks[4], (n_studios, emb_dim), jnp.float32),
        "relation_emb": s * jax.random.normal(ks[5], (n_relations, emb_dim), jnp.float32),
        "w1": w1,                                            # fused [w1u;w1a;w1g;w1t;w1s;w1r]
        "b1": jnp.zeros((1, hidden), jnp.float32),
        "w2": s * jax.random.normal(ks[7], (1, hidden), jnp.float32),
        "b2": jnp.zeros((1, 1), jnp.float32),
    }


def reference_forward(params, user_idx, anime_idx, genre_indices, tag_indices,
                      studio_indices, studio_weights, relation_indices,
                      relation_weights):
    hi = lax.Precision.HIGHEST
    user_e = params["user_emb"][user_idx]
    anime_e = params["anime_emb"][anime_idx]
    genre_p = params["genre_emb"][genre_indices].mean(axis=1)
    tag_p = params["tag_emb"][tag_indices].mean(axis=1)
    studio_p = (params["studio_emb"][studio_indices]
                * studio_weights.astype(jnp.float32)[:, :, None]).sum(axis=1)
    rel_p = (params["relation_emb"][relation_indices]
             * relation_weights.astype(jnp.float32)[:, :, None]).sum(axis=1)
    feat = jnp.concatenate([user_e, anime_e, genre_p, tag_p, studio_p, rel_p], axis=-1)
    f_pad = params["w1"].shape[0]
    if f_pad > feat.shape[-1]:
        feat = jnp.pad(feat, ((0, 0), (0, f_pad - feat.shape[-1])))
    h = jnp.maximum(jnp.dot(feat, params["w1"], precision=hi) + params["b1"], 0.0)
    logits = jnp.dot(h, params["w2"].T, precision=hi) + params["b2"]
    return jax.nn.sigmoid(logits)                                          # (B, 1)


if __name__ == "__main__":
    # Small synthetic shapes (128-aligned emb/hidden; batch not a tile multiple
    # on purpose to exercise the padding path).
    B, D, H = 200, 128, 128
    N_USERS, N_ANIME, N_GENRES, N_TAGS, N_STUDIOS, N_REL = 50, 100, 20, 30, 10, 16
    G, T, S, R = 4, 6, 2, 3

    key = jax.random.PRNGKey(0)
    kp, k1, k2, k3, k4, k5, k6, k7, k8 = jax.random.split(key, 9)

    params = init_params(kp, N_USERS, N_ANIME, N_GENRES, N_TAGS, N_STUDIOS,
                         N_REL, D, H)

    user_idx = jax.random.randint(k1, (B,), 0, N_USERS, dtype=jnp.int32)
    anime_idx = jax.random.randint(k2, (B,), 0, N_ANIME, dtype=jnp.int32)
    genre_indices = jax.random.randint(k3, (B, G), 0, N_GENRES, dtype=jnp.int32)
    tag_indices = jax.random.randint(k4, (B, T), 0, N_TAGS, dtype=jnp.int32)
    studio_indices = jax.random.randint(k5, (B, S), 0, N_STUDIOS, dtype=jnp.int32)
    studio_weights = jax.nn.softmax(jax.random.normal(k6, (B, S)), axis=-1)
    relation_indices = jax.random.randint(k7, (B, R), 0, N_REL, dtype=jnp.int32)
    relation_weights = jax.nn.softmax(jax.random.normal(k8, (B, R)), axis=-1)

    out = recommender_forward(
        params, user_idx, anime_idx, genre_indices, tag_indices,
        studio_indices, studio_weights, relation_indices, relation_weights)
    out = jax.block_until_ready(out)

    ref = reference_forward(
        params, user_idx, anime_idx, genre_indices, tag_indices,
        studio_indices, studio_weights, relation_indices, relation_weights)

    assert out.shape == (B, 1)
    assert bool(jnp.all(jnp.isfinite(out)))
    assert bool(jnp.allclose(out, ref, atol=5e-3, rtol=5e-3))
    print("KERNEL_OK")
</pallas_src>

<mosaic_0001>
module attributes {stable_mosaic.version = 11 : i64} {
  func.func @recommender_kernel(%arg0: i32, %arg1: memref<128x128xf32, #tpu.memory_space<vmem>>, %arg2: memref<128x128xf32, #tpu.memory_space<vmem>>, %arg3: memref<128x4x128xf32, #tpu.memory_space<vmem>>, %arg4: memref<128x6x128xf32, #tpu.memory_space<vmem>>, %arg5: memref<128x2x128xf32, #tpu.memory_space<vmem>>, %arg6: memref<128x3x128xf32, #tpu.memory_space<vmem>>, %arg7: memref<768x128xf32, #tpu.memory_space<vmem>>, %arg8: memref<1x128xf32, #tpu.memory_space<vmem>>, %arg9: memref<8x128xf32, #tpu.memory_space<vmem>>, %arg10: memref<1x1xf32, #tpu.memory_space<smem>>, %arg11: memref<8x128xf32, #tpu.memory_space<vmem>>) attributes {dimension_semantics = [#tpu.dimension_semantics<parallel>], iteration_bounds = array<i64: 2>, scalar_prefetch = 0 : i64, scratch_operands = 0 : i64, tpu.core_type = #tpu.core_type<tc>, window_params = [{transform_indices = @transform_0, window_bounds = array<i64: 128, 128>}, {transform_indices = @transform_1, window_bounds = array<i64: 128, 128>}, {transform_indices = @transform_2, window_bounds = array<i64: 128, 4, 128>}, {transform_indices = @transform_3, window_bounds = array<i64: 128, 6, 128>}, {transform_indices = @transform_4, window_bounds = array<i64: 128, 2, 128>}, {transform_indices = @transform_5, window_bounds = array<i64: 128, 3, 128>}, {pipeline_mode = #tpu.pipeline_mode<synchronous>, transform_indices = @transform_6, window_bounds = array<i64: 768, 128>}, {pipeline_mode = #tpu.pipeline_mode<synchronous>, transform_indices = @transform_7, window_bounds = array<i64: 1, 128>}, {pipeline_mode = #tpu.pipeline_mode<synchronous>, transform_indices = @transform_8, window_bounds = array<i64: 8, 128>}, {transform_indices = @transform_9, window_bounds = array<i64: 1, 1>}, {transform_indices = @transform_10, window_bounds = array<i64: 8, 128>}]} {
    %c0 = arith.constant 0 : index
    %c0_0 = arith.constant 0 : index
    %c0_1 = arith.constant 0 : index
    %0 = vector.load %arg3[%c0, %c0_0, %c0_1] : memref<128x4x128xf32, #tpu.memory_space<vmem>>, vector<128x4x128xf32>
    %cst = arith.constant dense<0.000000e+00> : vector<128x128xf32>
    %1 = vector.multi_reduction <add>, %0, %cst [1] : vector<128x4x128xf32> to vector<128x128xf32>
    %cst_2 = arith.constant 4.000000e+00 : f32
    %2 = vector.broadcast %cst_2 : f32 to vector<128x128xf32>
    %3 = arith.divf %1, %2 : vector<128x128xf32>
    %c0_3 = arith.constant 0 : index
    %c0_4 = arith.constant 0 : index
    %c0_5 = arith.constant 0 : index
    %4 = vector.load %arg4[%c0_3, %c0_4, %c0_5] : memref<128x6x128xf32, #tpu.memory_space<vmem>>, vector<128x6x128xf32>
    %cst_6 = arith.constant dense<0.000000e+00> : vector<128x128xf32>
    %5 = vector.multi_reduction <add>, %4, %cst_6 [1] : vector<128x6x128xf32> to vector<128x128xf32>
    %cst_7 = arith.constant 6.000000e+00 : f32
    %6 = vector.broadcast %cst_7 : f32 to vector<128x128xf32>
    %7 = arith.divf %5, %6 : vector<128x128xf32>
    %c0_8 = arith.constant 0 : index
    %c0_9 = arith.constant 0 : index
    %c0_10 = arith.constant 0 : index
    %8 = vector.load %arg5[%c0_8, %c0_9, %c0_10] : memref<128x2x128xf32, #tpu.memory_space<vmem>>, vector<128x2x128xf32>
    %cst_11 = arith.constant dense<0.000000e+00> : vector<128x128xf32>
    %9 = vector.multi_reduction <add>, %8, %cst_11 [1] : vector<128x2x128xf32> to vector<128x128xf32>
    %c0_12 = arith.constant 0 : index
    %c0_13 = arith.constant 0 : index
    %c0_14 = arith.constant 0 : index
    %10 = vector.load %arg6[%c0_12, %c0_13, %c0_14] : memref<128x3x128xf32, #tpu.memory_space<vmem>>, vector<128x3x128xf32>
    %cst_15 = arith.constant dense<0.000000e+00> : vector<128x128xf32>
    %11 = vector.multi_reduction <add>, %10, %cst_15 [1] : vector<128x3x128xf32> to vector<128x128xf32>
    %c0_16 = arith.constant 0 : index
    %c0_17 = arith.constant 0 : index
    %12 = vector.load %arg1[%c0_16, %c0_17] : memref<128x128xf32, #tpu.memory_space<vmem>>, vector<128x128xf32>
    %c0_18 = arith.constant 0 : index
    %c0_19 = arith.constant 0 : index
    %13 = vector.load %arg2[%c0_18, %c0_19] : memref<128x128xf32, #tpu.memory_space<vmem>>, vector<128x128xf32>
    %14 = tpu.concatenate %12, %13, %3, %7, %9, %11 in 1 : vector<128x128xf32>, vector<128x128xf32>, vector<128x128xf32>, vector<128x128xf32>, vector<128x128xf32>, vector<128x128xf32> -> vector<128x768xf32>
    %c0_20 = arith.constant 0 : index
    %c0_21 = arith.constant 0 : index
    %15 = vector.load %arg7[%c0_20, %c0_21] : memref<768x128xf32, #tpu.memory_space<vmem>>, vector<768x128xf32>
    %cst_22 = arith.constant dense<0.000000e+00> : vector<128x128xf32>
    %16 = tpu.matmul %14, %15, %cst_22 {dimension_numbers = #tpu.dot_dimension_numbers<[1], [0], [0], [1], [0, 0, 1, 1], [], []>} : vector<128x768xf32>, vector<768x128xf32>, vector<128x128xf32> -> vector<128x128xf32>
    %c0_23 = arith.constant 0 : index
    %c0_24 = arith.constant 0 : index
    %17 = vector.load %arg8[%c0_23, %c0_24] : memref<1x128xf32, #tpu.memory_space<vmem>>, vector<1x128xf32>
    %18 = vector.broadcast %17 : vector<1x128xf32> to vector<128x128xf32>
    %19 = arith.addf %16, %18 : vector<128x128xf32>
    %cst_25 = arith.constant 0.000000e+00 : f32
    %20 = vector.broadcast %cst_25 : f32 to vector<128x128xf32>
    %21 = arith.maximumf %19, %20 : vector<128x128xf32>
    %c0_26 = arith.constant 0 : index
    %c0_27 = arith.constant 0 : index
    %22 = vector.load %arg9[%c0_26, %c0_27] : memref<8x128xf32, #tpu.memory_space<vmem>>, vector<8x128xf32>
    %cst_28 = arith.constant dense<0.000000e+00> : vector<8x128xf32>
    %23 = tpu.matmul %22, %21, %cst_28 {dimension_numbers = #tpu.dot_dimension_numbers<[1], [1], [0], [0], [0, 0, 1, 0], [], []>} : vector<8x128xf32>, vector<128x128xf32>, vector<8x128xf32> -> vector<8x128xf32>
    %c0_29 = arith.constant 0 : index
    %c0_30 = arith.constant 0 : index
    %24 = memref.load %arg10[%c0_29, %c0_30] : memref<1x1xf32, #tpu.memory_space<smem>>
    %25 = vector.broadcast %24 : f32 to vector<8x128xf32>
    %26 = arith.addf %23, %25 : vector<8x128xf32>
    %27 = arith.negf %26 : vector<8x128xf32>
    %28 = math.exp %27 : vector<8x128xf32>
    %cst_31 = arith.constant 1.000000e+00 : f32
    %29 = vector.broadcast %cst_31 : f32 to vector<8x128xf32>
    %30 = arith.addf %29, %28 : vector<8x128xf32>
    %31 = arith.divf %29, %30 : vector<8x128xf32>
    %c0_32 = arith.constant 0 : index
    %c0_33 = arith.constant 0 : index
    %32 = vector.load %arg11[%c0_32, %c0_33] : memref<8x128xf32, #tpu.memory_space<vmem>>, vector<8x128xf32>
    tpu.vector_store %arg11[%c0_32, %c0_33], %31 {strides = array<i32>} : memref<8x128xf32, #tpu.memory_space<vmem>>, vector<8x128xf32>,
    return
  }
  func.func @transform_0(%arg0: i32) -> (i32, i32) {
    %c0_i32 = arith.constant 0 : i32
    %c0_i32_0 = arith.constant 0 : i32
    return %arg0, %c0_i32 : i32, i32
  }
  func.func @transform_1(%arg0: i32) -> (i32, i32) {
    %c0_i32 = arith.constant 0 : i32
    %c0_i32_0 = arith.constant 0 : i32
    return %arg0, %c0_i32 : i32, i32
  }
  func.func @transform_2(%arg0: i32) -> (i32, i32, i32) {
    %c0_i32 = arith.constant 0 : i32
    %c0_i32_0 = arith.constant 0 : i32
    %c0_i32_1 = arith.constant 0 : i32
    return %arg0, %c0_i32, %c0_i32_0 : i32, i32, i32
  }
  func.func @transform_3(%arg0: i32) -> (i32, i32, i32) {
    %c0_i32 = arith.constant 0 : i32
    %c0_i32_0 = arith.constant 0 : i32
    %c0_i32_1 = arith.constant 0 : i32
    return %arg0, %c0_i32, %c0_i32_0 : i32, i32, i32
  }
  func.func @transform_4(%arg0: i32) -> (i32, i32, i32) {
    %c0_i32 = arith.constant 0 : i32
    %c0_i32_0 = arith.constant 0 : i32
    %c0_i32_1 = arith.constant 0 : i32
    return %arg0, %c0_i32, %c0_i32_0 : i32, i32, i32
  }
  func.func @transform_5(%arg0: i32) -> (i32, i32, i32) {
    %c0_i32 = arith.constant 0 : i32
    %c0_i32_0 = arith.constant 0 : i32
    %c0_i32_1 = arith.constant 0 : i32
    return %arg0, %c0_i32, %c0_i32_0 : i32, i32, i32
  }
  func.func @transform_6(%arg0: i32) -> (i32, i32) {
    %c0_i32 = arith.constant 0 : i32
    %c0_i32_0 = arith.constant 0 : i32
    %c0_i32_1 = arith.constant 0 : i32
    return %c0_i32, %c0_i32_0 : i32, i32
  }
  func.func @transform_7(%arg0: i32) -> (i32, i32) {
    %c0_i32 = arith.constant 0 : i32
    %c0_i32_0 = arith.constant 0 : i32
    %c0_i32_1 = arith.constant 0 : i32
    return %c0_i32, %c0_i32_0 : i32, i32
  }
  func.func @transform_8(%arg0: i32) -> (i32, i32) {
    %c0_i32 = arith.constant 0 : i32
    %c0_i32_0 = arith.constant 0 : i32
    %c0_i32_1 = arith.constant 0 : i32
    return %c0_i32, %c0_i32_0 : i32, i32
  }
  func.func @transform_9(%arg0: i32) -> (i32, i32) {
    %c0_i32 = arith.constant 0 : i32
    %c0_i32_0 = arith.constant 0 : i32
    %c0_i32_1 = arith.constant 0 : i32
    return %c0_i32, %c0_i32_0 : i32, i32
  }
  func.func @transform_10(%arg0: i32) -> (i32, i32) {
    %c0_i32 = arith.constant 0 : i32
    %c0_i32_0 = arith.constant 0 : i32
    return %c0_i32, %arg0 : i32, i32
  }
}

</mosaic_0001>

<llo_original>
// kernel: tpu_custom_call.1
$region0: #{tpu_custom_call.1}
  #allocation0 [shape = 'u32[]', space=smem, size = 0x4, offset = 0x4, fixed_abs, tag = 'smem constant byte address 0x4 - core index']
  #allocation1 [shape = 'u32[72,128]{1,0:T(1,128)}', space=vmem, size = 0x9000, scoped, tag = 'internal scratch']
  #allocation2 [shape = 'f32[1,1]{1,0:T(1,128)S(6)}', space=smem, size = 0x200, scoped, tag = 'scoped memory for tpu_custom_call.1']
  %s0 = inlined_call_operand.vmem [shape: f32[256,128], index: 0, kind: input, shape index: {}]
  %s1 = inlined_call_operand.vmem [shape: f32[256,128], index: 1, kind: input, shape index: {}]
  %s2 = inlined_call_operand.vmem [shape: f32[256,4,128], index: 2, kind: input, shape index: {}]
  %s3 = inlined_call_operand.vmem [shape: f32[256,6,128], index: 3, kind: input, shape index: {}]
  %s4 = inlined_call_operand.vmem [shape: f32[256,2,128], index: 4, kind: input, shape index: {}]
  %s5 = inlined_call_operand.vmem [shape: f32[256,3,128], index: 5, kind: input, shape index: {}]
  %s6 = inlined_call_operand.vmem [shape: f32[768,128], index: 6, kind: input, shape index: {}]
  %s7 = inlined_call_operand.vmem [shape: f32[1,128], index: 7, kind: input, shape index: {}]
  %s8 = inlined_call_operand.vmem [shape: f32[8,128], index: 8, kind: input, shape index: {}]
  %s9 = inlined_call_operand.<no memory space> [shape: f32[1,1], index: 9, kind: input, shape index: {}]
  %s10 = inlined_call_operand.hbm [shape: f32[8,256], index: 10, kind: output, shape index: {}]
  %s11 = sld [smem:[#allocation0]]
  $region73: #{tpu_custom_call.1} parent=0
    _
  %s13 = ssub.s32 1, %s11
  %s14 = scalar_select 0, %s13, %s11
  %15 = sst [smem:[#allocation2]] %s9
  $region1: #{tpu_custom_call.1} parent=0
    #allocation3 [shape = 'u8[8192]{0}', space=vmem, size = 0x2000, scoped, tag = 'output window, operand 0']
    #allocation4 [shape = 's32[2]{0}', space=sflag, size = 0x8, scoped, tag = 'scoped memory for tpu_custom_call.1']
    %16 = vsyncpa [#allocation4], 0
    %s17 = scalar_lea.sflag [#allocation4], 1
    %18 = vsyncpa %s17, 0
    loop: start=0, step=1, limit=4
    $region2: #{tpu_custom_call.1} parent=1 // loop_pre_header
      _
    $region3: #{tpu_custom_call.1} parent=1 // loop_header
      %s20 = sphi 0, %s24
      %p21 = scmp.ge.s32.totalorder %s20, 4
      %s30 = sphi 0, %s32
      %s33 = sphi 0, %s30
      %s34 = sphi 0, %s33
      %s50 = sphi 0, %s34
      %s56 = sphi 0, %s58
      %s59 = sphi 0, %s56
      %s60 = sphi 0, %s59
      %s76 = sphi 0, %s60
      %s82 = sphi 0, %s84
      %s85 = sphi 0, %s82
      %s86 = sphi 0, %s85
      %s102 = sphi 0, %s86
      %s108 = sphi 0, %s110
      %s111 = sphi 0, %s108
      %s112 = sphi 0, %s111
      %s128 = sphi 0, %s112
      %s134 = sphi 0, %s136
      %s137 = sphi 0, %s134
      %s138 = sphi 0, %s137
      %s154 = sphi 0, %s138
      %s160 = sphi 0, %s162
      %s163 = sphi 0, %s160
      %s164 = sphi 0, %s163
      %s180 = sphi 0, %s164
      %s184 = sphi 0, %s184
      %s186 = sphi 0, %s184
      %s187 = sphi 0, %s186
      %s201 = sphi 0, %s187
      %s205 = sphi 0, %s205
      %s207 = sphi 0, %s205
      %s208 = sphi 0, %s207
      %s222 = sphi 0, %s208
      %s226 = sphi 0, %s226
      %s228 = sphi 0, %s226
      %s229 = sphi 0, %s228
      %s243 = sphi 0, %s229
      %s247 = sphi 0, %s247
      %s249 = sphi 0, %s247
      %s250 = sphi 0, %s249
      %s264 = sphi 0, %s250
      %s270 = sphi 0, %s272
      %s273 = sphi 0, %s270
      %s274 = sphi 0, %s273
      %s290 = sphi 0, %s274
    $region4: #{tpu_custom_call.1} parent=1 // loop_header_branch
      %23 = sbr.rel (%p21) target = $region8
    $region5: #{tpu_custom_call.1} parent=1 // loop_body
      %s25 = ssub.s32 %s20, 1
      %s26 = ssub.s32 %s20, 2
      %s27 = sadd.s32 %s20, 1
      %s28 = ssub.s32 %s20, %s27
      %p29 = scmp.eq.s32.totalorder %s28, 0
      %s31 = sadd.s32 %s30, 1
      %s32 = scalar_select %p29, %s30, %s31
      %p35 = pneg %p29
      %p36 = scmp.eq.s32.totalorder %s20, 1
      %p37 = por %p35, %p36
      %p38 = scmp.ne.s32.totalorder %s30, %s33
      %p39 = scmp.eq.s32.totalorder %s20, 0
      %p40 = por %p38, %p39
      %p41 = scmp.ne.s32.totalorder %s30, %s33
      %p42 = scmp.eq.s32.totalorder %s25, 1
      %p43 = por %p41, %p42
      %p44 = scmp.ne.s32.totalorder %s33, %s34
      %p45 = scmp.eq.s32.totalorder %s25, 0
      %p46 = por %p44, %p45
      %p47 = scmp.ne.s32.totalorder %s33, %s34
      %p48 = scmp.eq.s32.totalorder %s26, 1
      %p49 = por %p47, %p48
      %p51 = scmp.ne.s32.totalorder %s34, %s50
      %p52 = scmp.eq.s32.totalorder %s26, 0
      %p53 = por %p51, %p52
      %s54 = ssub.s32 %s20, %s27
      %p55 = scmp.eq.s32.totalorder %s54, 0
      %s57 = sadd.s32 %s56, 1
      %s58 = scalar_select %p55, %s56, %s57
      %p61 = pneg %p55
      %p62 = scmp.eq.s32.totalorder %s20, 1
      %p63 = por %p61, %p62
      %p64 = scmp.ne.s32.totalorder %s56, %s59
      %p65 = scmp.eq.s32.totalorder %s20, 0
      %p66 = por %p64, %p65
      %p67 = scmp.ne.s32.totalorder %s56, %s59
      %p68 = scmp.eq.s32.totalorder %s25, 1
      %p69 = por %p67, %p68
      %p70 = scmp.ne.s32.totalorder %s59, %s60
      %p71 = scmp.eq.s32.totalorder %s25, 0
      %p72 = por %p70, %p71
      %p73 = scmp.ne.s32.totalorder %s59, %s60
      %p74 = scmp.eq.s32.totalorder %s26, 1
      %p75 = por %p73, %p74
      %p77 = scmp.ne.s32.totalorder %s60, %s76
      %p78 = scmp.eq.s32.totalorder %s26, 0
      %p79 = por %p77, %p78
      %s80 = ssub.s32 %s20, %s27
      %p81 = scmp.eq.s32.totalorder %s80, 0
      %s83 = sadd.s32 %s82, 1
      %s84 = scalar_select %p81, %s82, %s83
      %p87 = pneg %p81
      %p88 = scmp.eq.s32.totalorder %s20, 1
      %p89 = por %p87, %p88
      %p90 = scmp.ne.s32.totalorder %s82, %s85
      %p91 = scmp.eq.s32.totalorder %s20, 0
      %p92 = por %p90, %p91
      %p93 = scmp.ne.s32.totalorder %s82, %s85
      %p94 = scmp.eq.s32.totalorder %s25, 1
      %p95 = por %p93, %p94
      %p96 = scmp.ne.s32.totalorder %s85, %s86
      %p97 = scmp.eq.s32.totalorder %s25, 0
      %p98 = por %p96, %p97
      %p99 = scmp.ne.s32.totalorder %s85, %s86
      %p100 = scmp.eq.s32.totalorder %s26, 1
      %p101 = por %p99, %p100
      %p103 = scmp.ne.s32.totalorder %s86, %s102
      %p104 = scmp.eq.s32.totalorder %s26, 0
      %p105 = por %p103, %p104
      %s106 = ssub.s32 %s20, %s27
      %p107 = scmp.eq.s32.totalorder %s106, 0
      %s109 = sadd.s32 %s108, 1
      %s110 = scalar_select %p107, %s108, %s109
      %p113 = pneg %p107
      %p114 = scmp.eq.s32.totalorder %s20, 1
      %p115 = por %p113, %p114
      %p116 = scmp.ne.s32.totalorder %s108, %s111
      %p117 = scmp.eq.s32.totalorder %s20, 0
      %p118 = por %p116, %p117
      %p119 = scmp.ne.s32.totalorder %s108, %s111
      %p120 = scmp.eq.s32.totalorder %s25, 1
      %p121 = por %p119, %p120
      %p122 = scmp.ne.s32.totalorder %s111, %s112
      %p123 = scmp.eq.s32.totalorder %s25, 0
      %p124 = por %p122, %p123
      %p125 = scmp.ne.s32.totalorder %s111, %s112
      %p126 = scmp.eq.s32.totalorder %s26, 1
      %p127 = por %p125, %p126
      %p129 = scmp.ne.s32.totalorder %s112, %s128
      %p130 = scmp.eq.s32.totalorder %s26, 0
      %p131 = por %p129, %p130
      %s132 = ssub.s32 %s20, %s27
      %p133 = scmp.eq.s32.totalorder %s132, 0
      %s135 = sadd.s32 %s134, 1
      %s136 = scalar_select %p133, %s134, %s135
      %p139 = pneg %p133
      %p140 = scmp.eq.s32.totalorder %s20, 1
      %p141 = por %p139, %p140
      %p142 = scmp.ne.s32.totalorder %s134, %s137
      %p143 = scmp.eq.s32.totalorder %s20, 0
      %p144 = por %p142, %p143
      %p145 = scmp.ne.s32.totalorder %s134, %s137
      %p146 = scmp.eq.s32.totalorder %s25, 1
      %p147 = por %p145, %p146
      %p148 = scmp.ne.s32.totalorder %s137, %s138
      %p149 = scmp.eq.s32.totalorder %s25, 0
      %p150 = por %p148, %p149
      %p151 = scmp.ne.s32.totalorder %s137, %s138
      %p152 = scmp.eq.s32.totalorder %s26, 1
      %p153 = por %p151, %p152
      %p155 = scmp.ne.s32.totalorder %s138, %s154
      %p156 = scmp.eq.s32.totalorder %s26, 0
      %p157 = por %p155, %p156
      %s158 = ssub.s32 %s20, %s27
      %p159 = scmp.eq.s32.totalorder %s158, 0
      %s161 = sadd.s32 %s160, 1
      %s162 = scalar_select %p159, %s160, %s161
      %p165 = pneg %p159
      %p166 = scmp.eq.s32.totalorder %s20, 1
      %p167 = por %p165, %p166
      %p168 = scmp.ne.s32.totalorder %s160, %s163
      %p169 = scmp.eq.s32.totalorder %s20, 0
      %p170 = por %p168, %p169
      %p171 = scmp.ne.s32.totalorder %s160, %s163
      %p172 = scmp.eq.s32.totalorder %s25, 1
      %p173 = por %p171, %p172
      %p174 = scmp.ne.s32.totalorder %s163, %s164
      %p175 = scmp.eq.s32.totalorder %s25, 0
      %p176 = por %p174, %p175
      %p177 = scmp.ne.s32.totalorder %s163, %s164
      %p178 = scmp.eq.s32.totalorder %s26, 1
      %p179 = por %p177, %p178
      %p181 = scmp.ne.s32.totalorder %s164, %s180
      %p182 = scmp.eq.s32.totalorder %s26, 0
      %p183 = por %p181, %p182
      %s185 = sadd.s32 %s184, 1
      %p188 = scmp.eq.s32.totalorder %s20, 1
      %p189 = scmp.ne.s32.totalorder %s184, %s186
      %p190 = scmp.eq.s32.totalorder %s20, 0
      %p191 = por %p189, %p190
      %p192 = scmp.ne.s32.totalorder %s184, %s186
      %p193 = scmp.eq.s32.totalorder %s25, 1
      %p194 = por %p192, %p193
      %p195 = scmp.ne.s32.totalorder %s186, %s187
      %p196 = scmp.eq.s32.totalorder %s25, 0
      %p197 = por %p195, %p196
      %p198 = scmp.ne.s32.totalorder %s186, %s187
      %p199 = scmp.eq.s32.totalorder %s26, 1
      %p200 = por %p198, %p199
      %p202 = scmp.ne.s32.totalorder %s187, %s201
      %p203 = scmp.eq.s32.totalorder %s26, 0
      %p204 = por %p202, %p203
      %s206 = sadd.s32 %s205, 1
      %p209 = scmp.eq.s32.totalorder %s20, 1
      %p210 = scmp.ne.s32.totalorder %s205, %s207
      %p211 = scmp.eq.s32.totalorder %s20, 0
      %p212 = por %p210, %p211
      %p213 = scmp.ne.s32.totalorder %s205, %s207
      %p214 = scmp.eq.s32.totalorder %s25, 1
      %p215 = por %p213, %p214
      %p216 = scmp.ne.s32.totalorder %s207, %s208
      %p217 = scmp.eq.s32.totalorder %s25, 0
      %p218 = por %p216, %p217
      %p219 = scmp.ne.s32.totalorder %s207, %s208
      %p220 = scmp.eq.s32.totalorder %s26, 1
      %p221 = por %p219, %p220
      %p223 = scmp.ne.s32.totalorder %s208, %s222
      %p224 = scmp.eq.s32.totalorder %s26, 0
      %p225 = por %p223, %p224
      %s227 = sadd.s32 %s226, 1
      %p230 = scmp.eq.s32.totalorder %s20, 1
      %p231 = scmp.ne.s32.totalorder %s226, %s228
      %p232 = scmp.eq.s32.totalorder %s20, 0
      %p233 = por %p231, %p232
      %p234 = scmp.ne.s32.totalorder %s226, %s228
      %p235 = scmp.eq.s32.totalorder %s25, 1
      %p236 = por %p234, %p235
      %p237 = scmp.ne.s32.totalorder %s228, %s229
      %p238 = scmp.eq.s32.totalorder %s25, 0
      %p239 = por %p237, %p238
      %p240 = scmp.ne.s32.totalorder %s228, %s229
      %p241 = scmp.eq.s32.totalorder %s26, 1
      %p242 = por %p240, %p241
      %p244 = scmp.ne.s32.totalorder %s229, %s243
      %p245 = scmp.eq.s32.totalorder %s26, 0
      %p246 = por %p244, %p245
      %s248 = sadd.s32 %s247, 1
      %p251 = scmp.eq.s32.totalorder %s20, 1
      %p252 = scmp.ne.s32.totalorder %s247, %s249
      %p253 = scmp.eq.s32.totalorder %s20, 0
      %p254 = por %p252, %p253
      %p255 = scmp.ne.s32.totalorder %s247, %s249
      %p256 = scmp.eq.s32.totalorder %s25, 1
      %p257 = por %p255, %p256
      %p258 = scmp.ne.s32.totalorder %s249, %s250
      %p259 = scmp.eq.s32.totalorder %s25, 0
      %p260 = por %p258, %p259
      %p261 = scmp.ne.s32.totalorder %s249, %s250
      %p262 = scmp.eq.s32.totalorder %s26, 1
      %p263 = por %p261, %p262
      %p265 = scmp.ne.s32.totalorder %s250, %s264
      %p266 = scmp.eq.s32.totalorder %s26, 0
      %p267 = por %p265, %p266
      %s268 = ssub.s32 %s20, %s27
      %p269 = scmp.eq.s32.totalorder %s268, 0
      %s271 = sadd.s32 %s270, 1
      %s272 = scalar_select %p269, %s270, %s271
      %p275 = pneg %p269
      %p276 = scmp.eq.s32.totalorder %s20, 1
      %p277 = por %p275, %p276
      %p278 = scmp.ne.s32.totalorder %s270, %s273
      %p279 = scmp.eq.s32.totalorder %s20, 0
      %p280 = por %p278, %p279
      %p281 = scmp.ne.s32.totalorder %s270, %s273
      %p282 = scmp.eq.s32.totalorder %s25, 1
      %p283 = por %p281, %p282
      %p284 = scmp.ne.s32.totalorder %s273, %s274
      %p285 = scmp.eq.s32.totalorder %s25, 0
      %p286 = por %p284, %p285
      %p287 = scmp.ne.s32.totalorder %s273, %s274
      %p288 = scmp.eq.s32.totalorder %s26, 1
      %p289 = por %p287, %p288
      %p291 = scmp.ne.s32.totalorder %s274, %s290
      %p292 = scmp.eq.s32.totalorder %s26, 0
      %p293 = por %p291, %p292
      %p294 = scmp.le.s32.totalorder 1, %s20
      %p295 = scmp.lt.s32.totalorder %s20, 3
      %p296 = pnand %p294, %p295
      %p297 = pneg %p296
      // Predicated region
      $region9: #{tpu_custom_call.1} parent=5 // pred_check
        _
      $region10: #{tpu_custom_call.1} parent=5 // pred_check_branch
        %299 = sbr.rel (%p296) target = $region12
      $region11: #{tpu_custom_call.1} parent=5 // pred_region
        %s300 = ssub.s32 %s20, 1
        // Predicated region
        $region13: #{tpu_custom_call.1} parent=11 // pred_check
          %p301 = pneg %p197
        $region14: #{tpu_custom_call.1} parent=11 // pred_check_branch
          %303 = sbr.rel (%p301) target = $region16
        $region15: #{tpu_custom_call.1} parent=11 // pred_region
          _
        $region16: #{tpu_custom_call.1} parent=11 // pred_fallthru
          _
        // Predicated region
        $region17: #{tpu_custom_call.1} parent=11 // pred_check
          %p304 = pneg %p218
        $region18: #{tpu_custom_call.1} parent=11 // pred_check_branch
          %306 = sbr.rel (%p304) target = $region20
        $region19: #{tpu_custom_call.1} parent=11 // pred_region
          _
        $region20: #{tpu_custom_call.1} parent=11 // pred_fallthru
          _
        // Predicated region
        $region21: #{tpu_custom_call.1} parent=11 // pred_check
          %p307 = pneg %p239
        $region22: #{tpu_custom_call.1} parent=11 // pred_check_branch
          %309 = sbr.rel (%p307) target = $region24
        $region23: #{tpu_custom_call.1} parent=11 // pred_region
          _
        $region24: #{tpu_custom_call.1} parent=11 // pred_fallthru
          _
        // Predicated region
        $region25: #{tpu_custom_call.1} parent=11 // pred_check
          %p310 = pneg %p260
        $region26: #{tpu_custom_call.1} parent=11 // pred_check_branch
          %312 = sbr.rel (%p310) target = $region28
        $region27: #{tpu_custom_call.1} parent=11 // pred_region
          _
        $region28: #{tpu_custom_call.1} parent=11 // pred_fallthru
          _
      $region12: #{tpu_custom_call.1} parent=5 // pred_fallthru
        _
      %p313 = scmp.lt.s32.totalorder %s20, 2
      // Predicated region
      $region29: #{tpu_custom_call.1} parent=5 // pred_check
        %p314 = pneg %p313
      $region30: #{tpu_custom_call.1} parent=5 // pred_check_branch
        %316 = sbr.rel (%p314) target = $region32
      $region31: #{tpu_custom_call.1} parent=5 // pred_region
        // Predicated region
        $region33: #{tpu_custom_call.1} parent=31 // pred_check
          %p317 = pneg %p40
        $region34: #{tpu_custom_call.1} parent=31 // pred_check_branch
          %319 = sbr.rel (%p317) target = $region36
        $region35: #{tpu_custom_call.1} parent=31 // pred_region
          %s320 = smul.u32 16, %s20
          %p321 = scmp.lt.s32.totalorder %s320, 31
          %s322 = scalar_select %p321, %s320, 31
          %s323 = smul.addr %s322, 8
          %s324 = scalar_lea.vmem %s0, %s323
          %s325 = smul.u32 16, %s20
        $region36: #{tpu_custom_call.1} parent=31 // pred_fallthru
          _
        // Predicated region
        $region37: #{tpu_custom_call.1} parent=31 // pred_check
          %p326 = pneg %p66
        $region38: #{tpu_custom_call.1} parent=31 // pred_check_branch
          %328 = sbr.rel (%p326) target = $region40
        $region39: #{tpu_custom_call.1} parent=31 // pred_region
          %s329 = smul.u32 16, %s20
          %p330 = scmp.lt.s32.totalorder %s329, 31
          %s331 = scalar_select %p330, %s329, 31
          %s332 = smul.addr %s331, 8
          %s333 = scalar_lea.vmem %s1, %s332
          %s334 = smul.u32 16, %s20
        $region40: #{tpu_custom_call.1} parent=31 // pred_fallthru
          _
        // Predicated region
        $region41: #{tpu_custom_call.1} parent=31 // pred_check
          %p335 = pneg %p92
        $region42: #{tpu_custom_call.1} parent=31 // pred_check_branch
          %337 = sbr.rel (%p335) target = $region44
        $region43: #{tpu_custom_call.1} parent=31 // pred_region
          %s338 = smul.u32 128, %s20
          %p339 = scmp.lt.s32.totalorder %s338, 255
          %s340 = scalar_select %p339, %s338, 255
          %s341 = smul.addr %s340, 4
          %s342 = scalar_lea.vmem %s2, %s341
          %s343 = smul.u32 128, %s20
        $region44: #{tpu_custom_call.1} parent=31 // pred_fallthru
          _
        // Predicated region
        $region45: #{tpu_custom_call.1} parent=31 // pred_check
          %p344 = pneg %p118
        $region46: #{tpu_custom_call.1} parent=31 // pred_check_branch
          %346 = sbr.rel (%p344) target = $region48
        $region47: #{tpu_custom_call.1} parent=31 // pred_region
          %s347 = smul.u32 128, %s20
          %p348 = scmp.lt.s32.totalorder %s347, 255
          %s349 = scalar_select %p348, %s347, 255
          %s350 = smul.addr %s349, 8
          %s351 = scalar_lea.vmem %s3, %s350
          %s352 = smul.u32 128, %s20
        $region48: #{tpu_custom_call.1} parent=31 // pred_fallthru
          _
        // Predicated region
        $region49: #{tpu_custom_call.1} parent=31 // pred_check
          %p353 = pneg %p144
        $region50: #{tpu_custom_call.1} parent=31 // pred_check_branch
          %355 = sbr.rel (%p353) target = $region52
        $region51: #{tpu_custom_call.1} parent=31 // pred_region
          %s356 = smul.u32 128, %s20
          %p357 = scmp.lt.s32.totalorder %s356, 255
          %s358 = scalar_select %p357, %s356, 255
          %s359 = smul.addr %s358, 2
          %s360 = scalar_lea.vmem %s4, %s359
          %s361 = smul.u32 128, %s20
        $region52: #{tpu_custom_call.1} parent=31 // pred_fallthru
          _
        // Predicated region
        $region53: #{tpu_custom_call.1} parent=31 // pred_check
          %p362 = pneg %p170
        $region54: #{tpu_custom_call.1} parent=31 // pred_check_branch
          %364 = sbr.rel (%p362) target = $region56
        $region55: #{tpu_custom_call.1} parent=31 // pred_region
          %s365 = smul.u32 128, %s20
          %p366 = scmp.lt.s32.totalorder %s365, 255
          %s367 = scalar_select %p366, %s365, 255
          %s368 = smul.addr %s367, 4
          %s369 = scalar_lea.vmem %s5, %s368
          %s370 = smul.u32 128, %s20
        $region56: #{tpu_custom_call.1} parent=31 // pred_fallthru
          _
      $region32: #{tpu_custom_call.1} parent=5 // pred_fallthru
        _
      %p371 = scmp.le.s32.totalorder 1, %s20
      %p372 = scmp.lt.s32.totalorder %s20, 3
      %p373 = pnand %p371, %p372
      %p374 = pneg %p373
      // Predicated region
      $region57: #{tpu_custom_call.1} parent=5 // pred_check
        _
      $region58: #{tpu_custom_call.1} parent=5 // pred_check_branch
        %376 = sbr.rel (%p373) target = $region60
      $region59: #{tpu_custom_call.1} parent=5 // pred_region
        %s377 = ssub.s32 %s20, 1
        %s378 = smul.u32 16, %s25
        %p379 = scmp.lt.s32.totalorder %s378, 31
        %s380 = scalar_select %p379, %s378, 31
        %s381 = smul.addr %s380, 8
        %s382 = scalar_lea.vmem %s0, %s381
        %p383 = pneg %p46
        %p384 = pneg %p43
        %s385 = smul.u32 16, %s25
        %p386 = scmp.lt.s32.totalorder %s385, 31
        %s387 = scalar_select %p386, %s385, 31
        %s388 = smul.addr %s387, 8
        %s389 = scalar_lea.vmem %s1, %s388
        %p390 = pneg %p72
        %p391 = pneg %p69
        %s392 = smul.u32 128, %s25
        %p393 = scmp.lt.s32.totalorder %s392, 255
        %s394 = scalar_select %p393, %s392, 255
        %s395 = smul.addr %s394, 4
        %s396 = scalar_lea.vmem %s2, %s395
        %p397 = pneg %p98
        %p398 = pneg %p95
        %s399 = smul.u32 128, %s25
        %p400 = scmp.lt.s32.totalorder %s399, 255
        %s401 = scalar_select %p400, %s399, 255
        %s402 = smul.addr %s401, 8
        %s403 = scalar_lea.vmem %s3, %s402
        %p404 = pneg %p124
        %p405 = pneg %p121
        %s406 = smul.u32 128, %s25
        %p407 = scmp.lt.s32.totalorder %s406, 255
        %s408 = scalar_select %p407, %s406, 255
        %s409 = smul.addr %s408, 2
        %s410 = scalar_lea.vmem %s4, %s409
        %p411 = pneg %p150
        %p412 = pneg %p147
        %s413 = smul.u32 128, %s25
        %p414 = scmp.lt.s32.totalorder %s413, 255
        %s415 = scalar_select %p414, %s413, 255
        %s416 = smul.addr %s415, 4
        %s417 = scalar_lea.vmem %s5, %s416
        %p418 = pneg %p176
        %p419 = pneg %p173
        %p420 = pneg %p197
        %p421 = pneg %p194
        %p422 = pneg %p218
        %p423 = pneg %p215
        %p424 = pneg %p239
        %p425 = pneg %p236
        %p426 = pneg %p260
        %p427 = pneg %p257
        %p428 = pneg %p286
        %p429 = pneg %p283
        %s430 = sand.u32 %s273, 1
        %s431 = scalar_lea.sflag [#allocation4], %s430
        %s432 = sand.u32 %s273, 1
        %s433 = smul.addr %s432, 8
        %s434 = scalar_lea.vmem [#allocation3], %s433
        %s435 = smul.u32 16, %s25
        %p436 = scmp.lt.s32.totalorder %s435, 31
        %s437 = scalar_select %p436, %s435, 31
        %s438 = smul.addr %s437, 8
        %s439 = scalar_lea.vmem %s0, %s438
        %s440 = smul.u32 16, %s25
        %s441 = smul.u32 16, %s25
        %p442 = scmp.lt.s32.totalorder %s441, 31
        %s443 = scalar_select %p442, %s441, 31
        %s444 = smul.addr %s443, 8
        %s445 = scalar_lea.vmem %s1, %s444
        %s446 = smul.u32 16, %s25
        %s447 = smul.u32 128, %s25
        %p448 = scmp.lt.s32.totalorder %s447, 255
        %s449 = scalar_select %p448, %s447, 255
        %s450 = smul.addr %s449, 4
        %s451 = scalar_lea.vmem %s2, %s450
        %s452 = smul.u32 128, %s25
        %s453 = smul.u32 128, %s25
        %p454 = scmp.lt.s32.totalorder %s453, 255
        %s455 = scalar_select %p454, %s453, 255
        %s456 = smul.addr %s455, 8
        %s457 = scalar_lea.vmem %s3, %s456
        %s458 = smul.u32 128, %s25
        %s459 = smul.u32 128, %s25
        %p460 = scmp.lt.s32.totalorder %s459, 255
        %s461 = scalar_select %p460, %s459, 255
        %s462 = smul.addr %s461, 2
        %s463 = scalar_lea.vmem %s4, %s462
        %s464 = smul.u32 128, %s25
        %s465 = smul.u32 128, %s25
        %p466 = scmp.lt.s32.totalorder %s465, 255
        %s467 = scalar_select %p466, %s465, 255
        %s468 = smul.addr %s467, 4
        %s469 = scalar_lea.vmem %s5, %s468
        %s470 = smul.u32 128, %s25
        %v471 = vld [vmem:[%s451] sm:$0xf]
        %v472 = vld [vmem:[%s451 + $0x4] sm:$0xf]
        %v473 = vld [vmem:[%s451 + $0x8] sm:$0xf]
        %v474 = vld [vmem:[%s451 + $0xc] sm:$0xf]
        %v475 = vld [vmem:[%s451 + $0x10] sm:$0xf]
        %v476 = vld [vmem:[%s451 + $0x14] sm:$0xf]
        %v477 = vld [vmem:[%s451 + $0x18] sm:$0xf]
        %v478 = vld [vmem:[%s451 + $0x1c] sm:$0xf]
        %v479 = vld [vmem:[%s451 + $0x20] sm:$0xf]
        %v480 = vld [vmem:[%s451 + $0x24] sm:$0xf]
        %v481 = vld [vmem:[%s451 + $0x28] sm:$0xf]
        %v482 = vld [vmem:[%s451 + $0x2c] sm:$0xf]
        %v483 = vld [vmem:[%s451 + $0x30] sm:$0xf]
        %v484 = vld [vmem:[%s451 + $0x34] sm:$0xf]
        %v485 = vld [vmem:[%s451 + $0x38] sm:$0xf]
        %v486 = vld [vmem:[%s451 + $0x3c] sm:$0xf]
        %v487 = vld [vmem:[%s451 + $0x40] sm:$0xf]
        %v488 = vld [vmem:[%s451 + $0x44] sm:$0xf]
        %v489 = vld [vmem:[%s451 + $0x48] sm:$0xf]
        %v490 = vld [vmem:[%s451 + $0x4c] sm:$0xf]
        %v491 = vld [vmem:[%s451 + $0x50] sm:$0xf]
        %v492 = vld [vmem:[%s451 + $0x54] sm:$0xf]
        %v493 = vld [vmem:[%s451 + $0x58] sm:$0xf]
        %v494 = vld [vmem:[%s451 + $0x5c] sm:$0xf]
        %v495 = vld [vmem:[%s451 + $0x60] sm:$0xf]
        %v496 = vld [vmem:[%s451 + $0x64] sm:$0xf]
        %v497 = vld [vmem:[%s451 + $0x68] sm:$0xf]
        %v498 = vld [vmem:[%s451 + $0x6c] sm:$0xf]
        %v499 = vld [vmem:[%s451 + $0x70] sm:$0xf]
        %v500 = vld [vmem:[%s451 + $0x74] sm:$0xf]
        %v501 = vld [vmem:[%s451 + $0x78] sm:$0xf]
        %v502 = vld [vmem:[%s451 + $0x7c] sm:$0xf]
        %v503 = vld [vmem:[%s451 + $0x80] sm:$0xf]
        %v504 = vld [vmem:[%s451 + $0x84] sm:$0xf]
        %v505 = vld [vmem:[%s451 + $0x88] sm:$0xf]
        %v506 = vld [vmem:[%s451 + $0x8c] sm:$0xf]
        %v507 = vld [vmem:[%s451 + $0x90] sm:$0xf]
        %v508 = vld [vmem:[%s451 + $0x94] sm:$0xf]
        %v509 = vld [vmem:[%s451 + $0x98] sm:$0xf]
        %v510 = vld [vmem:[%s451 + $0x9c] sm:$0xf]
        %v511 = vld [vmem:[%s451 + $0xa0] sm:$0xf]
        %v512 = vld [vmem:[%s451 + $0xa4] sm:$0xf]
        %v513 = vld [vmem:[%s451 + $0xa8] sm:$0xf]
        %v514 = vld [vmem:[%s451 + $0xac] sm:$0xf]
        %v515 = vld [vmem:[%s451 + $0xb0] sm:$0xf]
        %v516 = vld [vmem:[%s451 + $0xb4] sm:$0xf]
        %v517 = vld [vmem:[%s451 + $0xb8] sm:$0xf]
        %v518 = vld [vmem:[%s451 + $0xbc] sm:$0xf]
        %v519 = vld [vmem:[%s451 + $0xc0] sm:$0xf]
        %v520 = vld [vmem:[%s451 + $0xc4] sm:$0xf]
        %v521 = vld [vmem:[%s451 + $0xc8] sm:$0xf]
        %v522 = vld [vmem:[%s451 + $0xcc] sm:$0xf]
        %v523 = vld [vmem:[%s451 + $0xd0] sm:$0xf]
        %v524 = vld [vmem:[%s451 + $0xd4] sm:$0xf]
        %v525 = vld [vmem:[%s451 + $0xd8] sm:$0xf]
        %v526 = vld [vmem:[%s451 + $0xdc] sm:$0xf]
        %v527 = vld [vmem:[%s451 + $0xe0] sm:$0xf]
        %v528 = vld [vmem:[%s451 + $0xe4] sm:$0xf]
        %v529 = vld [vmem:[%s451 + $0xe8] sm:$0xf]
        %v530 = vld [vmem:[%s451 + $0xec] sm:$0xf]
        %v531 = vld [vmem:[%s451 + $0xf0] sm:$0xf]
        %v532 = vld [vmem:[%s451 + $0xf4] sm:$0xf]
        %v533 = vld [vmem:[%s451 + $0xf8] sm:$0xf]
        %v534 = vld [vmem:[%s451 + $0xfc] sm:$0xf]
        %v535 = vld [vmem:[%s451 + $0x100] sm:$0xf]
        %v536 = vld [vmem:[%s451 + $0x104] sm:$0xf]
        %v537 = vld [vmem:[%s451 + $0x108] sm:$0xf]
        %v538 = vld [vmem:[%s451 + $0x10c] sm:$0xf]
        %v539 = vld [vmem:[%s451 + $0x110] sm:$0xf]
        %v540 = vld [vmem:[%s451 + $0x114] sm:$0xf]
        %v541 = vld [vmem:[%s451 + $0x118] sm:$0xf]
        %v542 = vld [vmem:[%s451 + $0x11c] sm:$0xf]
        %v543 = vld [vmem:[%s451 + $0x120] sm:$0xf]
        %v544 = vld [vmem:[%s451 + $0x124] sm:$0xf]
        %v545 = vld [vmem:[%s451 + $0x128] sm:$0xf]
        %v546 = vld [vmem:[%s451 + $0x12c] sm:$0xf]
        %v547 = vld [vmem:[%s451 + $0x130] sm:$0xf]
        %v548 = vld [vmem:[%s451 + $0x134] sm:$0xf]
        %v549 = vld [vmem:[%s451 + $0x138] sm:$0xf]
        %v550 = vld [vmem:[%s451 + $0x13c] sm:$0xf]
        %v551 = vld [vmem:[%s451 + $0x140] sm:$0xf]
        %v552 = vld [vmem:[%s451 + $0x144] sm:$0xf]
        %v553 = vld [vmem:[%s451 + $0x148] sm:$0xf]
        %v554 = vld [vmem:[%s451 + $0x14c] sm:$0xf]
        %v555 = vld [vmem:[%s451 + $0x150] sm:$0xf]
        %v556 = vld [vmem:[%s451 + $0x154] sm:$0xf]
        %v557 = vld [vmem:[%s451 + $0x158] sm:$0xf]
        %v558 = vld [vmem:[%s451 + $0x15c] sm:$0xf]
        %v559 = vld [vmem:[%s451 + $0x160] sm:$0xf]
        %v560 = vld [vmem:[%s451 + $0x164] sm:$0xf]
        %v561 = vld [vmem:[%s451 + $0x168] sm:$0xf]
        %v562 = vld [vmem:[%s451 + $0x16c] sm:$0xf]
        %v563 = vld [vmem:[%s451 + $0x170] sm:$0xf]
        %v564 = vld [vmem:[%s451 + $0x174] sm:$0xf]
        %v565 = vld [vmem:[%s451 + $0x178] sm:$0xf]
        %v566 = vld [vmem:[%s451 + $0x17c] sm:$0xf]
        %v567 = vld [vmem:[%s451 + $0x180] sm:$0xf]
        %v568 = vld [vmem:[%s451 + $0x184] sm:$0xf]
        %v569 = vld [vmem:[%s451 + $0x188] sm:$0xf]
        %v570 = vld [vmem:[%s451 + $0x18c] sm:$0xf]
        %v571 = vld [vmem:[%s451 + $0x190] sm:$0xf]
        %v572 = vld [vmem:[%s451 + $0x194] sm:$0xf]
        %v573 = vld [vmem:[%s451 + $0x198] sm:$0xf]
        %v574 = vld [vmem:[%s451 + $0x19c] sm:$0xf]
        %v575 = vld [vmem:[%s451 + $0x1a0] sm:$0xf]
        %v576 = vld [vmem:[%s451 + $0x1a4] sm:$0xf]
        %v577 = vld [vmem:[%s451 + $0x1a8] sm:$0xf]
        %v578 = vld [vmem:[%s451 + $0x1ac] sm:$0xf]
        %v579 = vld [vmem:[%s451 + $0x1b0] sm:$0xf]
        %v580 = vld [vmem:[%s451 + $0x1b4] sm:$0xf]
        %v581 = vld [vmem:[%s451 + $0x1b8] sm:$0xf]
        %v582 = vld [vmem:[%s451 + $0x1bc] sm:$0xf]
        %v583 = vld [vmem:[%s451 + $0x1c0] sm:$0xf]
        %v584 = vld [vmem:[%s451 + $0x1c4] sm:$0xf]
        %v585 = vld [vmem:[%s451 + $0x1c8] sm:$0xf]
        %v586 = vld [vmem:[%s451 + $0x1cc] sm:$0xf]
        %v587 = vld [vmem:[%s451 + $0x1d0] sm:$0xf]
        %v588 = vld [vmem:[%s451 + $0x1d4] sm:$0xf]
        %v589 = vld [vmem:[%s451 + $0x1d8] sm:$0xf]
        %v590 = vld [vmem:[%s451 + $0x1dc] sm:$0xf]
        %v591 = vld [vmem:[%s451 + $0x1e0] sm:$0xf]
        %v592 = vld [vmem:[%s451 + $0x1e4] sm:$0xf]
        %v593 = vld [vmem:[%s451 + $0x1e8] sm:$0xf]
        %v594 = vld [vmem:[%s451 + $0x1ec] sm:$0xf]
        %v595 = vld [vmem:[%s451 + $0x1f0] sm:$0xf]
        %v596 = vld [vmem:[%s451 + $0x1f4] sm:$0xf]
        %v597 = vld [vmem:[%s451 + $0x1f8] sm:$0xf]
        %v598 = vld [vmem:[%s451 + $0x1fc] sm:$0xf]
        %vm599 = vcmask 1043456
        %v600 = vsel %vm599, %v471, 0.0
        %v601 = vrot.slane %v600, 4
        %v602 = vadd.f32 %v600, %v601
        %v603 = vrot.slane %v602, 2
        %v604 = vadd.f32 %v602, %v603
        %v605 = vrot.slane %v604, 1
        %v606 = vadd.f32 %v604, %v605
        %v607 = vsel %vm599, %v472, 0.0
        %v608 = vrot.slane %v607, 4
        %v609 = vadd.f32 %v607, %v608
        %v610 = vrot.slane %v609, 2
        %v611 = vadd.f32 %v609, %v610
        %v612 = vrot.slane %v611, 1
        %v613 = vadd.f32 %v611, %v612
        %v614 = vsel %vm599, %v473, 0.0
        %v615 = vrot.slane %v614, 4
        %v616 = vadd.f32 %v614, %v615
        %v617 = vrot.slane %v616, 2
        %v618 = vadd.f32 %v616, %v617
        %v619 = vrot.slane %v618, 1
        %v620 = vadd.f32 %v618, %v619
        %v621 = vsel %vm599, %v474, 0.0
        %v622 = vrot.slane %v621, 4
        %v623 = vadd.f32 %v621, %v622
        %v624 = vrot.slane %v623, 2
        %v625 = vadd.f32 %v623, %v624
        %v626 = vrot.slane %v625, 1
        %v627 = vadd.f32 %v625, %v626
        %v628 = vsel %vm599, %v475, 0.0
        %v629 = vrot.slane %v628, 4
        %v630 = vadd.f32 %v628, %v629
        %v631 = vrot.slane %v630, 2
        %v632 = vadd.f32 %v630, %v631
        %v633 = vrot.slane %v632, 1
        %v634 = vadd.f32 %v632, %v633
        %v635 = vsel %vm599, %v476, 0.0
        %v636 = vrot.slane %v635, 4
        %v637 = vadd.f32 %v635, %v636
        %v638 = vrot.slane %v637, 2
        %v639 = vadd.f32 %v637, %v638
        %v640 = vrot.slane %v639, 1
        %v641 = vadd.f32 %v639, %v640
        %v642 = vsel %vm599, %v477, 0.0
        %v643 = vrot.slane %v642, 4
        %v644 = vadd.f32 %v642, %v643
        %v645 = vrot.slane %v644, 2
        %v646 = vadd.f32 %v644, %v645
        %v647 = vrot.slane %v646, 1
        %v648 = vadd.f32 %v646, %v647
        %v649 = vsel %vm599, %v478, 0.0
        %v650 = vrot.slane %v649, 4
        %v651 = vadd.f32 %v649, %v650
        %v652 = vrot.slane %v651, 2
        %v653 = vadd.f32 %v651, %v652
        %v654 = vrot.slane %v653, 1
        %v655 = vadd.f32 %v653, %v654
        %v656 = vsel %vm599, %v479, 0.0
        %v657 = vrot.slane %v656, 4
        %v658 = vadd.f32 %v656, %v657
        %v659 = vrot.slane %v658, 2
        %v660 = vadd.f32 %v658, %v659
        %v661 = vrot.slane %v660, 1
        %v662 = vadd.f32 %v660, %v661
        %v663 = vsel %vm599, %v480, 0.0
        %v664 = vrot.slane %v663, 4
        %v665 = vadd.f32 %v663, %v664
        %v666 = vrot.slane %v665, 2
        %v667 = vadd.f32 %v665, %v666
        %v668 = vrot.slane %v667, 1
        %v669 = vadd.f32 %v667, %v668
        %v670 = vsel %vm599, %v481, 0.0
        %v671 = vrot.slane %v670, 4
        %v672 = vadd.f32 %v670, %v671
        %v673 = vrot.slane %v672, 2
        %v674 = vadd.f32 %v672, %v673
        %v675 = vrot.slane %v674, 1
        %v676 = vadd.f32 %v674, %v675
        %v677 = vsel %vm599, %v482, 0.0
        %v678 = vrot.slane %v677, 4
        %v679 = vadd.f32 %v677, %v678
        %v680 = vrot.slane %v679, 2
        %v681 = vadd.f32 %v679, %v680
        %v682 = vrot.slane %v681, 1
        %v683 = vadd.f32 %v681, %v682
        %v684 = vsel %vm599, %v483, 0.0
        %v685 = vrot.slane %v684, 4
        %v686 = vadd.f32 %v684, %v685
        %v687 = vrot.slane %v686, 2
        %v688 = vadd.f32 %v686, %v687
        %v689 = vrot.slane %v688, 1
        %v690 = vadd.f32 %v688, %v689
        %v691 = vsel %vm599, %v484, 0.0
        %v692 = vrot.slane %v691, 4
        %v693 = vadd.f32 %v691, %v692
        %v694 = vrot.slane %v693, 2
        %v695 = vadd.f32 %v693, %v694
        %v696 = vrot.slane %v695, 1
        %v697 = vadd.f32 %v695, %v696
        %v698 = vsel %vm599, %v485, 0.0
        %v699 = vrot.slane %v698, 4
        %v700 = vadd.f32 %v698, %v699
        %v701 = vrot.slane %v700, 2
        %v702 = vadd.f32 %v700, %v701
        %v703 = vrot.slane %v702, 1
        %v704 = vadd.f32 %v702, %v703
        %v705 = vsel %vm599, %v486, 0.0
        %v706 = vrot.slane %v705, 4
        %v707 = vadd.f32 %v705, %v706
        %v708 = vrot.slane %v707, 2
        %v709 = vadd.f32 %v707, %v708
        %v710 = vrot.slane %v709, 1
        %v711 = vadd.f32 %v709, %v710
        %v712 = vsel %vm599, %v487, 0.0
        %v713 = vrot.slane %v712, 4
        %v714 = vadd.f32 %v712, %v713
        %v715 = vrot.slane %v714, 2
        %v716 = vadd.f32 %v714, %v715
        %v717 = vrot.slane %v716, 1
        %v718 = vadd.f32 %v716, %v717
        %v719 = vsel %vm599, %v488, 0.0
        %v720 = vrot.slane %v719, 4
        %v721 = vadd.f32 %v719, %v720
        %v722 = vrot.slane %v721, 2
        %v723 = vadd.f32 %v721, %v722
        %v724 = vrot.slane %v723, 1
        %v725 = vadd.f32 %v723, %v724
        %v726 = vsel %vm599, %v489, 0.0
        %v727 = vrot.slane %v726, 4
        %v728 = vadd.f32 %v726, %v727
        %v729 = vrot.slane %v728, 2
        %v730 = vadd.f32 %v728, %v729
        %v731 = vrot.slane %v730, 1
        %v732 = vadd.f32 %v730, %v731
        %v733 = vsel %vm599, %v490, 0.0
        %v734 = vrot.slane %v733, 4
        %v735 = vadd.f32 %v733, %v734
        %v736 = vrot.slane %v735, 2
        %v737 = vadd.f32 %v735, %v736
        %v738 = vrot.slane %v737, 1
        %v739 = vadd.f32 %v737, %v738
        %v740 = vsel %vm599, %v491, 0.0
        %v741 = vrot.slane %v740, 4
        %v742 = vadd.f32 %v740, %v741
        %v743 = vrot.slane %v742, 2
        %v744 = vadd.f32 %v742, %v743
        %v745 = vrot.slane %v744, 1
        %v746 = vadd.f32 %v744, %v745
        %v747 = vsel %vm599, %v492, 0.0
        %v748 = vrot.slane %v747, 4
        %v749 = vadd.f32 %v747, %v748
        %v750 = vrot.slane %v749, 2
        %v751 = vadd.f32 %v749, %v750
        %v752 = vrot.slane %v751, 1
        %v753 = vadd.f32 %v751, %v752
        %v754 = vsel %vm599, %v493, 0.0
        %v755 = vrot.slane %v754, 4
        %v756 = vadd.f32 %v754, %v755
        %v757 = vrot.slane %v756, 2
        %v758 = vadd.f32 %v756, %v757
        %v759 = vrot.slane %v758, 1
        %v760 = vadd.f32 %v758, %v759
        %v761 = vsel %vm599, %v494, 0.0
        %v762 = vrot.slane %v761, 4
        %v763 = vadd.f32 %v761, %v762
        %v764 = vrot.slane %v763, 2
        %v765 = vadd.f32 %v763, %v764
        %v766 = vrot.slane %v765, 1
        %v767 = vadd.f32 %v765, %v766
        %v768 = vsel %vm599, %v495, 0.0
        %v769 = vrot.slane %v768, 4
        %v770 = vadd.f32 %v768, %v769
        %v771 = vrot.slane %v770, 2
        %v772 = vadd.f32 %v770, %v771
        %v773 = vrot.slane %v772, 1
        %v774 = vadd.f32 %v772, %v773
        %v775 = vsel %vm599, %v496, 0.0
        %v776 = vrot.slane %v775, 4
        %v777 = vadd.f32 %v775, %v776
        %v778 = vrot.slane %v777, 2
        %v779 = vadd.f32 %v777, %v778
        %v780 = vrot.slane %v779, 1
        %v781 = vadd.f32 %v779, %v780
        %v782 = vsel %vm599, %v497, 0.0
        %v783 = vrot.slane %v782, 4
        %v784 = vadd.f32 %v782, %v783
        %v785 = vrot.slane %v784, 2
        %v786 = vadd.f32 %v784, %v785
        %v787 = vrot.slane %v786, 1
        %v788 = vadd.f32 %v786, %v787
        %v789 = vsel %vm599, %v498, 0.0
        %v790 = vrot.slane %v789, 4
        %v791 = vadd.f32 %v789, %v790
        %v792 = vrot.slane %v791, 2
        %v793 = vadd.f32 %v791, %v792
        %v794 = vrot.slane %v793, 1
        %v795 = vadd.f32 %v793, %v794
        %v796 = vsel %vm599, %v499, 0.0
        %v797 = vrot.slane %v796, 4
        %v798 = vadd.f32 %v796, %v797
        %v799 = vrot.slane %v798, 2
        %v800 = vadd.f32 %v798, %v799
        %v801 = vrot.slane %v800, 1
        %v802 = vadd.f32 %v800, %v801
        %v803 = vsel %vm599, %v500, 0.0
        %v804 = vrot.slane %v803, 4
        %v805 = vadd.f32 %v803, %v804
        %v806 = vrot.slane %v805, 2
        %v807 = vadd.f32 %v805, %v806
        %v808 = vrot.slane %v807, 1
        %v809 = vadd.f32 %v807, %v808
        %v810 = vsel %vm599, %v501, 0.0
        %v811 = vrot.slane %v810, 4
        %v812 = vadd.f32 %v810, %v811
        %v813 = vrot.slane %v812, 2
        %v814 = vadd.f32 %v812, %v813
        %v815 = vrot.slane %v814, 1
        %v816 = vadd.f32 %v814, %v815
        %v817 = vsel %vm599, %v502, 0.0
        %v818 = vrot.slane %v817, 4
        %v819 = vadd.f32 %v817, %v818
        %v820 = vrot.slane %v819, 2
        %v821 = vadd.f32 %v819, %v820
        %v822 = vrot.slane %v821, 1
        %v823 = vadd.f32 %v821, %v822
        %v824 = vsel %vm599, %v503, 0.0
        %v825 = vrot.slane %v824, 4
        %v826 = vadd.f32 %v824, %v825
        %v827 = vrot.slane %v826, 2
        %v828 = vadd.f32 %v826, %v827
        %v829 = vrot.slane %v828, 1
        %v830 = vadd.f32 %v828, %v829
        %v831 = vsel %vm599, %v504, 0.0
        %v832 = vrot.slane %v831, 4
        %v833 = vadd.f32 %v831, %v832
        %v834 = vrot.slane %v833, 2
        %v835 = vadd.f32 %v833, %v834
        %v836 = vrot.slane %v835, 1
        %v837 = vadd.f32 %v835, %v836
        %v838 = vsel %vm599, %v505, 0.0
        %v839 = vrot.slane %v838, 4
        %v840 = vadd.f32 %v838, %v839
        %v841 = vrot.slane %v840, 2
        %v842 = vadd.f32 %v840, %v841
        %v843 = vrot.slane %v842, 1
        %v844 = vadd.f32 %v842, %v843
        %v845 = vsel %vm599, %v506, 0.0
        %v846 = vrot.slane %v845, 4
        %v847 = vadd.f32 %v845, %v846
        %v848 = vrot.slane %v847, 2
        %v849 = vadd.f32 %v847, %v848
        %v850 = vrot.slane %v849, 1
        %v851 = vadd.f32 %v849, %v850
        %v852 = vsel %vm599, %v507, 0.0
        %v853 = vrot.slane %v852, 4
        %v854 = vadd.f32 %v852, %v853
        %v855 = vrot.slane %v854, 2
        %v856 = vadd.f32 %v854, %v855
        %v857 = vrot.slane %v856, 1
        %v858 = vadd.f32 %v856, %v857
        %v859 = vsel %vm599, %v508, 0.0
        %v860 = vrot.slane %v859, 4
        %v861 = vadd.f32 %v859, %v860
        %v862 = vrot.slane %v861, 2
        %v863 = vadd.f32 %v861, %v862
        %v864 = vrot.slane %v863, 1
        %v865 = vadd.f32 %v863, %v864
        %v866 = vsel %vm599, %v509, 0.0
        %v867 = vrot.slane %v866, 4
        %v868 = vadd.f32 %v866, %v867
        %v869 = vrot.slane %v868, 2
        %v870 = vadd.f32 %v868, %v869
        %v871 = vrot.slane %v870, 1
        %v872 = vadd.f32 %v870, %v871
        %v873 = vsel %vm599, %v510, 0.0
        %v874 = vrot.slane %v873, 4
        %v875 = vadd.f32 %v873, %v874
        %v876 = vrot.slane %v875, 2
        %v877 = vadd.f32 %v875, %v876
        %v878 = vrot.slane %v877, 1
        %v879 = vadd.f32 %v877, %v878
        %v880 = vsel %vm599, %v511, 0.0
        %v881 = vrot.slane %v880, 4
        %v882 = vadd.f32 %v880, %v881
        %v883 = vrot.slane %v882, 2
        %v884 = vadd.f32 %v882, %v883
        %v885 = vrot.slane %v884, 1
        %v886 = vadd.f32 %v884, %v885
        %v887 = vsel %vm599, %v512, 0.0
        %v888 = vrot.slane %v887, 4
        %v889 = vadd.f32 %v887, %v888
        %v890 = vrot.slane %v889, 2
        %v891 = vadd.f32 %v889, %v890
        %v892 = vrot.slane %v891, 1
        %v893 = vadd.f32 %v891, %v892
        %v894 = vsel %vm599, %v513, 0.0
        %v895 = vrot.slane %v894, 4
        %v896 = vadd.f32 %v894, %v895
        %v897 = vrot.slane %v896, 2
        %v898 = vadd.f32 %v896, %v897
        %v899 = vrot.slane %v898, 1
        %v900 = vadd.f32 %v898, %v899
        %v901 = vsel %vm599, %v514, 0.0
        %v902 = vrot.slane %v901, 4
        %v903 = vadd.f32 %v901, %v902
        %v904 = vrot.slane %v903, 2
        %v905 = vadd.f32 %v903, %v904
        %v906 = vrot.slane %v905, 1
        %v907 = vadd.f32 %v905, %v906
        %v908 = vsel %vm599, %v515, 0.0
        %v909 = vrot.slane %v908, 4
        %v910 = vadd.f32 %v908, %v909
        %v911 = vrot.slane %v910, 2
        %v912 = vadd.f32 %v910, %v911
        %v913 = vrot.slane %v912, 1
        %v914 = vadd.f32 %v912, %v913
        %v915 = vsel %vm599, %v516, 0.0
        %v916 = vrot.slane %v915, 4
        %v917 = vadd.f32 %v915, %v916
        %v918 = vrot.slane %v917, 2
        %v919 = vadd.f32 %v917, %v918
        %v920 = vrot.slane %v919, 1
        %v921 = vadd.f32 %v919, %v920
        %v922 = vsel %vm599, %v517, 0.0
        %v923 = vrot.slane %v922, 4
        %v924 = vadd.f32 %v922, %v923
        %v925 = vrot.slane %v924, 2
        %v926 = vadd.f32 %v924, %v925
        %v927 = vrot.slane %v926, 1
        %v928 = vadd.f32 %v926, %v927
        %v929 = vsel %vm599, %v518, 0.0
        %v930 = vrot.slane %v929, 4
        %v931 = vadd.f32 %v929, %v930
        %v932 = vrot.slane %v931, 2
        %v933 = vadd.f32 %v931, %v932
        %v934 = vrot.slane %v933, 1
        %v935 = vadd.f32 %v933, %v934
        %v936 = vsel %vm599, %v519, 0.0
        %v937 = vrot.slane %v936, 4
        %v938 = vadd.f32 %v936, %v937
        %v939 = vrot.slane %v938, 2
        %v940 = vadd.f32 %v938, %v939
        %v941 = vrot.slane %v940, 1
        %v942 = vadd.f32 %v940, %v941
        %v943 = vsel %vm599, %v520, 0.0
        %v944 = vrot.slane %v943, 4
        %v945 = vadd.f32 %v943, %v944
        %v946 = vrot.slane %v945, 2
        %v947 = vadd.f32 %v945, %v946
        %v948 = vrot.slane %v947, 1
        %v949 = vadd.f32 %v947, %v948
        %v950 = vsel %vm599, %v521, 0.0
        %v951 = vrot.slane %v950, 4
        %v952 = vadd.f32 %v950, %v951
        %v953 = vrot.slane %v952, 2
        %v954 = vadd.f32 %v952, %v953
        %v955 = vrot.slane %v954, 1
        %v956 = vadd.f32 %v954, %v955
        %v957 = vsel %vm599, %v522, 0.0
        %v958 = vrot.slane %v957, 4
        %v959 = vadd.f32 %v957, %v958
        %v960 = vrot.slane %v959, 2
        %v961 = vadd.f32 %v959, %v960
        %v962 = vrot.slane %v961, 1
        %v963 = vadd.f32 %v961, %v962
        %v964 = vsel %vm599, %v523, 0.0
        %v965 = vrot.slane %v964, 4
        %v966 = vadd.f32 %v964, %v965
        %v967 = vrot.slane %v966, 2
        %v968 = vadd.f32 %v966, %v967
        %v969 = vrot.slane %v968, 1
        %v970 = vadd.f32 %v968, %v969
        %v971 = vsel %vm599, %v524, 0.0
        %v972 = vrot.slane %v971, 4
        %v973 = vadd.f32 %v971, %v972
        %v974 = vrot.slane %v973, 2
        %v975 = vadd.f32 %v973, %v974
        %v976 = vrot.slane %v975, 1
        %v977 = vadd.f32 %v975, %v976
        %v978 = vsel %vm599, %v525, 0.0
        %v979 = vrot.slane %v978, 4
        %v980 = vadd.f32 %v978, %v979
        %v981 = vrot.slane %v980, 2
        %v982 = vadd.f32 %v980, %v981
        %v983 = vrot.slane %v982, 1
        %v984 = vadd.f32 %v982, %v983
        %v985 = vsel %vm599, %v526, 0.0
        %v986 = vrot.slane %v985, 4
        %v987 = vadd.f32 %v985, %v986
        %v988 = vrot.slane %v987, 2
        %v989 = vadd.f32 %v987, %v988
        %v990 = vrot.slane %v989, 1
        %v991 = vadd.f32 %v989, %v990
        %v992 = vsel %vm599, %v527, 0.0
        %v993 = vrot.slane %v992, 4
        %v994 = vadd.f32 %v992, %v993
        %v995 = vrot.slane %v994, 2
        %v996 = vadd.f32 %v994, %v995
        %v997 = vrot.slane %v996, 1
        %v998 = vadd.f32 %v996, %v997
        %v999 = vsel %vm599, %v528, 0.0
        %v1000 = vrot.slane %v999, 4
        %v1001 = vadd.f32 %v999, %v1000
        %v1002 = vrot.slane %v1001, 2
        %v1003 = vadd.f32 %v1001, %v1002
        %v1004 = vrot.slane %v1003, 1
        %v1005 = vadd.f32 %v1003, %v1004
        %v1006 = vsel %vm599, %v529, 0.0
        %v1007 = vrot.slane %v1006, 4
        %v1008 = vadd.f32 %v1006, %v1007
        %v1009 = vrot.slane %v1008, 2
        %v1010 = vadd.f32 %v1008, %v1009
        %v1011 = vrot.slane %v1010, 1
        %v1012 = vadd.f32 %v1010, %v1011
        %v1013 = vsel %vm599, %v530, 0.0
        %v1014 = vrot.slane %v1013, 4
        %v1015 = vadd.f32 %v1013, %v1014
        %v1016 = vrot.slane %v1015, 2
        %v1017 = vadd.f32 %v1015, %v1016
        %v1018 = vrot.slane %v1017, 1
        %v1019 = vadd.f32 %v1017, %v1018
        %v1020 = vsel %vm599, %v531, 0.0
        %v1021 = vrot.slane %v1020, 4
        %v1022 = vadd.f32 %v1020, %v1021
        %v1023 = vrot.slane %v1022, 2
        %v1024 = vadd.f32 %v1022, %v1023
        %v1025 = vrot.slane %v1024, 1
        %v1026 = vadd.f32 %v1024, %v1025
        %v1027 = vsel %vm599, %v532, 0.0
        %v1028 = vrot.slane %v1027, 4
        %v1029 = vadd.f32 %v1027, %v1028
        %v1030 = vrot.slane %v1029, 2
        %v1031 = vadd.f32 %v1029, %v1030
        %v1032 = vrot.slane %v1031, 1
        %v1033 = vadd.f32 %v1031, %v1032
        %v1034 = vsel %vm599, %v533, 0.0
        %v1035 = vrot.slane %v1034, 4
        %v1036 = vadd.f32 %v1034, %v1035
        %v1037 = vrot.slane %v1036, 2
        %v1038 = vadd.f32 %v1036, %v1037
        %v1039 = vrot.slane %v1038, 1
        %v1040 = vadd.f32 %v1038, %v1039
        %v1041 = vsel %vm599, %v534, 0.0
        %v1042 = vrot.slane %v1041, 4
        %v1043 = vadd.f32 %v1041, %v1042
        %v1044 = vrot.slane %v1043, 2
        %v1045 = vadd.f32 %v1043, %v1044
        %v1046 = vrot.slane %v1045, 1
        %v1047 = vadd.f32 %v1045, %v1046
        %v1048 = vsel %vm599, %v535, 0.0
        %v1049 = vrot.slane %v1048, 4
        %v1050 = vadd.f32 %v1048, %v1049
        %v1051 = vrot.slane %v1050, 2
        %v1052 = vadd.f32 %v1050, %v1051
        %v1053 = vrot.slane %v1052, 1
        %v1054 = vadd.f32 %v1052, %v1053
        %v1055 = vsel %vm599, %v536, 0.0
        %v1056 = vrot.slane %v1055, 4
        %v1057 = vadd.f32 %v1055, %v1056
        %v1058 = vrot.slane %v1057, 2
        %v1059 = vadd.f32 %v1057, %v1058
        %v1060 = vrot.slane %v1059, 1
        %v1061 = vadd.f32 %v1059, %v1060
        %v1062 = vsel %vm599, %v537, 0.0
        %v1063 = vrot.slane %v1062, 4
        %v1064 = vadd.f32 %v1062, %v1063
        %v1065 = vrot.slane %v1064, 2
        %v1066 = vadd.f32 %v1064, %v1065
        %v1067 = vrot.slane %v1066, 1
        %v1068 = vadd.f32 %v1066, %v1067
        %v1069 = vsel %vm599, %v538, 0.0
        %v1070 = vrot.slane %v1069, 4
        %v1071 = vadd.f32 %v1069, %v1070
        %v1072 = vrot.slane %v1071, 2
        %v1073 = vadd.f32 %v1071, %v1072
        %v1074 = vrot.slane %v1073, 1
        %v1075 = vadd.f32 %v1073, %v1074
        %v1076 = vsel %vm599, %v539, 0.0
        %v1077 = vrot.slane %v1076, 4
        %v1078 = vadd.f32 %v1076, %v1077
        %v1079 = vrot.slane %v1078, 2
        %v1080 = vadd.f32 %v1078, %v1079
        %v1081 = vrot.slane %v1080, 1
        %v1082 = vadd.f32 %v1080, %v1081
        %v1083 = vsel %vm599, %v540, 0.0
        %v1084 = vrot.slane %v1083, 4
        %v1085 = vadd.f32 %v1083, %v1084
        %v1086 = vrot.slane %v1085, 2
        %v1087 = vadd.f32 %v1085, %v1086
        %v1088 = vrot.slane %v1087, 1
        %v1089 = vadd.f32 %v1087, %v1088
        %v1090 = vsel %vm599, %v541, 0.0
        %v1091 = vrot.slane %v1090, 4
        %v1092 = vadd.f32 %v1090, %v1091
        %v1093 = vrot.slane %v1092, 2
        %v1094 = vadd.f32 %v1092, %v1093
        %v1095 = vrot.slane %v1094, 1
        %v1096 = vadd.f32 %v1094, %v1095
        %v1097 = vsel %vm599, %v542, 0.0
        %v1098 = vrot.slane %v1097, 4
        %v1099 = vadd.f32 %v1097, %v1098
        %v1100 = vrot.slane %v1099, 2
        %v1101 = vadd.f32 %v1099, %v1100
        %v1102 = vrot.slane %v1101, 1
        %v1103 = vadd.f32 %v1101, %v1102
        %v1104 = vsel %vm599, %v543, 0.0
        %v1105 = vrot.slane %v1104, 4
        %v1106 = vadd.f32 %v1104, %v1105
        %v1107 = vrot.slane %v1106, 2
        %v1108 = vadd.f32 %v1106, %v1107
        %v1109 = vrot.slane %v1108, 1
        %v1110 = vadd.f32 %v1108, %v1109
        %v1111 = vsel %vm599, %v544, 0.0
        %v1112 = vrot.slane %v1111, 4
        %v1113 = vadd.f32 %v1111, %v1112
        %v1114 = vrot.slane %v1113, 2
        %v1115 = vadd.f32 %v1113, %v1114
        %v1116 = vrot.slane %v1115, 1
        %v1117 = vadd.f32 %v1115, %v1116
        %v1118 = vsel %vm599, %v545, 0.0
        %v1119 = vrot.slane %v1118, 4
        %v1120 = vadd.f32 %v1118, %v1119
        %v1121 = vrot.slane %v1120, 2
        %v1122 = vadd.f32 %v1120, %v1121
        %v1123 = vrot.slane %v1122, 1
        %v1124 = vadd.f32 %v1122, %v1123
        %v1125 = vsel %vm599, %v546, 0.0
        %v1126 = vrot.slane %v1125, 4
        %v1127 = vadd.f32 %v1125, %v1126
        %v1128 = vrot.slane %v1127, 2
        %v1129 = vadd.f32 %v1127, %v1128
        %v1130 = vrot.slane %v1129, 1
        %v1131 = vadd.f32 %v1129, %v1130
        %v1132 = vsel %vm599, %v547, 0.0
        %v1133 = vrot.slane %v1132, 4
        %v1134 = vadd.f32 %v1132, %v1133
        %v1135 = vrot.slane %v1134, 2
        %v1136 = vadd.f32 %v1134, %v1135
        %v1137 = vrot.slane %v1136, 1
        %v1138 = vadd.f32 %v1136, %v1137
        %v1139 = vsel %vm599, %v548, 0.0
        %v1140 = vrot.slane %v1139, 4
        %v1141 = vadd.f32 %v1139, %v1140
        %v1142 = vrot.slane %v1141, 2
        %v1143 = vadd.f32 %v1141, %v1142
        %v1144 = vrot.slane %v1143, 1
        %v1145 = vadd.f32 %v1143, %v1144
        %v1146 = vsel %vm599, %v549, 0.0
        %v1147 = vrot.slane %v1146, 4
        %v1148 = vadd.f32 %v1146, %v1147
        %v1149 = vrot.slane %v1148, 2
        %v1150 = vadd.f32 %v1148, %v1149
        %v1151 = vrot.slane %v1150, 1
        %v1152 = vadd.f32 %v1150, %v1151
        %v1153 = vsel %vm599, %v550, 0.0
        %v1154 = vrot.slane %v1153, 4
        %v1155 = vadd.f32 %v1153, %v1154
        %v1156 = vrot.slane %v1155, 2
        %v1157 = vadd.f32 %v1155, %v1156
        %v1158 = vrot.slane %v1157, 1
        %v1159 = vadd.f32 %v1157, %v1158
        %v1160 = vsel %vm599, %v551, 0.0
        %v1161 = vrot.slane %v1160, 4
        %v1162 = vadd.f32 %v1160, %v1161
        %v1163 = vrot.slane %v1162, 2
        %v1164 = vadd.f32 %v1162, %v1163
        %v1165 = vrot.slane %v1164, 1
        %v1166 = vadd.f32 %v1164, %v1165
        %v1167 = vsel %vm599, %v552, 0.0
        %v1168 = vrot.slane %v1167, 4
        %v1169 = vadd.f32 %v1167, %v1168
        %v1170 = vrot.slane %v1169, 2
        %v1171 = vadd.f32 %v1169, %v1170
        %v1172 = vrot.slane %v1171, 1
        %v1173 = vadd.f32 %v1171, %v1172
        %v1174 = vsel %vm599, %v553, 0.0
        %v1175 = vrot.slane %v1174, 4
        %v1176 = vadd.f32 %v1174, %v1175
        %v1177 = vrot.slane %v1176, 2
        %v1178 = vadd.f32 %v1176, %v1177
        %v1179 = vrot.slane %v1178, 1
        %v1180 = vadd.f32 %v1178, %v1179
        %v1181 = vsel %vm599, %v554, 0.0
        %v1182 = vrot.slane %v1181, 4
        %v1183 = vadd.f32 %v1181, %v1182
        %v1184 = vrot.slane %v1183, 2
        %v1185 = vadd.f32 %v1183, %v1184
        %v1186 = vrot.slane %v1185, 1
        %v1187 = vadd.f32 %v1185, %v1186
        %v1188 = vsel %vm599, %v555, 0.0
        %v1189 = vrot.slane %v1188, 4
        %v1190 = vadd.f32 %v1188, %v1189
        %v1191 = vrot.slane %v1190, 2
        %v1192 = vadd.f32 %v1190, %v1191
        %v1193 = vrot.slane %v1192, 1
        %v1194 = vadd.f32 %v1192, %v1193
        %v1195 = vsel %vm599, %v556, 0.0
        %v1196 = vrot.slane %v1195, 4
        %v1197 = vadd.f32 %v1195, %v1196
        %v1198 = vrot.slane %v1197, 2
        %v1199 = vadd.f32 %v1197, %v1198
        %v1200 = vrot.slane %v1199, 1
        %v1201 = vadd.f32 %v1199, %v1200
        %v1202 = vsel %vm599, %v557, 0.0
        %v1203 = vrot.slane %v1202, 4
        %v1204 = vadd.f32 %v1202, %v1203
        %v1205 = vrot.slane %v1204, 2
        %v1206 = vadd.f32 %v1204, %v1205
        %v1207 = vrot.slane %v1206, 1
        %v1208 = vadd.f32 %v1206, %v1207
        %v1209 = vsel %vm599, %v558, 0.0
        %v1210 = vrot.slane %v1209, 4
        %v1211 = vadd.f32 %v1209, %v1210
        %v1212 = vrot.slane %v1211, 2
        %v1213 = vadd.f32 %v1211, %v1212
        %v1214 = vrot.slane %v1213, 1
        %v1215 = vadd.f32 %v1213, %v1214
        %v1216 = vsel %vm599, %v559, 0.0
        %v1217 = vrot.slane %v1216, 4
        %v1218 = vadd.f32 %v1216, %v1217
        %v1219 = vrot.slane %v1218, 2
        %v1220 = vadd.f32 %v1218, %v1219
        %v1221 = vrot.slane %v1220, 1
        %v1222 = vadd.f32 %v1220, %v1221
        %v1223 = vsel %vm599, %v560, 0.0
        %v1224 = vrot.slane %v1223, 4
        %v1225 = vadd.f32 %v1223, %v1224
        %v1226 = vrot.slane %v1225, 2
        %v1227 = vadd.f32 %v1225, %v1226
        %v1228 = vrot.slane %v1227, 1
        %v1229 = vadd.f32 %v1227, %v1228
        %v1230 = vsel %vm599, %v561, 0.0
        %v1231 = vrot.slane %v1230, 4
        %v1232 = vadd.f32 %v1230, %v1231
        %v1233 = vrot.slane %v1232, 2
        %v1234 = vadd.f32 %v1232, %v1233
        %v1235 = vrot.slane %v1234, 1
        %v1236 = vadd.f32 %v1234, %v1235
        %v1237 = vsel %vm599, %v562, 0.0
        %v1238 = vrot.slane %v1237, 4
        %v1239 = vadd.f32 %v1237, %v1238
        %v1240 = vrot.slane %v1239, 2
        %v1241 = vadd.f32 %v1239, %v1240
        %v1242 = vrot.slane %v1241, 1
        %v1243 = vadd.f32 %v1241, %v1242
        %v1244 = vsel %vm599, %v563, 0.0
        %v1245 = vrot.slane %v1244, 4
        %v1246 = vadd.f32 %v1244, %v1245
        %v1247 = vrot.slane %v1246, 2
        %v1248 = vadd.f32 %v1246, %v1247
        %v1249 = vrot.slane %v1248, 1
        %v1250 = vadd.f32 %v1248, %v1249
        %v1251 = vsel %vm599, %v564, 0.0
        %v1252 = vrot.slane %v1251, 4
        %v1253 = vadd.f32 %v1251, %v1252
        %v1254 = vrot.slane %v1253, 2
        %v1255 = vadd.f32 %v1253, %v1254
        %v1256 = vrot.slane %v1255, 1
        %v1257 = vadd.f32 %v1255, %v1256
        %v1258 = vsel %vm599, %v565, 0.0
        %v1259 = vrot.slane %v1258, 4
        %v1260 = vadd.f32 %v1258, %v1259
        %v1261 = vrot.slane %v1260, 2
        %v1262 = vadd.f32 %v1260, %v1261
        %v1263 = vrot.slane %v1262, 1
        %v1264 = vadd.f32 %v1262, %v1263
        %v1265 = vsel %vm599, %v566, 0.0
        %v1266 = vrot.slane %v1265, 4
        %v1267 = vadd.f32 %v1265, %v1266
        %v1268 = vrot.slane %v1267, 2
        %v1269 = vadd.f32 %v1267, %v1268
        %v1270 = vrot.slane %v1269, 1
        %v1271 = vadd.f32 %v1269, %v1270
        %v1272 = vsel %vm599, %v567, 0.0
        %v1273 = vrot.slane %v1272, 4
        %v1274 = vadd.f32 %v1272, %v1273
        %v1275 = vrot.slane %v1274, 2
        %v1276 = vadd.f32 %v1274, %v1275
        %v1277 = vrot.slane %v1276, 1
        %v1278 = vadd.f32 %v1276, %v1277
        %v1279 = vsel %vm599, %v568, 0.0
        %v1280 = vrot.slane %v1279, 4
        %v1281 = vadd.f32 %v1279, %v1280
        %v1282 = vrot.slane %v1281, 2
        %v1283 = vadd.f32 %v1281, %v1282
        %v1284 = vrot.slane %v1283, 1
        %v1285 = vadd.f32 %v1283, %v1284
        %v1286 = vsel %vm599, %v569, 0.0
        %v1287 = vrot.slane %v1286, 4
        %v1288 = vadd.f32 %v1286, %v1287
        %v1289 = vrot.slane %v1288, 2
        %v1290 = vadd.f32 %v1288, %v1289
        %v1291 = vrot.slane %v1290, 1
        %v1292 = vadd.f32 %v1290, %v1291
        %v1293 = vsel %vm599, %v570, 0.0
        %v1294 = vrot.slane %v1293, 4
        %v1295 = vadd.f32 %v1293, %v1294
        %v1296 = vrot.slane %v1295, 2
        %v1297 = vadd.f32 %v1295, %v1296
        %v1298 = vrot.slane %v1297, 1
        %v1299 = vadd.f32 %v1297, %v1298
        %v1300 = vsel %vm599, %v571, 0.0
        %v1301 = vrot.slane %v1300, 4
        %v1302 = vadd.f32 %v1300, %v1301
        %v1303 = vrot.slane %v1302, 2
        %v1304 = vadd.f32 %v1302, %v1303
        %v1305 = vrot.slane %v1304, 1
        %v1306 = vadd.f32 %v1304, %v1305
        %v1307 = vsel %vm599, %v572, 0.0
        %v1308 = vrot.slane %v1307, 4
        %v1309 = vadd.f32 %v1307, %v1308
        %v1310 = vrot.slane %v1309, 2
        %v1311 = vadd.f32 %v1309, %v1310
        %v1312 = vrot.slane %v1311, 1
        %v1313 = vadd.f32 %v1311, %v1312
        %v1314 = vsel %vm599, %v573, 0.0
        %v1315 = vrot.slane %v1314, 4
        %v1316 = vadd.f32 %v1314, %v1315
        %v1317 = vrot.slane %v1316, 2
        %v1318 = vadd.f32 %v1316, %v1317
        %v1319 = vrot.slane %v1318, 1
        %v1320 = vadd.f32 %v1318, %v1319
        %v1321 = vsel %vm599, %v574, 0.0
        %v1322 = vrot.slane %v1321, 4
        %v1323 = vadd.f32 %v1321, %v1322
        %v1324 = vrot.slane %v1323, 2
        %v1325 = vadd.f32 %v1323, %v1324
        %v1326 = vrot.slane %v1325, 1
        %v1327 = vadd.f32 %v1325, %v1326
        %v1328 = vsel %vm599, %v575, 0.0
        %v1329 = vrot.slane %v1328, 4
        %v1330 = vadd.f32 %v1328, %v1329
        %v1331 = vrot.slane %v1330, 2
        %v1332 = vadd.f32 %v1330, %v1331
        %v1333 = vrot.slane %v1332, 1
        %v1334 = vadd.f32 %v1332, %v1333
        %v1335 = vsel %vm599, %v576, 0.0
        %v1336 = vrot.slane %v1335, 4
        %v1337 = vadd.f32 %v1335, %v1336
        %v1338 = vrot.slane %v1337, 2
        %v1339 = vadd.f32 %v1337, %v1338
        %v1340 = vrot.slane %v1339, 1
        %v1341 = vadd.f32 %v1339, %v1340
        %v1342 = vsel %vm599, %v577, 0.0
        %v1343 = vrot.slane %v1342, 4
        %v1344 = vadd.f32 %v1342, %v1343
        %v1345 = vrot.slane %v1344, 2
        %v1346 = vadd.f32 %v1344, %v1345
        %v1347 = vrot.slane %v1346, 1
        %v1348 = vadd.f32 %v1346, %v1347
        %v1349 = vsel %vm599, %v578, 0.0
        %v1350 = vrot.slane %v1349, 4
        %v1351 = vadd.f32 %v1349, %v1350
        %v1352 = vrot.slane %v1351, 2
        %v1353 = vadd.f32 %v1351, %v1352
        %v1354 = vrot.slane %v1353, 1
        %v1355 = vadd.f32 %v1353, %v1354
        %v1356 = vsel %vm599, %v579, 0.0
        %v1357 = vrot.slane %v1356, 4
        %v1358 = vadd.f32 %v1356, %v1357
        %v1359 = vrot.slane %v1358, 2
        %v1360 = vadd.f32 %v1358, %v1359
        %v1361 = vrot.slane %v1360, 1
        %v1362 = vadd.f32 %v1360, %v1361
        %v1363 = vsel %vm599, %v580, 0.0
        %v1364 = vrot.slane %v1363, 4
        %v1365 = vadd.f32 %v1363, %v1364
        %v1366 = vrot.slane %v1365, 2
        %v1367 = vadd.f32 %v1365, %v1366
        %v1368 = vrot.slane %v1367, 1
        %v1369 = vadd.f32 %v1367, %v1368
        %v1370 = vsel %vm599, %v581, 0.0
        %v1371 = vrot.slane %v1370, 4
        %v1372 = vadd.f32 %v1370, %v1371
        %v1373 = vrot.slane %v1372, 2
        %v1374 = vadd.f32 %v1372, %v1373
        %v1375 = vrot.slane %v1374, 1
        %v1376 = vadd.f32 %v1374, %v1375
        %v1377 = vsel %vm599, %v582, 0.0
        %v1378 = vrot.slane %v1377, 4
        %v1379 = vadd.f32 %v1377, %v1378
        %v1380 = vrot.slane %v1379, 2
        %v1381 = vadd.f32 %v1379, %v1380
        %v1382 = vrot.slane %v1381, 1
        %v1383 = vadd.f32 %v1381, %v1382
        %v1384 = vsel %vm599, %v583, 0.0
        %v1385 = vrot.slane %v1384, 4
        %v1386 = vadd.f32 %v1384, %v1385
        %v1387 = vrot.slane %v1386, 2
        %v1388 = vadd.f32 %v1386, %v1387
        %v1389 = vrot.slane %v1388, 1
        %v1390 = vadd.f32 %v1388, %v1389
        %v1391 = vsel %vm599, %v584, 0.0
        %v1392 = vrot.slane %v1391, 4
        %v1393 = vadd.f32 %v1391, %v1392
        %v1394 = vrot.slane %v1393, 2
        %v1395 = vadd.f32 %v1393, %v1394
        %v1396 = vrot.slane %v1395, 1
        %v1397 = vadd.f32 %v1395, %v1396
        %v1398 = vsel %vm599, %v585, 0.0
        %v1399 = vrot.slane %v1398, 4
        %v1400 = vadd.f32 %v1398, %v1399
        %v1401 = vrot.slane %v1400, 2
        %v1402 = vadd.f32 %v1400, %v1401
        %v1403 = vrot.slane %v1402, 1
        %v1404 = vadd.f32 %v1402, %v1403
        %v1405 = vsel %vm599, %v586, 0.0
        %v1406 = vrot.slane %v1405, 4
        %v1407 = vadd.f32 %v1405, %v1406
        %v1408 = vrot.slane %v1407, 2
        %v1409 = vadd.f32 %v1407, %v1408
        %v1410 = vrot.slane %v1409, 1
        %v1411 = vadd.f32 %v1409, %v1410
        %v1412 = vsel %vm599, %v587, 0.0
        %v1413 = vrot.slane %v1412, 4
        %v1414 = vadd.f32 %v1412, %v1413
        %v1415 = vrot.slane %v1414, 2
        %v1416 = vadd.f32 %v1414, %v1415
        %v1417 = vrot.slane %v1416, 1
        %v1418 = vadd.f32 %v1416, %v1417
        %v1419 = vsel %vm599, %v588, 0.0
        %v1420 = vrot.slane %v1419, 4
        %v1421 = vadd.f32 %v1419, %v1420
        %v1422 = vrot.slane %v1421, 2
        %v1423 = vadd.f32 %v1421, %v1422
        %v1424 = vrot.slane %v1423, 1
        %v1425 = vadd.f32 %v1423, %v1424
        %v1426 = vsel %vm599, %v589, 0.0
        %v1427 = vrot.slane %v1426, 4
        %v1428 = vadd.f32 %v1426, %v1427
        %v1429 = vrot.slane %v1428, 2
        %v1430 = vadd.f32 %v1428, %v1429
        %v1431 = vrot.slane %v1430, 1
        %v1432 = vadd.f32 %v1430, %v1431
        %v1433 = vsel %vm599, %v590, 0.0
        %v1434 = vrot.slane %v1433, 4
        %v1435 = vadd.f32 %v1433, %v1434
        %v1436 = vrot.slane %v1435, 2
        %v1437 = vadd.f32 %v1435, %v1436
        %v1438 = vrot.slane %v1437, 1
        %v1439 = vadd.f32 %v1437, %v1438
        %v1440 = vsel %vm599, %v591, 0.0
        %v1441 = vrot.slane %v1440, 4
        %v1442 = vadd.f32 %v1440, %v1441
        %v1443 = vrot.slane %v1442, 2
        %v1444 = vadd.f32 %v1442, %v1443
        %v1445 = vrot.slane %v1444, 1
        %v1446 = vadd.f32 %v1444, %v1445
        %v1447 = vsel %vm599, %v592, 0.0
        %v1448 = vrot.slane %v1447, 4
        %v1449 = vadd.f32 %v1447, %v1448
        %v1450 = vrot.slane %v1449, 2
        %v1451 = vadd.f32 %v1449, %v1450
        %v1452 = vrot.slane %v1451, 1
        %v1453 = vadd.f32 %v1451, %v1452
        %v1454 = vsel %vm599, %v593, 0.0
        %v1455 = vrot.slane %v1454, 4
        %v1456 = vadd.f32 %v1454, %v1455
        %v1457 = vrot.slane %v1456, 2
        %v1458 = vadd.f32 %v1456, %v1457
        %v1459 = vrot.slane %v1458, 1
        %v1460 = vadd.f32 %v1458, %v1459
        %v1461 = vsel %vm599, %v594, 0.0
        %v1462 = vrot.slane %v1461, 4
        %v1463 = vadd.f32 %v1461, %v1462
        %v1464 = vrot.slane %v1463, 2
        %v1465 = vadd.f32 %v1463, %v1464
        %v1466 = vrot.slane %v1465, 1
        %v1467 = vadd.f32 %v1465, %v1466
        %v1468 = vsel %vm599, %v595, 0.0
        %v1469 = vrot.slane %v1468, 4
        %v1470 = vadd.f32 %v1468, %v1469
        %v1471 = vrot.slane %v1470, 2
        %v1472 = vadd.f32 %v1470, %v1471
        %v1473 = vrot.slane %v1472, 1
        %v1474 = vadd.f32 %v1472, %v1473
        %v1475 = vsel %vm599, %v596, 0.0
        %v1476 = vrot.slane %v1475, 4
        %v1477 = vadd.f32 %v1475, %v1476
        %v1478 = vrot.slane %v1477, 2
        %v1479 = vadd.f32 %v1477, %v1478
        %v1480 = vrot.slane %v1479, 1
        %v1481 = vadd.f32 %v1479, %v1480
        %v1482 = vsel %vm599, %v597, 0.0
        %v1483 = vrot.slane %v1482, 4
        %v1484 = vadd.f32 %v1482, %v1483
        %v1485 = vrot.slane %v1484, 2
        %v1486 = vadd.f32 %v1484, %v1485
        %v1487 = vrot.slane %v1486, 1
        %v1488 = vadd.f32 %v1486, %v1487
        %v1489 = vsel %vm599, %v598, 0.0
        %v1490 = vrot.slane %v1489, 4
        %v1491 = vadd.f32 %v1489, %v1490
        %v1492 = vrot.slane %v1491, 2
        %v1493 = vadd.f32 %v1491, %v1492
        %v1494 = vrot.slane %v1493, 1
        %v1495 = vadd.f32 %v1493, %v1494
        %v1496 = vrcp.pop 4.0
        %v1497 = vmul.f32 4.0, %v1496
        %v1498 = vsub.f32 1.0, %v1497
        %v1499 = vmul.f32 %v1496, %v1498
        %v1500 = vadd.f32 %v1496, %v1499
        %vm1501 = vweird.f32 %v1496
        %v1502 = vsel %vm1501, %v1496, %v1500
        %v1503 = vmul.f32 %v606, %v1502
        %v1504 = vmul.f32 %v613, %v1502
        %v1505 = vmul.f32 %v620, %v1502
        %v1506 = vmul.f32 %v627, %v1502
        %v1507 = vmul.f32 %v634, %v1502
        %v1508 = vmul.f32 %v641, %v1502
        %v1509 = vmul.f32 %v648, %v1502
        %v1510 = vmul.f32 %v655, %v1502
        %v1511 = vmul.f32 %v662, %v1502
        %v1512 = vmul.f32 %v669, %v1502
        %v1513 = vmul.f32 %v676, %v1502
        %v1514 = vmul.f32 %v683, %v1502
        %v1515 = vmul.f32 %v690, %v1502
        %v1516 = vmul.f32 %v697, %v1502
        %v1517 = vmul.f32 %v704, %v1502
        %v1518 = vmul.f32 %v711, %v1502
        %v1519 = vmul.f32 %v718, %v1502
        %v1520 = vmul.f32 %v725, %v1502
        %v1521 = vmul.f32 %v732, %v1502
        %v1522 = vmul.f32 %v739, %v1502
        %v1523 = vmul.f32 %v746, %v1502
        %v1524 = vmul.f32 %v753, %v1502
        %v1525 = vmul.f32 %v760, %v1502
        %v1526 = vmul.f32 %v767, %v1502
        %v1527 = vmul.f32 %v774, %v1502
        %v1528 = vmul.f32 %v781, %v1502
        %v1529 = vmul.f32 %v788, %v1502
        %v1530 = vmul.f32 %v795, %v1502
        %v1531 = vmul.f32 %v802, %v1502
        %v1532 = vmul.f32 %v809, %v1502
        %v1533 = vmul.f32 %v816, %v1502
        %v1534 = vmul.f32 %v823, %v1502
        %v1535 = vmul.f32 %v830, %v1502
        %v1536 = vmul.f32 %v837, %v1502
        %v1537 = vmul.f32 %v844, %v1502
        %v1538 = vmul.f32 %v851, %v1502
        %v1539 = vmul.f32 %v858, %v1502
        %v1540 = vmul.f32 %v865, %v1502
        %v1541 = vmul.f32 %v872, %v1502
        %v1542 = vmul.f32 %v879, %v1502
        %v1543 = vmul.f32 %v886, %v1502
        %v1544 = vmul.f32 %v893, %v1502
        %v1545 = vmul.f32 %v900, %v1502
        %v1546 = vmul.f32 %v907, %v1502
        %v1547 = vmul.f32 %v914, %v1502
        %v1548 = vmul.f32 %v921, %v1502
        %v1549 = vmul.f32 %v928, %v1502
        %v1550 = vmul.f32 %v935, %v1502
        %v1551 = vmul.f32 %v942, %v1502
        %v1552 = vmul.f32 %v949, %v1502
        %v1553 = vmul.f32 %v956, %v1502
        %v1554 = vmul.f32 %v963, %v1502
        %v1555 = vmul.f32 %v970, %v1502
        %v1556 = vmul.f32 %v977, %v1502
        %v1557 = vmul.f32 %v984, %v1502
        %v1558 = vmul.f32 %v991, %v1502
        %v1559 = vmul.f32 %v998, %v1502
        %v1560 = vmul.f32 %v1005, %v1502
        %v1561 = vmul.f32 %v1012, %v1502
        %v1562 = vmul.f32 %v1019, %v1502
        %v1563 = vmul.f32 %v1026, %v1502
        %v1564 = vmul.f32 %v1033, %v1502
        %v1565 = vmul.f32 %v1040, %v1502
        %v1566 = vmul.f32 %v1047, %v1502
        %v1567 = vmul.f32 %v1054, %v1502
        %v1568 = vmul.f32 %v1061, %v1502
        %v1569 = vmul.f32 %v1068, %v1502
        %v1570 = vmul.f32 %v1075, %v1502
        %v1571 = vmul.f32 %v1082, %v1502
        %v1572 = vmul.f32 %v1089, %v1502
        %v1573 = vmul.f32 %v1096, %v1502
        %v1574 = vmul.f32 %v1103, %v1502
        %v1575 = vmul.f32 %v1110, %v1502
        %v1576 = vmul.f32 %v1117, %v1502
        %v1577 = vmul.f32 %v1124, %v1502
        %v1578 = vmul.f32 %v1131, %v1502
        %v1579 = vmul.f32 %v1138, %v1502
        %v1580 = vmul.f32 %v1145, %v1502
        %v1581 = vmul.f32 %v1152, %v1502
        %v1582 = vmul.f32 %v1159, %v1502
        %v1583 = vmul.f32 %v1166, %v1502
        %v1584 = vmul.f32 %v1173, %v1502
        %v1585 = vmul.f32 %v1180, %v1502
        %v1586 = vmul.f32 %v1187, %v1502
        %v1587 = vmul.f32 %v1194, %v1502
        %v1588 = vmul.f32 %v1201, %v1502
        %v1589 = vmul.f32 %v1208, %v1502
        %v1590 = vmul.f32 %v1215, %v1502
        %v1591 = vmul.f32 %v1222, %v1502
        %v1592 = vmul.f32 %v1229, %v1502
        %v1593 = vmul.f32 %v1236, %v1502
        %v1594 = vmul.f32 %v1243, %v1502
        %v1595 = vmul.f32 %v1250, %v1502
        %v1596 = vmul.f32 %v1257, %v1502
        %v1597 = vmul.f32 %v1264, %v1502
        %v1598 = vmul.f32 %v1271, %v1502
        %v1599 = vmul.f32 %v1278, %v1502
        %v1600 = vmul.f32 %v1285, %v1502
        %v1601 = vmul.f32 %v1292, %v1502
        %v1602 = vmul.f32 %v1299, %v1502
        %v1603 = vmul.f32 %v1306, %v1502
        %v1604 = vmul.f32 %v1313, %v1502
        %v1605 = vmul.f32 %v1320, %v1502
        %v1606 = vmul.f32 %v1327, %v1502
        %v1607 = vmul.f32 %v1334, %v1502
        %v1608 = vmul.f32 %v1341, %v1502
        %v1609 = vmul.f32 %v1348, %v1502
        %v1610 = vmul.f32 %v1355, %v1502
        %v1611 = vmul.f32 %v1362, %v1502
        %v1612 = vmul.f32 %v1369, %v1502
        %v1613 = vmul.f32 %v1376, %v1502
        %v1614 = vmul.f32 %v1383, %v1502
        %v1615 = vmul.f32 %v1390, %v1502
        %v1616 = vmul.f32 %v1397, %v1502
        %v1617 = vmul.f32 %v1404, %v1502
        %v1618 = vmul.f32 %v1411, %v1502
        %v1619 = vmul.f32 %v1418, %v1502
        %v1620 = vmul.f32 %v1425, %v1502
        %v1621 = vmul.f32 %v1432, %v1502
        %v1622 = vmul.f32 %v1439, %v1502
        %v1623 = vmul.f32 %v1446, %v1502
        %v1624 = vmul.f32 %v1453, %v1502
        %v1625 = vmul.f32 %v1460, %v1502
        %v1626 = vmul.f32 %v1467, %v1502
        %v1627 = vmul.f32 %v1474, %v1502
        %v1628 = vmul.f32 %v1481, %v1502
        %v1629 = vmul.f32 %v1488, %v1502
        %v1630 = vmul.f32 %v1495, %v1502
        %v1631 = vld [vmem:[%s457] sm:$0x3f]
        %v1632 = vld [vmem:[%s457 + $0x8] sm:$0x3f]
        %v1633 = vld [vmem:[%s457 + $0x10] sm:$0x3f]
        %v1634 = vld [vmem:[%s457 + $0x18] sm:$0x3f]
        %v1635 = vld [vmem:[%s457 + $0x20] sm:$0x3f]
        %v1636 = vld [vmem:[%s457 + $0x28] sm:$0x3f]
        %v1637 = vld [vmem:[%s457 + $0x30] sm:$0x3f]
        %v1638 = vld [vmem:[%s457 + $0x38] sm:$0x3f]
        %v1639 = vld [vmem:[%s457 + $0x40] sm:$0x3f]
        %v1640 = vld [vmem:[%s457 + $0x48] sm:$0x3f]
        %v1641 = vld [vmem:[%s457 + $0x50] sm:$0x3f]
        %v1642 = vld [vmem:[%s457 + $0x58] sm:$0x3f]
        %v1643 = vld [vmem:[%s457 + $0x60] sm:$0x3f]
        %v1644 = vld [vmem:[%s457 + $0x68] sm:$0x3f]
        %v1645 = vld [vmem:[%s457 + $0x70] sm:$0x3f]
        %v1646 = vld [vmem:[%s457 + $0x78] sm:$0x3f]
        %v1647 = vld [vmem:[%s457 + $0x80] sm:$0x3f]
        %v1648 = vld [vmem:[%s457 + $0x88] sm:$0x3f]
        %v1649 = vld [vmem:[%s457 + $0x90] sm:$0x3f]
        %v1650 = vld [vmem:[%s457 + $0x98] sm:$0x3f]
        %v1651 = vld [vmem:[%s457 + $0xa0] sm:$0x3f]
        %v1652 = vld [vmem:[%s457 + $0xa8] sm:$0x3f]
        %v1653 = vld [vmem:[%s457 + $0xb0] sm:$0x3f]
        %v1654 = vld [vmem:[%s457 + $0xb8] sm:$0x3f]
        %v1655 = vld [vmem:[%s457 + $0xc0] sm:$0x3f]
        %v1656 = vld [vmem:[%s457 + $0xc8] sm:$0x3f]
        %v1657 = vld [vmem:[%s457 + $0xd0] sm:$0x3f]
        %v1658 = vld [vmem:[%s457 + $0xd8] sm:$0x3f]
        %v1659 = vld [vmem:[%s457 + $0xe0] sm:$0x3f]
        %v1660 = vld [vmem:[%s457 + $0xe8] sm:$0x3f]
        %v1661 = vld [vmem:[%s457 + $0xf0] sm:$0x3f]
        %v1662 = vld [vmem:[%s457 + $0xf8] sm:$0x3f]
        %v1663 = vld [vmem:[%s457 + $0x100] sm:$0x3f]
        %v1664 = vld [vmem:[%s457 + $0x108] sm:$0x3f]
        %v1665 = vld [vmem:[%s457 + $0x110] sm:$0x3f]
        %v1666 = vld [vmem:[%s457 + $0x118] sm:$0x3f]
        %v1667 = vld [vmem:[%s457 + $0x120] sm:$0x3f]
        %v1668 = vld [vmem:[%s457 + $0x128] sm:$0x3f]
        %v1669 = vld [vmem:[%s457 + $0x130] sm:$0x3f]
        %v1670 = vld [vmem:[%s457 + $0x138] sm:$0x3f]
        %v1671 = vld [vmem:[%s457 + $0x140] sm:$0x3f]
        %v1672 = vld [vmem:[%s457 + $0x148] sm:$0x3f]
        %v1673 = vld [vmem:[%s457 + $0x150] sm:$0x3f]
        %v1674 = vld [vmem:[%s457 + $0x158] sm:$0x3f]
        %v1675 = vld [vmem:[%s457 + $0x160] sm:$0x3f]
        %v1676 = vld [vmem:[%s457 + $0x168] sm:$0x3f]
        %v1677 = vld [vmem:[%s457 + $0x170] sm:$0x3f]
        %v1678 = vld [vmem:[%s457 + $0x178] sm:$0x3f]
        %v1679 = vld [vmem:[%s457 + $0x180] sm:$0x3f]
        %v1680 = vld [vmem:[%s457 + $0x188] sm:$0x3f]
        %v1681 = vld [vmem:[%s457 + $0x190] sm:$0x3f]
        %v1682 = vld [vmem:[%s457 + $0x198] sm:$0x3f]
        %v1683 = vld [vmem:[%s457 + $0x1a0] sm:$0x3f]
        %v1684 = vld [vmem:[%s457 + $0x1a8] sm:$0x3f]
        %v1685 = vld [vmem:[%s457 + $0x1b0] sm:$0x3f]
        %v1686 = vld [vmem:[%s457 + $0x1b8] sm:$0x3f]
        %v1687 = vld [vmem:[%s457 + $0x1c0] sm:$0x3f]
        %v1688 = vld [vmem:[%s457 + $0x1c8] sm:$0x3f]
        %v1689 = vld [vmem:[%s457 + $0x1d0] sm:$0x3f]
        %v1690 = vld [vmem:[%s457 + $0x1d8] sm:$0x3f]
        %v1691 = vld [vmem:[%s457 + $0x1e0] sm:$0x3f]
        %v1692 = vld [vmem:[%s457 + $0x1e8] sm:$0x3f]
        %v1693 = vld [vmem:[%s457 + $0x1f0] sm:$0x3f]
        %v1694 = vld [vmem:[%s457 + $0x1f8] sm:$0x3f]
        %v1695 = vld [vmem:[%s457 + $0x200] sm:$0x3f]
        %v1696 = vld [vmem:[%s457 + $0x208] sm:$0x3f]
        %v1697 = vld [vmem:[%s457 + $0x210] sm:$0x3f]
        %v1698 = vld [vmem:[%s457 + $0x218] sm:$0x3f]
        %v1699 = vld [vmem:[%s457 + $0x220] sm:$0x3f]
        %v1700 = vld [vmem:[%s457 + $0x228] sm:$0x3f]
        %v1701 = vld [vmem:[%s457 + $0x230] sm:$0x3f]
        %v1702 = vld [vmem:[%s457 + $0x238] sm:$0x3f]
        %v1703 = vld [vmem:[%s457 + $0x240] sm:$0x3f]
        %v1704 = vld [vmem:[%s457 + $0x248] sm:$0x3f]
        %v1705 = vld [vmem:[%s457 + $0x250] sm:$0x3f]
        %v1706 = vld [vmem:[%s457 + $0x258] sm:$0x3f]
        %v1707 = vld [vmem:[%s457 + $0x260] sm:$0x3f]
        %v1708 = vld [vmem:[%s457 + $0x268] sm:$0x3f]
        %v1709 = vld [vmem:[%s457 + $0x270] sm:$0x3f]
        %v1710 = vld [vmem:[%s457 + $0x278] sm:$0x3f]
        %v1711 = vld [vmem:[%s457 + $0x280] sm:$0x3f]
        %v1712 = vld [vmem:[%s457 + $0x288] sm:$0x3f]
        %v1713 = vld [vmem:[%s457 + $0x290] sm:$0x3f]
        %v1714 = vld [vmem:[%s457 + $0x298] sm:$0x3f]
        %v1715 = vld [vmem:[%s457 + $0x2a0] sm:$0x3f]
        %v1716 = vld [vmem:[%s457 + $0x2a8] sm:$0x3f]
        %v1717 = vld [vmem:[%s457 + $0x2b0] sm:$0x3f]
        %v1718 = vld [vmem:[%s457 + $0x2b8] sm:$0x3f]
        %v1719 = vld [vmem:[%s457 + $0x2c0] sm:$0x3f]
        %v1720 = vld [vmem:[%s457 + $0x2c8] sm:$0x3f]
        %v1721 = vld [vmem:[%s457 + $0x2d0] sm:$0x3f]
        %v1722 = vld [vmem:[%s457 + $0x2d8] sm:$0x3f]
        %v1723 = vld [vmem:[%s457 + $0x2e0] sm:$0x3f]
        %v1724 = vld [vmem:[%s457 + $0x2e8] sm:$0x3f]
        %v1725 = vld [vmem:[%s457 + $0x2f0] sm:$0x3f]
        %v1726 = vld [vmem:[%s457 + $0x2f8] sm:$0x3f]
        %v1727 = vld [vmem:[%s457 + $0x300] sm:$0x3f]
        %v1728 = vld [vmem:[%s457 + $0x308] sm:$0x3f]
        %v1729 = vld [vmem:[%s457 + $0x310] sm:$0x3f]
        %v1730 = vld [vmem:[%s457 + $0x318] sm:$0x3f]
        %v1731 = vld [vmem:[%s457 + $0x320] sm:$0x3f]
        %v1732 = vld [vmem:[%s457 + $0x328] sm:$0x3f]
        %v1733 = vld [vmem:[%s457 + $0x330] sm:$0x3f]
        %v1734 = vld [vmem:[%s457 + $0x338] sm:$0x3f]
        %v1735 = vld [vmem:[%s457 + $0x340] sm:$0x3f]
        %v1736 = vld [vmem:[%s457 + $0x348] sm:$0x3f]
        %v1737 = vld [vmem:[%s457 + $0x350] sm:$0x3f]
        %v1738 = vld [vmem:[%s457 + $0x358] sm:$0x3f]
        %v1739 = vld [vmem:[%s457 + $0x360] sm:$0x3f]
        %v1740 = vld [vmem:[%s457 + $0x368] sm:$0x3f]
        %v1741 = vld [vmem:[%s457 + $0x370] sm:$0x3f]
        %v1742 = vld [vmem:[%s457 + $0x378] sm:$0x3f]
        %v1743 = vld [vmem:[%s457 + $0x380] sm:$0x3f]
        %v1744 = vld [vmem:[%s457 + $0x388] sm:$0x3f]
        %v1745 = vld [vmem:[%s457 + $0x390] sm:$0x3f]
        %v1746 = vld [vmem:[%s457 + $0x398] sm:$0x3f]
        %v1747 = vld [vmem:[%s457 + $0x3a0] sm:$0x3f]
        %v1748 = vld [vmem:[%s457 + $0x3a8] sm:$0x3f]
        %v1749 = vld [vmem:[%s457 + $0x3b0] sm:$0x3f]
        %v1750 = vld [vmem:[%s457 + $0x3b8] sm:$0x3f]
        %v1751 = vld [vmem:[%s457 + $0x3c0] sm:$0x3f]
        %v1752 = vld [vmem:[%s457 + $0x3c8] sm:$0x3f]
        %v1753 = vld [vmem:[%s457 + $0x3d0] sm:$0x3f]
        %v1754 = vld [vmem:[%s457 + $0x3d8] sm:$0x3f]
        %v1755 = vld [vmem:[%s457 + $0x3e0] sm:$0x3f]
        %v1756 = vld [vmem:[%s457 + $0x3e8] sm:$0x3f]
        %v1757 = vld [vmem:[%s457 + $0x3f0] sm:$0x3f]
        %v1758 = vld [vmem:[%s457 + $0x3f8] sm:$0x3f]
        %vm1759 = vcmask 1045504
        %v1760 = vsel %vm1759, %v1631, 0.0
        %v1761 = vrot.slane %v1760, 4
        %v1762 = vadd.f32 %v1760, %v1761
        %v1763 = vrot.slane %v1762, 2
        %v1764 = vadd.f32 %v1762, %v1763
        %v1765 = vrot.slane %v1764, 1
        %v1766 = vadd.f32 %v1764, %v1765
        %v1767 = vsel %vm1759, %v1632, 0.0
        %v1768 = vrot.slane %v1767, 4
        %v1769 = vadd.f32 %v1767, %v1768
        %v1770 = vrot.slane %v1769, 2
        %v1771 = vadd.f32 %v1769, %v1770
        %v1772 = vrot.slane %v1771, 1
        %v1773 = vadd.f32 %v1771, %v1772
        %v1774 = vsel %vm1759, %v1633, 0.0
        %v1775 = vrot.slane %v1774, 4
        %v1776 = vadd.f32 %v1774, %v1775
        %v1777 = vrot.slane %v1776, 2
        %v1778 = vadd.f32 %v1776, %v1777
        %v1779 = vrot.slane %v1778, 1
        %v1780 = vadd.f32 %v1778, %v1779
        %v1781 = vsel %vm1759, %v1634, 0.0
        %v1782 = vrot.slane %v1781, 4
        %v1783 = vadd.f32 %v1781, %v1782
        %v1784 = vrot.slane %v1783, 2
        %v1785 = vadd.f32 %v1783, %v1784
        %v1786 = vrot.slane %v1785, 1
        %v1787 = vadd.f32 %v1785, %v1786
        %v1788 = vsel %vm1759, %v1635, 0.0
        %v1789 = vrot.slane %v1788, 4
        %v1790 = vadd.f32 %v1788, %v1789
        %v1791 = vrot.slane %v1790, 2
        %v1792 = vadd.f32 %v1790, %v1791
        %v1793 = vrot.slane %v1792, 1
        %v1794 = vadd.f32 %v1792, %v1793
        %v1795 = vsel %vm1759, %v1636, 0.0
        %v1796 = vrot.slane %v1795, 4
        %v1797 = vadd.f32 %v1795, %v1796
        %v1798 = vrot.slane %v1797, 2
        %v1799 = vadd.f32 %v1797, %v1798
        %v1800 = vrot.slane %v1799, 1
        %v1801 = vadd.f32 %v1799, %v1800
        %v1802 = vsel %vm1759, %v1637, 0.0
        %v1803 = vrot.slane %v1802, 4
        %v1804 = vadd.f32 %v1802, %v1803
        %v1805 = vrot.slane %v1804, 2
        %v1806 = vadd.f32 %v1804, %v1805
        %v1807 = vrot.slane %v1806, 1
        %v1808 = vadd.f32 %v1806, %v1807
        %v1809 = vsel %vm1759, %v1638, 0.0
        %v1810 = vrot.slane %v1809, 4
        %v1811 = vadd.f32 %v1809, %v1810
        %v1812 = vrot.slane %v1811, 2
        %v1813 = vadd.f32 %v1811, %v1812
        %v1814 = vrot.slane %v1813, 1
        %v1815 = vadd.f32 %v1813, %v1814
        %v1816 = vsel %vm1759, %v1639, 0.0
        %v1817 = vrot.slane %v1816, 4
        %v1818 = vadd.f32 %v1816, %v1817
        %v1819 = vrot.slane %v1818, 2
        %v1820 = vadd.f32 %v1818, %v1819
        %v1821 = vrot.slane %v1820, 1
        %v1822 = vadd.f32 %v1820, %v1821
        %v1823 = vsel %vm1759, %v1640, 0.0
        %v1824 = vrot.slane %v1823, 4
        %v1825 = vadd.f32 %v1823, %v1824
        %v1826 = vrot.slane %v1825, 2
        %v1827 = vadd.f32 %v1825, %v1826
        %v1828 = vrot.slane %v1827, 1
        %v1829 = vadd.f32 %v1827, %v1828
        %v1830 = vsel %vm1759, %v1641, 0.0
        %v1831 = vrot.slane %v1830, 4
        %v1832 = vadd.f32 %v1830, %v1831
        %v1833 = vrot.slane %v1832, 2
        %v1834 = vadd.f32 %v1832, %v1833
        %v1835 = vrot.slane %v1834, 1
        %v1836 = vadd.f32 %v1834, %v1835
        %v1837 = vsel %vm1759, %v1642, 0.0
        %v1838 = vrot.slane %v1837, 4
        %v1839 = vadd.f32 %v1837, %v1838
        %v1840 = vrot.slane %v1839, 2
        %v1841 = vadd.f32 %v1839, %v1840
        %v1842 = vrot.slane %v1841, 1
        %v1843 = vadd.f32 %v1841, %v1842
        %v1844 = vsel %vm1759, %v1643, 0.0
        %v1845 = vrot.slane %v1844, 4
        %v1846 = vadd.f32 %v1844, %v1845
        %v1847 = vrot.slane %v1846, 2
        %v1848 = vadd.f32 %v1846, %v1847
        %v1849 = vrot.slane %v1848, 1
        %v1850 = vadd.f32 %v1848, %v1849
        %v1851 = vsel %vm1759, %v1644, 0.0
        %v1852 = vrot.slane %v1851, 4
        %v1853 = vadd.f32 %v1851, %v1852
        %v1854 = vrot.slane %v1853, 2
        %v1855 = vadd.f32 %v1853, %v1854
        %v1856 = vrot.slane %v1855, 1
        %v1857 = vadd.f32 %v1855, %v1856
        %v1858 = vsel %vm1759, %v1645, 0.0
        %v1859 = vrot.slane %v1858, 4
        %v1860 = vadd.f32 %v1858, %v1859
        %v1861 = vrot.slane %v1860, 2
        %v1862 = vadd.f32 %v1860, %v1861
        %v1863 = vrot.slane %v1862, 1
        %v1864 = vadd.f32 %v1862, %v1863
        %v1865 = vsel %vm1759, %v1646, 0.0
        %v1866 = vrot.slane %v1865, 4
        %v1867 = vadd.f32 %v1865, %v1866
        %v1868 = vrot.slane %v1867, 2
        %v1869 = vadd.f32 %v1867, %v1868
        %v1870 = vrot.slane %v1869, 1
        %v1871 = vadd.f32 %v1869, %v1870
        %v1872 = vsel %vm1759, %v1647, 0.0
        %v1873 = vrot.slane %v1872, 4
        %v1874 = vadd.f32 %v1872, %v1873
        %v1875 = vrot.slane %v1874, 2
        %v1876 = vadd.f32 %v1874, %v1875
        %v1877 = vrot.slane %v1876, 1
        %v1878 = vadd.f32 %v1876, %v1877
        %v1879 = vsel %vm1759, %v1648, 0.0
        %v1880 = vrot.slane %v1879, 4
        %v1881 = vadd.f32 %v1879, %v1880
        %v1882 = vrot.slane %v1881, 2
        %v1883 = vadd.f32 %v1881, %v1882
        %v1884 = vrot.slane %v1883, 1
        %v1885 = vadd.f32 %v1883, %v1884
        %v1886 = vsel %vm1759, %v1649, 0.0
        %v1887 = vrot.slane %v1886, 4
        %v1888 = vadd.f32 %v1886, %v1887
        %v1889 = vrot.slane %v1888, 2
        %v1890 = vadd.f32 %v1888, %v1889
        %v1891 = vrot.slane %v1890, 1
        %v1892 = vadd.f32 %v1890, %v1891
        %v1893 = vsel %vm1759, %v1650, 0.0
        %v1894 = vrot.slane %v1893, 4
        %v1895 = vadd.f32 %v1893, %v1894
        %v1896 = vrot.slane %v1895, 2
        %v1897 = vadd.f32 %v1895, %v1896
        %v1898 = vrot.slane %v1897, 1
        %v1899 = vadd.f32 %v1897, %v1898
        %v1900 = vsel %vm1759, %v1651, 0.0
        %v1901 = vrot.slane %v1900, 4
        %v1902 = vadd.f32 %v1900, %v1901
        %v1903 = vrot.slane %v1902, 2
        %v1904 = vadd.f32 %v1902, %v1903
        %v1905 = vrot.slane %v1904, 1
        %v1906 = vadd.f32 %v1904, %v1905
        %v1907 = vsel %vm1759, %v1652, 0.0
        %v1908 = vrot.slane %v1907, 4
        %v1909 = vadd.f32 %v1907, %v1908
        %v1910 = vrot.slane %v1909, 2
        %v1911 = vadd.f32 %v1909, %v1910
        %v1912 = vrot.slane %v1911, 1
        %v1913 = vadd.f32 %v1911, %v1912
        %v1914 = vsel %vm1759, %v1653, 0.0
        %v1915 = vrot.slane %v1914, 4
        %v1916 = vadd.f32 %v1914, %v1915
        %v1917 = vrot.slane %v1916, 2
        %v1918 = vadd.f32 %v1916, %v1917
        %v1919 = vrot.slane %v1918, 1
        %v1920 = vadd.f32 %v1918, %v1919
        %v1921 = vsel %vm1759, %v1654, 0.0
        %v1922 = vrot.slane %v1921, 4
        %v1923 = vadd.f32 %v1921, %v1922
        %v1924 = vrot.slane %v1923, 2
        %v1925 = vadd.f32 %v1923, %v1924
        %v1926 = vrot.slane %v1925, 1
        %v1927 = vadd.f32 %v1925, %v1926
        %v1928 = vsel %vm1759, %v1655, 0.0
        %v1929 = vrot.slane %v1928, 4
        %v1930 = vadd.f32 %v1928, %v1929
        %v1931 = vrot.slane %v1930, 2
        %v1932 = vadd.f32 %v1930, %v1931
        %v1933 = vrot.slane %v1932, 1
        %v1934 = vadd.f32 %v1932, %v1933
        %v1935 = vsel %vm1759, %v1656, 0.0
        %v1936 = vrot.slane %v1935, 4
        %v1937 = vadd.f32 %v1935, %v1936
        %v1938 = vrot.slane %v1937, 2
        %v1939 = vadd.f32 %v1937, %v1938
        %v1940 = vrot.slane %v1939, 1
        %v1941 = vadd.f32 %v1939, %v1940
        %v1942 = vsel %vm1759, %v1657, 0.0
        %v1943 = vrot.slane %v1942, 4
        %v1944 = vadd.f32 %v1942, %v1943
        %v1945 = vrot.slane %v1944, 2
        %v1946 = vadd.f32 %v1944, %v1945
        %v1947 = vrot.slane %v1946, 1
        %v1948 = vadd.f32 %v1946, %v1947
        %v1949 = vsel %vm1759, %v1658, 0.0
        %v1950 = vrot.slane %v1949, 4
        %v1951 = vadd.f32 %v1949, %v1950
        %v1952 = vrot.slane %v1951, 2
        %v1953 = vadd.f32 %v1951, %v1952
        %v1954 = vrot.slane %v1953, 1
        %v1955 = vadd.f32 %v1953, %v1954
        %v1956 = vsel %vm1759, %v1659, 0.0
        %v1957 = vrot.slane %v1956, 4
        %v1958 = vadd.f32 %v1956, %v1957
        %v1959 = vrot.slane %v1958, 2
        %v1960 = vadd.f32 %v1958, %v1959
        %v1961 = vrot.slane %v1960, 1
        %v1962 = vadd.f32 %v1960, %v1961
        %v1963 = vsel %vm1759, %v1660, 0.0
        %v1964 = vrot.slane %v1963, 4
        %v1965 = vadd.f32 %v1963, %v1964
        %v1966 = vrot.slane %v1965, 2
        %v1967 = vadd.f32 %v1965, %v1966
        %v1968 = vrot.slane %v1967, 1
        %v1969 = vadd.f32 %v1967, %v1968
        %v1970 = vsel %vm1759, %v1661, 0.0
        %v1971 = vrot.slane %v1970, 4
        %v1972 = vadd.f32 %v1970, %v1971
        %v1973 = vrot.slane %v1972, 2
        %v1974 = vadd.f32 %v1972, %v1973
        %v1975 = vrot.slane %v1974, 1
        %v1976 = vadd.f32 %v1974, %v1975
        %v1977 = vsel %vm1759, %v1662, 0.0
        %v1978 = vrot.slane %v1977, 4
        %v1979 = vadd.f32 %v1977, %v1978
        %v1980 = vrot.slane %v1979, 2
        %v1981 = vadd.f32 %v1979, %v1980
        %v1982 = vrot.slane %v1981, 1
        %v1983 = vadd.f32 %v1981, %v1982
        %v1984 = vsel %vm1759, %v1663, 0.0
        %v1985 = vrot.slane %v1984, 4
        %v1986 = vadd.f32 %v1984, %v1985
        %v1987 = vrot.slane %v1986, 2
        %v1988 = vadd.f32 %v1986, %v1987
        %v1989 = vrot.slane %v1988, 1
        %v1990 = vadd.f32 %v1988, %v1989
        %v1991 = vsel %vm1759, %v1664, 0.0
        %v1992 = vrot.slane %v1991, 4
        %v1993 = vadd.f32 %v1991, %v1992
        %v1994 = vrot.slane %v1993, 2
        %v1995 = vadd.f32 %v1993, %v1994
        %v1996 = vrot.slane %v1995, 1
        %v1997 = vadd.f32 %v1995, %v1996
        %v1998 = vsel %vm1759, %v1665, 0.0
        %v1999 = vrot.slane %v1998, 4
        %v2000 = vadd.f32 %v1998, %v1999
        %v2001 = vrot.slane %v2000, 2
        %v2002 = vadd.f32 %v2000, %v2001
        %v2003 = vrot.slane %v2002, 1
        %v2004 = vadd.f32 %v2002, %v2003
        %v2005 = vsel %vm1759, %v1666, 0.0
        %v2006 = vrot.slane %v2005, 4
        %v2007 = vadd.f32 %v2005, %v2006
        %v2008 = vrot.slane %v2007, 2
        %v2009 = vadd.f32 %v2007, %v2008
        %v2010 = vrot.slane %v2009, 1
        %v2011 = vadd.f32 %v2009, %v2010
        %v2012 = vsel %vm1759, %v1667, 0.0
        %v2013 = vrot.slane %v2012, 4
        %v2014 = vadd.f32 %v2012, %v2013
        %v2015 = vrot.slane %v2014, 2
        %v2016 = vadd.f32 %v2014, %v2015
        %v2017 = vrot.slane %v2016, 1
        %v2018 = vadd.f32 %v2016, %v2017
        %v2019 = vsel %vm1759, %v1668, 0.0
        %v2020 = vrot.slane %v2019, 4
        %v2021 = vadd.f32 %v2019, %v2020
        %v2022 = vrot.slane %v2021, 2
        %v2023 = vadd.f32 %v2021, %v2022
        %v2024 = vrot.slane %v2023, 1
        %v2025 = vadd.f32 %v2023, %v2024
        %v2026 = vsel %vm1759, %v1669, 0.0
        %v2027 = vrot.slane %v2026, 4
        %v2028 = vadd.f32 %v2026, %v2027
        %v2029 = vrot.slane %v2028, 2
        %v2030 = vadd.f32 %v2028, %v2029
        %v2031 = vrot.slane %v2030, 1
        %v2032 = vadd.f32 %v2030, %v2031
        %v2033 = vsel %vm1759, %v1670, 0.0
        %v2034 = vrot.slane %v2033, 4
        %v2035 = vadd.f32 %v2033, %v2034
        %v2036 = vrot.slane %v2035, 2
        %v2037 = vadd.f32 %v2035, %v2036
        %v2038 = vrot.slane %v2037, 1
        %v2039 = vadd.f32 %v2037, %v2038
        %v2040 = vsel %vm1759, %v1671, 0.0
        %v2041 = vrot.slane %v2040, 4
        %v2042 = vadd.f32 %v2040, %v2041
        %v2043 = vrot.slane %v2042, 2
        %v2044 = vadd.f32 %v2042, %v2043
        %v2045 = vrot.slane %v2044, 1
        %v2046 = vadd.f32 %v2044, %v2045
        %v2047 = vsel %vm1759, %v1672, 0.0
        %v2048 = vrot.slane %v2047, 4
        %v2049 = vadd.f32 %v2047, %v2048
        %v2050 = vrot.slane %v2049, 2
        %v2051 = vadd.f32 %v2049, %v2050
        %v2052 = vrot.slane %v2051, 1
        %v2053 = vadd.f32 %v2051, %v2052
        %v2054 = vsel %vm1759, %v1673, 0.0
        %v2055 = vrot.slane %v2054, 4
        %v2056 = vadd.f32 %v2054, %v2055
        %v2057 = vrot.slane %v2056, 2
        %v2058 = vadd.f32 %v2056, %v2057
        %v2059 = vrot.slane %v2058, 1
        %v2060 = vadd.f32 %v2058, %v2059
        %v2061 = vsel %vm1759, %v1674, 0.0
        %v2062 = vrot.slane %v2061, 4
        %v2063 = vadd.f32 %v2061, %v2062
        %v2064 = vrot.slane %v2063, 2
        %v2065 = vadd.f32 %v2063, %v2064
        %v2066 = vrot.slane %v2065, 1
        %v2067 = vadd.f32 %v2065, %v2066
        %v2068 = vsel %vm1759, %v1675, 0.0
        %v2069 = vrot.slane %v2068, 4
        %v2070 = vadd.f32 %v2068, %v2069
        %v2071 = vrot.slane %v2070, 2
        %v2072 = vadd.f32 %v2070, %v2071
        %v2073 = vrot.slane %v2072, 1
        %v2074 = vadd.f32 %v2072, %v2073
        %v2075 = vsel %vm1759, %v1676, 0.0
        %v2076 = vrot.slane %v2075, 4
        %v2077 = vadd.f32 %v2075, %v2076
        %v2078 = vrot.slane %v2077, 2
        %v2079 = vadd.f32 %v2077, %v2078
        %v2080 = vrot.slane %v2079, 1
        %v2081 = vadd.f32 %v2079, %v2080
        %v2082 = vsel %vm1759, %v1677, 0.0
        %v2083 = vrot.slane %v2082, 4
        %v2084 = vadd.f32 %v2082, %v2083
        %v2085 = vrot.slane %v2084, 2
        %v2086 = vadd.f32 %v2084, %v2085
        %v2087 = vrot.slane %v2086, 1
        %v2088 = vadd.f32 %v2086, %v2087
        %v2089 = vsel %vm1759, %v1678, 0.0
        %v2090 = vrot.slane %v2089, 4
        %v2091 = vadd.f32 %v2089, %v2090
        %v2092 = vrot.slane %v2091, 2
        %v2093 = vadd.f32 %v2091, %v2092
        %v2094 = vrot.slane %v2093, 1
        %v2095 = vadd.f32 %v2093, %v2094
        %v2096 = vsel %vm1759, %v1679, 0.0
        %v2097 = vrot.slane %v2096, 4
        %v2098 = vadd.f32 %v2096, %v2097
        %v2099 = vrot.slane %v2098, 2
        %v2100 = vadd.f32 %v2098, %v2099
        %v2101 = vrot.slane %v2100, 1
        %v2102 = vadd.f32 %v2100, %v2101
        %v2103 = vsel %vm1759, %v1680, 0.0
        %v2104 = vrot.slane %v2103, 4
        %v2105 = vadd.f32 %v2103, %v2104
        %v2106 = vrot.slane %v2105, 2
        %v2107 = vadd.f32 %v2105, %v2106
        %v2108 = vrot.slane %v2107, 1
        %v2109 = vadd.f32 %v2107, %v2108
        %v2110 = vsel %vm1759, %v1681, 0.0
        %v2111 = vrot.slane %v2110, 4
        %v2112 = vadd.f32 %v2110, %v2111
        %v2113 = vrot.slane %v2112, 2
        %v2114 = vadd.f32 %v2112, %v2113
        %v2115 = vrot.slane %v2114, 1
        %v2116 = vadd.f32 %v2114, %v2115
        %v2117 = vsel %vm1759, %v1682, 0.0
        %v2118 = vrot.slane %v2117, 4
        %v2119 = vadd.f32 %v2117, %v2118
        %v2120 = vrot.slane %v2119, 2
        %v2121 = vadd.f32 %v2119, %v2120
        %v2122 = vrot.slane %v2121, 1
        %v2123 = vadd.f32 %v2121, %v2122
        %v2124 = vsel %vm1759, %v1683, 0.0
        %v2125 = vrot.slane %v2124, 4
        %v2126 = vadd.f32 %v2124, %v2125
        %v2127 = vrot.slane %v2126, 2
        %v2128 = vadd.f32 %v2126, %v2127
        %v2129 = vrot.slane %v2128, 1
        %v2130 = vadd.f32 %v2128, %v2129
        %v2131 = vsel %vm1759, %v1684, 0.0
        %v2132 = vrot.slane %v2131, 4
        %v2133 = vadd.f32 %v2131, %v2132
        %v2134 = vrot.slane %v2133, 2
        %v2135 = vadd.f32 %v2133, %v2134
        %v2136 = vrot.slane %v2135, 1
        %v2137 = vadd.f32 %v2135, %v2136
        %v2138 = vsel %vm1759, %v1685, 0.0
        %v2139 = vrot.slane %v2138, 4
        %v2140 = vadd.f32 %v2138, %v2139
        %v2141 = vrot.slane %v2140, 2
        %v2142 = vadd.f32 %v2140, %v2141
        %v2143 = vrot.slane %v2142, 1
        %v2144 = vadd.f32 %v2142, %v2143
        %v2145 = vsel %vm1759, %v1686, 0.0
        %v2146 = vrot.slane %v2145, 4
        %v2147 = vadd.f32 %v2145, %v2146
        %v2148 = vrot.slane %v2147, 2
        %v2149 = vadd.f32 %v2147, %v2148
        %v2150 = vrot.slane %v2149, 1
        %v2151 = vadd.f32 %v2149, %v2150
        %v2152 = vsel %vm1759, %v1687, 0.0
        %v2153 = vrot.slane %v2152, 4
        %v2154 = vadd.f32 %v2152, %v2153
        %v2155 = vrot.slane %v2154, 2
        %v2156 = vadd.f32 %v2154, %v2155
        %v2157 = vrot.slane %v2156, 1
        %v2158 = vadd.f32 %v2156, %v2157
        %v2159 = vsel %vm1759, %v1688, 0.0
        %v2160 = vrot.slane %v2159, 4
        %v2161 = vadd.f32 %v2159, %v2160
        %v2162 = vrot.slane %v2161, 2
        %v2163 = vadd.f32 %v2161, %v2162
        %v2164 = vrot.slane %v2163, 1
        %v2165 = vadd.f32 %v2163, %v2164
        %v2166 = vsel %vm1759, %v1689, 0.0
        %v2167 = vrot.slane %v2166, 4
        %v2168 = vadd.f32 %v2166, %v2167
        %v2169 = vrot.slane %v2168, 2
        %v2170 = vadd.f32 %v2168, %v2169
        %v2171 = vrot.slane %v2170, 1
        %v2172 = vadd.f32 %v2170, %v2171
        %v2173 = vsel %vm1759, %v1690, 0.0
        %v2174 = vrot.slane %v2173, 4
        %v2175 = vadd.f32 %v2173, %v2174
        %v2176 = vrot.slane %v2175, 2
        %v2177 = vadd.f32 %v2175, %v2176
        %v2178 = vrot.slane %v2177, 1
        %v2179 = vadd.f32 %v2177, %v2178
        %v2180 = vsel %vm1759, %v1691, 0.0
        %v2181 = vrot.slane %v2180, 4
        %v2182 = vadd.f32 %v2180, %v2181
        %v2183 = vrot.slane %v2182, 2
        %v2184 = vadd.f32 %v2182, %v2183
        %v2185 = vrot.slane %v2184, 1
        %v2186 = vadd.f32 %v2184, %v2185
        %v2187 = vsel %vm1759, %v1692, 0.0
        %v2188 = vrot.slane %v2187, 4
        %v2189 = vadd.f32 %v2187, %v2188
        %v2190 = vrot.slane %v2189, 2
        %v2191 = vadd.f32 %v2189, %v2190
        %v2192 = vrot.slane %v2191, 1
        %v2193 = vadd.f32 %v2191, %v2192
        %v2194 = vsel %vm1759, %v1693, 0.0
        %v2195 = vrot.slane %v2194, 4
        %v2196 = vadd.f32 %v2194, %v2195
        %v2197 = vrot.slane %v2196, 2
        %v2198 = vadd.f32 %v2196, %v2197
        %v2199 = vrot.slane %v2198, 1
        %v2200 = vadd.f32 %v2198, %v2199
        %v2201 = vsel %vm1759, %v1694, 0.0
        %v2202 = vrot.slane %v2201, 4
        %v2203 = vadd.f32 %v2201, %v2202
        %v2204 = vrot.slane %v2203, 2
        %v2205 = vadd.f32 %v2203, %v2204
        %v2206 = vrot.slane %v2205, 1
        %v2207 = vadd.f32 %v2205, %v2206
        %v2208 = vsel %vm1759, %v1695, 0.0
        %v2209 = vrot.slane %v2208, 4
        %v2210 = vadd.f32 %v2208, %v2209
        %v2211 = vrot.slane %v2210, 2
        %v2212 = vadd.f32 %v2210, %v2211
        %v2213 = vrot.slane %v2212, 1
        %v2214 = vadd.f32 %v2212, %v2213
        %v2215 = vsel %vm1759, %v1696, 0.0
        %v2216 = vrot.slane %v2215, 4
        %v2217 = vadd.f32 %v2215, %v2216
        %v2218 = vrot.slane %v2217, 2
        %v2219 = vadd.f32 %v2217, %v2218
        %v2220 = vrot.slane %v2219, 1
        %v2221 = vadd.f32 %v2219, %v2220
        %v2222 = vsel %vm1759, %v1697, 0.0
        %v2223 = vrot.slane %v2222, 4
        %v2224 = vadd.f32 %v2222, %v2223
        %v2225 = vrot.slane %v2224, 2
        %v2226 = vadd.f32 %v2224, %v2225
        %v2227 = vrot.slane %v2226, 1
        %v2228 = vadd.f32 %v2226, %v2227
        %v2229 = vsel %vm1759, %v1698, 0.0
        %v2230 = vrot.slane %v2229, 4
        %v2231 = vadd.f32 %v2229, %v2230
        %v2232 = vrot.slane %v2231, 2
        %v2233 = vadd.f32 %v2231, %v2232
        %v2234 = vrot.slane %v2233, 1
        %v2235 = vadd.f32 %v2233, %v2234
        %v2236 = vsel %vm1759, %v1699, 0.0
        %v2237 = vrot.slane %v2236, 4
        %v2238 = vadd.f32 %v2236, %v2237
        %v2239 = vrot.slane %v2238, 2
        %v2240 = vadd.f32 %v2238, %v2239
        %v2241 = vrot.slane %v2240, 1
        %v2242 = vadd.f32 %v2240, %v2241
        %v2243 = vsel %vm1759, %v1700, 0.0
        %v2244 = vrot.slane %v2243, 4
        %v2245 = vadd.f32 %v2243, %v2244
        %v2246 = vrot.slane %v2245, 2
        %v2247 = vadd.f32 %v2245, %v2246
        %v2248 = vrot.slane %v2247, 1
        %v2249 = vadd.f32 %v2247, %v2248
        %v2250 = vsel %vm1759, %v1701, 0.0
        %v2251 = vrot.slane %v2250, 4
        %v2252 = vadd.f32 %v2250, %v2251
        %v2253 = vrot.slane %v2252, 2
        %v2254 = vadd.f32 %v2252, %v2253
        %v2255 = vrot.slane %v2254, 1
        %v2256 = vadd.f32 %v2254, %v2255
        %v2257 = vsel %vm1759, %v1702, 0.0
        %v2258 = vrot.slane %v2257, 4
        %v2259 = vadd.f32 %v2257, %v2258
        %v2260 = vrot.slane %v2259, 2
        %v2261 = vadd.f32 %v2259, %v2260
        %v2262 = vrot.slane %v2261, 1
        %v2263 = vadd.f32 %v2261, %v2262
        %v2264 = vsel %vm1759, %v1703, 0.0
        %v2265 = vrot.slane %v2264, 4
        %v2266 = vadd.f32 %v2264, %v2265
        %v2267 = vrot.slane %v2266, 2
        %v2268 = vadd.f32 %v2266, %v2267
        %v2269 = vrot.slane %v2268, 1
        %v2270 = vadd.f32 %v2268, %v2269
        %v2271 = vsel %vm1759, %v1704, 0.0
        %v2272 = vrot.slane %v2271, 4
        %v2273 = vadd.f32 %v2271, %v2272
        %v2274 = vrot.slane %v2273, 2
        %v2275 = vadd.f32 %v2273, %v2274
        %v2276 = vrot.slane %v2275, 1
        %v2277 = vadd.f32 %v2275, %v2276
        %v2278 = vsel %vm1759, %v1705, 0.0
        %v2279 = vrot.slane %v2278, 4
        %v2280 = vadd.f32 %v2278, %v2279
        %v2281 = vrot.slane %v2280, 2
        %v2282 = vadd.f32 %v2280, %v2281
        %v2283 = vrot.slane %v2282, 1
        %v2284 = vadd.f32 %v2282, %v2283
        %v2285 = vsel %vm1759, %v1706, 0.0
        %v2286 = vrot.slane %v2285, 4
        %v2287 = vadd.f32 %v2285, %v2286
        %v2288 = vrot.slane %v2287, 2
        %v2289 = vadd.f32 %v2287, %v2288
        %v2290 = vrot.slane %v2289, 1
        %v2291 = vadd.f32 %v2289, %v2290
        %v2292 = vsel %vm1759, %v1707, 0.0
        %v2293 = vrot.slane %v2292, 4
        %v2294 = vadd.f32 %v2292, %v2293
        %v2295 = vrot.slane %v2294, 2
        %v2296 = vadd.f32 %v2294, %v2295
        %v2297 = vrot.slane %v2296, 1
        %v2298 = vadd.f32 %v2296, %v2297
        %v2299 = vsel %vm1759, %v1708, 0.0
        %v2300 = vrot.slane %v2299, 4
        %v2301 = vadd.f32 %v2299, %v2300
        %v2302 = vrot.slane %v2301, 2
        %v2303 = vadd.f32 %v2301, %v2302
        %v2304 = vrot.slane %v2303, 1
        %v2305 = vadd.f32 %v2303, %v2304
        %v2306 = vsel %vm1759, %v1709, 0.0
        %v2307 = vrot.slane %v2306, 4
        %v2308 = vadd.f32 %v2306, %v2307
        %v2309 = vrot.slane %v2308, 2
        %v2310 = vadd.f32 %v2308, %v2309
        %v2311 = vrot.slane %v2310, 1
        %v2312 = vadd.f32 %v2310, %v2311
        %v2313 = vsel %vm1759, %v1710, 0.0
        %v2314 = vrot.slane %v2313, 4
        %v2315 = vadd.f32 %v2313, %v2314
        %v2316 = vrot.slane %v2315, 2
        %v2317 = vadd.f32 %v2315, %v2316
        %v2318 = vrot.slane %v2317, 1
        %v2319 = vadd.f32 %v2317, %v2318
        %v2320 = vsel %vm1759, %v1711, 0.0
        %v2321 = vrot.slane %v2320, 4
        %v2322 = vadd.f32 %v2320, %v2321
        %v2323 = vrot.slane %v2322, 2
        %v2324 = vadd.f32 %v2322, %v2323
        %v2325 = vrot.slane %v2324, 1
        %v2326 = vadd.f32 %v2324, %v2325
        %v2327 = vsel %vm1759, %v1712, 0.0
        %v2328 = vrot.slane %v2327, 4
        %v2329 = vadd.f32 %v2327, %v2328
        %v2330 = vrot.slane %v2329, 2
        %v2331 = vadd.f32 %v2329, %v2330
        %v2332 = vrot.slane %v2331, 1
        %v2333 = vadd.f32 %v2331, %v2332
        %v2334 = vsel %vm1759, %v1713, 0.0
        %v2335 = vrot.slane %v2334, 4
        %v2336 = vadd.f32 %v2334, %v2335
        %v2337 = vrot.slane %v2336, 2
        %v2338 = vadd.f32 %v2336, %v2337
        %v2339 = vrot.slane %v2338, 1
        %v2340 = vadd.f32 %v2338, %v2339
        %v2341 = vsel %vm1759, %v1714, 0.0
        %v2342 = vrot.slane %v2341, 4
        %v2343 = vadd.f32 %v2341, %v2342
        %v2344 = vrot.slane %v2343, 2
        %v2345 = vadd.f32 %v2343, %v2344
        %v2346 = vrot.slane %v2345, 1
        %v2347 = vadd.f32 %v2345, %v2346
        %v2348 = vsel %vm1759, %v1715, 0.0
        %v2349 = vrot.slane %v2348, 4
        %v2350 = vadd.f32 %v2348, %v2349
        %v2351 = vrot.slane %v2350, 2
        %v2352 = vadd.f32 %v2350, %v2351
        %v2353 = vrot.slane %v2352, 1
        %v2354 = vadd.f32 %v2352, %v2353
        %v2355 = vsel %vm1759, %v1716, 0.0
        %v2356 = vrot.slane %v2355, 4
        %v2357 = vadd.f32 %v2355, %v2356
        %v2358 = vrot.slane %v2357, 2
        %v2359 = vadd.f32 %v2357, %v2358
        %v2360 = vrot.slane %v2359, 1
        %v2361 = vadd.f32 %v2359, %v2360
        %v2362 = vsel %vm1759, %v1717, 0.0
        %v2363 = vrot.slane %v2362, 4
        %v2364 = vadd.f32 %v2362, %v2363
        %v2365 = vrot.slane %v2364, 2
        %v2366 = vadd.f32 %v2364, %v2365
        %v2367 = vrot.slane %v2366, 1
        %v2368 = vadd.f32 %v2366, %v2367
        %v2369 = vsel %vm1759, %v1718, 0.0
        %v2370 = vrot.slane %v2369, 4
        %v2371 = vadd.f32 %v2369, %v2370
        %v2372 = vrot.slane %v2371, 2
        %v2373 = vadd.f32 %v2371, %v2372
        %v2374 = vrot.slane %v2373, 1
        %v2375 = vadd.f32 %v2373, %v2374
        %v2376 = vsel %vm1759, %v1719, 0.0
        %v2377 = vrot.slane %v2376, 4
        %v2378 = vadd.f32 %v2376, %v2377
        %v2379 = vrot.slane %v2378, 2
        %v2380 = vadd.f32 %v2378, %v2379
        %v2381 = vrot.slane %v2380, 1
        %v2382 = vadd.f32 %v2380, %v2381
        %v2383 = vsel %vm1759, %v1720, 0.0
        %v2384 = vrot.slane %v2383, 4
        %v2385 = vadd.f32 %v2383, %v2384
        %v2386 = vrot.slane %v2385, 2
        %v2387 = vadd.f32 %v2385, %v2386
        %v2388 = vrot.slane %v2387, 1
        %v2389 = vadd.f32 %v2387, %v2388
        %v2390 = vsel %vm1759, %v1721, 0.0
        %v2391 = vrot.slane %v2390, 4
        %v2392 = vadd.f32 %v2390, %v2391
        %v2393 = vrot.slane %v2392, 2
        %v2394 = vadd.f32 %v2392, %v2393
        %v2395 = vrot.slane %v2394, 1
        %v2396 = vadd.f32 %v2394, %v2395
        %v2397 = vsel %vm1759, %v1722, 0.0
        %v2398 = vrot.slane %v2397, 4
        %v2399 = vadd.f32 %v2397, %v2398
        %v2400 = vrot.slane %v2399, 2
        %v2401 = vadd.f32 %v2399, %v2400
        %v2402 = vrot.slane %v2401, 1
        %v2403 = vadd.f32 %v2401, %v2402
        %v2404 = vsel %vm1759, %v1723, 0.0
        %v2405 = vrot.slane %v2404, 4
        %v2406 = vadd.f32 %v2404, %v2405
        %v2407 = vrot.slane %v2406, 2
        %v2408 = vadd.f32 %v2406, %v2407
        %v2409 = vrot.slane %v2408, 1
        %v2410 = vadd.f32 %v2408, %v2409
        %v2411 = vsel %vm1759, %v1724, 0.0
        %v2412 = vrot.slane %v2411, 4
        %v2413 = vadd.f32 %v2411, %v2412
        %v2414 = vrot.slane %v2413, 2
        %v2415 = vadd.f32 %v2413, %v2414
        %v2416 = vrot.slane %v2415, 1
        %v2417 = vadd.f32 %v2415, %v2416
        %v2418 = vsel %vm1759, %v1725, 0.0
        %v2419 = vrot.slane %v2418, 4
        %v2420 = vadd.f32 %v2418, %v2419
        %v2421 = vrot.slane %v2420, 2
        %v2422 = vadd.f32 %v2420, %v2421
        %v2423 = vrot.slane %v2422, 1
        %v2424 = vadd.f32 %v2422, %v2423
        %v2425 = vsel %vm1759, %v1726, 0.0
        %v2426 = vrot.slane %v2425, 4
        %v2427 = vadd.f32 %v2425, %v2426
        %v2428 = vrot.slane %v2427, 2
        %v2429 = vadd.f32 %v2427, %v2428
        %v2430 = vrot.slane %v2429, 1
        %v2431 = vadd.f32 %v2429, %v2430
        %v2432 = vsel %vm1759, %v1727, 0.0
        %v2433 = vrot.slane %v2432, 4
        %v2434 = vadd.f32 %v2432, %v2433
        %v2435 = vrot.slane %v2434, 2
        %v2436 = vadd.f32 %v2434, %v2435
        %v2437 = vrot.slane %v2436, 1
        %v2438 = vadd.f32 %v2436, %v2437
        %v2439 = vsel %vm1759, %v1728, 0.0
        %v2440 = vrot.slane %v2439, 4
        %v2441 = vadd.f32 %v2439, %v2440
        %v2442 = vrot.slane %v2441, 2
        %v2443 = vadd.f32 %v2441, %v2442
        %v2444 = vrot.slane %v2443, 1
        %v2445 = vadd.f32 %v2443, %v2444
        %v2446 = vsel %vm1759, %v1729, 0.0
        %v2447 = vrot.slane %v2446, 4
        %v2448 = vadd.f32 %v2446, %v2447
        %v2449 = vrot.slane %v2448, 2
        %v2450 = vadd.f32 %v2448, %v2449
        %v2451 = vrot.slane %v2450, 1
        %v2452 = vadd.f32 %v2450, %v2451
        %v2453 = vsel %vm1759, %v1730, 0.0
        %v2454 = vrot.slane %v2453, 4
        %v2455 = vadd.f32 %v2453, %v2454
        %v2456 = vrot.slane %v2455, 2
        %v2457 = vadd.f32 %v2455, %v2456
        %v2458 = vrot.slane %v2457, 1
        %v2459 = vadd.f32 %v2457, %v2458
        %v2460 = vsel %vm1759, %v1731, 0.0
        %v2461 = vrot.slane %v2460, 4
        %v2462 = vadd.f32 %v2460, %v2461
        %v2463 = vrot.slane %v2462, 2
        %v2464 = vadd.f32 %v2462, %v2463
        %v2465 = vrot.slane %v2464, 1
        %v2466 = vadd.f32 %v2464, %v2465
        %v2467 = vsel %vm1759, %v1732, 0.0
        %v2468 = vrot.slane %v2467, 4
        %v2469 = vadd.f32 %v2467, %v2468
        %v2470 = vrot.slane %v2469, 2
        %v2471 = vadd.f32 %v2469, %v2470
        %v2472 = vrot.slane %v2471, 1
        %v2473 = vadd.f32 %v2471, %v2472
        %v2474 = vsel %vm1759, %v1733, 0.0
        %v2475 = vrot.slane %v2474, 4
        %v2476 = vadd.f32 %v2474, %v2475
        %v2477 = vrot.slane %v2476, 2
        %v2478 = vadd.f32 %v2476, %v2477
        %v2479 = vrot.slane %v2478, 1
        %v2480 = vadd.f32 %v2478, %v2479
        %v2481 = vsel %vm1759, %v1734, 0.0
        %v2482 = vrot.slane %v2481, 4
        %v2483 = vadd.f32 %v2481, %v2482
        %v2484 = vrot.slane %v2483, 2
        %v2485 = vadd.f32 %v2483, %v2484
        %v2486 = vrot.slane %v2485, 1
        %v2487 = vadd.f32 %v2485, %v2486
        %v2488 = vsel %vm1759, %v1735, 0.0
        %v2489 = vrot.slane %v2488, 4
        %v2490 = vadd.f32 %v2488, %v2489
        %v2491 = vrot.slane %v2490, 2
        %v2492 = vadd.f32 %v2490, %v2491
        %v2493 = vrot.slane %v2492, 1
        %v2494 = vadd.f32 %v2492, %v2493
        %v2495 = vsel %vm1759, %v1736, 0.0
        %v2496 = vrot.slane %v2495, 4
        %v2497 = vadd.f32 %v2495, %v2496
        %v2498 = vrot.slane %v2497, 2
        %v2499 = vadd.f32 %v2497, %v2498
        %v2500 = vrot.slane %v2499, 1
        %v2501 = vadd.f32 %v2499, %v2500
        %v2502 = vsel %vm1759, %v1737, 0.0
        %v2503 = vrot.slane %v2502, 4
        %v2504 = vadd.f32 %v2502, %v2503
        %v2505 = vrot.slane %v2504, 2
        %v2506 = vadd.f32 %v2504, %v2505
        %v2507 = vrot.slane %v2506, 1
        %v2508 = vadd.f32 %v2506, %v2507
        %v2509 = vsel %vm1759, %v1738, 0.0
        %v2510 = vrot.slane %v2509, 4
        %v2511 = vadd.f32 %v2509, %v2510
        %v2512 = vrot.slane %v2511, 2
        %v2513 = vadd.f32 %v2511, %v2512
        %v2514 = vrot.slane %v2513, 1
        %v2515 = vadd.f32 %v2513, %v2514
        %v2516 = vsel %vm1759, %v1739, 0.0
        %v2517 = vrot.slane %v2516, 4
        %v2518 = vadd.f32 %v2516, %v2517
        %v2519 = vrot.slane %v2518, 2
        %v2520 = vadd.f32 %v2518, %v2519
        %v2521 = vrot.slane %v2520, 1
        %v2522 = vadd.f32 %v2520, %v2521
        %v2523 = vsel %vm1759, %v1740, 0.0
        %v2524 = vrot.slane %v2523, 4
        %v2525 = vadd.f32 %v2523, %v2524
        %v2526 = vrot.slane %v2525, 2
        %v2527 = vadd.f32 %v2525, %v2526
        %v2528 = vrot.slane %v2527, 1
        %v2529 = vadd.f32 %v2527, %v2528
        %v2530 = vsel %vm1759, %v1741, 0.0
        %v2531 = vrot.slane %v2530, 4
        %v2532 = vadd.f32 %v2530, %v2531
        %v2533 = vrot.slane %v2532, 2
        %v2534 = vadd.f32 %v2532, %v2533
        %v2535 = vrot.slane %v2534, 1
        %v2536 = vadd.f32 %v2534, %v2535
        %v2537 = vsel %vm1759, %v1742, 0.0
        %v2538 = vrot.slane %v2537, 4
        %v2539 = vadd.f32 %v2537, %v2538
        %v2540 = vrot.slane %v2539, 2
        %v2541 = vadd.f32 %v2539, %v2540
        %v2542 = vrot.slane %v2541, 1
        %v2543 = vadd.f32 %v2541, %v2542
        %v2544 = vsel %vm1759, %v1743, 0.0
        %v2545 = vrot.slane %v2544, 4
        %v2546 = vadd.f32 %v2544, %v2545
        %v2547 = vrot.slane %v2546, 2
        %v2548 = vadd.f32 %v2546, %v2547
        %v2549 = vrot.slane %v2548, 1
        %v2550 = vadd.f32 %v2548, %v2549
        %v2551 = vsel %vm1759, %v1744, 0.0
        %v2552 = vrot.slane %v2551, 4
        %v2553 = vadd.f32 %v2551, %v2552
        %v2554 = vrot.slane %v2553, 2
        %v2555 = vadd.f32 %v2553, %v2554
        %v2556 = vrot.slane %v2555, 1
        %v2557 = vadd.f32 %v2555, %v2556
        %v2558 = vsel %vm1759, %v1745, 0.0
        %v2559 = vrot.slane %v2558, 4
        %v2560 = vadd.f32 %v2558, %v2559
        %v2561 = vrot.slane %v2560, 2
        %v2562 = vadd.f32 %v2560, %v2561
        %v2563 = vrot.slane %v2562, 1
        %v2564 = vadd.f32 %v2562, %v2563
        %v2565 = vsel %vm1759, %v1746, 0.0
        %v2566 = vrot.slane %v2565, 4
        %v2567 = vadd.f32 %v2565, %v2566
        %v2568 = vrot.slane %v2567, 2
        %v2569 = vadd.f32 %v2567, %v2568
        %v2570 = vrot.slane %v2569, 1
        %v2571 = vadd.f32 %v2569, %v2570
        %v2572 = vsel %vm1759, %v1747, 0.0
        %v2573 = vrot.slane %v2572, 4
        %v2574 = vadd.f32 %v2572, %v2573
        %v2575 = vrot.slane %v2574, 2
        %v2576 = vadd.f32 %v2574, %v2575
        %v2577 = vrot.slane %v2576, 1
        %v2578 = vadd.f32 %v2576, %v2577
        %v2579 = vsel %vm1759, %v1748, 0.0
        %v2580 = vrot.slane %v2579, 4
        %v2581 = vadd.f32 %v2579, %v2580
        %v2582 = vrot.slane %v2581, 2
        %v2583 = vadd.f32 %v2581, %v2582
        %v2584 = vrot.slane %v2583, 1
        %v2585 = vadd.f32 %v2583, %v2584
        %v2586 = vsel %vm1759, %v1749, 0.0
        %v2587 = vrot.slane %v2586, 4
        %v2588 = vadd.f32 %v2586, %v2587
        %v2589 = vrot.slane %v2588, 2
        %v2590 = vadd.f32 %v2588, %v2589
        %v2591 = vrot.slane %v2590, 1
        %v2592 = vadd.f32 %v2590, %v2591
        %v2593 = vsel %vm1759, %v1750, 0.0
        %v2594 = vrot.slane %v2593, 4
        %v2595 = vadd.f32 %v2593, %v2594
        %v2596 = vrot.slane %v2595, 2
        %v2597 = vadd.f32 %v2595, %v2596
        %v2598 = vrot.slane %v2597, 1
        %v2599 = vadd.f32 %v2597, %v2598
        %v2600 = vsel %vm1759, %v1751, 0.0
        %v2601 = vrot.slane %v2600, 4
        %v2602 = vadd.f32 %v2600, %v2601
        %v2603 = vrot.slane %v2602, 2
        %v2604 = vadd.f32 %v2602, %v2603
        %v2605 = vrot.slane %v2604, 1
        %v2606 = vadd.f32 %v2604, %v2605
        %v2607 = vsel %vm1759, %v1752, 0.0
        %v2608 = vrot.slane %v2607, 4
        %v2609 = vadd.f32 %v2607, %v2608
        %v2610 = vrot.slane %v2609, 2
        %v2611 = vadd.f32 %v2609, %v2610
        %v2612 = vrot.slane %v2611, 1
        %v2613 = vadd.f32 %v2611, %v2612
        %v2614 = vsel %vm1759, %v1753, 0.0
        %v2615 = vrot.slane %v2614, 4
        %v2616 = vadd.f32 %v2614, %v2615
        %v2617 = vrot.slane %v2616, 2
        %v2618 = vadd.f32 %v2616, %v2617
        %v2619 = vrot.slane %v2618, 1
        %v2620 = vadd.f32 %v2618, %v2619
        %v2621 = vsel %vm1759, %v1754, 0.0
        %v2622 = vrot.slane %v2621, 4
        %v2623 = vadd.f32 %v2621, %v2622
        %v2624 = vrot.slane %v2623, 2
        %v2625 = vadd.f32 %v2623, %v2624
        %v2626 = vrot.slane %v2625, 1
        %v2627 = vadd.f32 %v2625, %v2626
        %v2628 = vsel %vm1759, %v1755, 0.0
        %v2629 = vrot.slane %v2628, 4
        %v2630 = vadd.f32 %v2628, %v2629
        %v2631 = vrot.slane %v2630, 2
        %v2632 = vadd.f32 %v2630, %v2631
        %v2633 = vrot.slane %v2632, 1
        %v2634 = vadd.f32 %v2632, %v2633
        %v2635 = vsel %vm1759, %v1756, 0.0
        %v2636 = vrot.slane %v2635, 4
        %v2637 = vadd.f32 %v2635, %v2636
        %v2638 = vrot.slane %v2637, 2
        %v2639 = vadd.f32 %v2637, %v2638
        %v2640 = vrot.slane %v2639, 1
        %v2641 = vadd.f32 %v2639, %v2640
        %v2642 = vsel %vm1759, %v1757, 0.0
        %v2643 = vrot.slane %v2642, 4
        %v2644 = vadd.f32 %v2642, %v2643
        %v2645 = vrot.slane %v2644, 2
        %v2646 = vadd.f32 %v2644, %v2645
        %v2647 = vrot.slane %v2646, 1
        %v2648 = vadd.f32 %v2646, %v2647
        %v2649 = vsel %vm1759, %v1758, 0.0
        %v2650 = vrot.slane %v2649, 4
        %v2651 = vadd.f32 %v2649, %v2650
        %v2652 = vrot.slane %v2651, 2
        %v2653 = vadd.f32 %v2651, %v2652
        %v2654 = vrot.slane %v2653, 1
        %v2655 = vadd.f32 %v2653, %v2654
        %v2656 = vrcp.pop 6.0
        %v2657 = vmul.f32 6.0, %v2656
        %v2658 = vsub.f32 1.0, %v2657
        %v2659 = vmul.f32 %v2656, %v2658
        %v2660 = vadd.f32 %v2656, %v2659
        %vm2661 = vweird.f32 %v2656
        %v2662 = vsel %vm2661, %v2656, %v2660
        %v2663 = vmul.f32 %v1766, %v2662
        %v2664 = vmul.f32 %v1773, %v2662
        %v2665 = vmul.f32 %v1780, %v2662
        %v2666 = vmul.f32 %v1787, %v2662
        %v2667 = vmul.f32 %v1794, %v2662
        %v2668 = vmul.f32 %v1801, %v2662
        %v2669 = vmul.f32 %v1808, %v2662
        %v2670 = vmul.f32 %v1815, %v2662
        %v2671 = vmul.f32 %v1822, %v2662
        %v2672 = vmul.f32 %v1829, %v2662
        %v2673 = vmul.f32 %v1836, %v2662
        %v2674 = vmul.f32 %v1843, %v2662
        %v2675 = vmul.f32 %v1850, %v2662
        %v2676 = vmul.f32 %v1857, %v2662
        %v2677 = vmul.f32 %v1864, %v2662
        %v2678 = vmul.f32 %v1871, %v2662
        %v2679 = vmul.f32 %v1878, %v2662
        %v2680 = vmul.f32 %v1885, %v2662
        %v2681 = vmul.f32 %v1892, %v2662
        %v2682 = vmul.f32 %v1899, %v2662
        %v2683 = vmul.f32 %v1906, %v2662
        %v2684 = vmul.f32 %v1913, %v2662
        %v2685 = vmul.f32 %v1920, %v2662
        %v2686 = vmul.f32 %v1927, %v2662
        %v2687 = vmul.f32 %v1934, %v2662
        %v2688 = vmul.f32 %v1941, %v2662
        %v2689 = vmul.f32 %v1948, %v2662
        %v2690 = vmul.f32 %v1955, %v2662
        %v2691 = vmul.f32 %v1962, %v2662
        %v2692 = vmul.f32 %v1969, %v2662
        %v2693 = vmul.f32 %v1976, %v2662
        %v2694 = vmul.f32 %v1983, %v2662
        %v2695 = vmul.f32 %v1990, %v2662
        %v2696 = vmul.f32 %v1997, %v2662
        %v2697 = vmul.f32 %v2004, %v2662
        %v2698 = vmul.f32 %v2011, %v2662
        %v2699 = vmul.f32 %v2018, %v2662
        %v2700 = vmul.f32 %v2025, %v2662
        %v2701 = vmul.f32 %v2032, %v2662
        %v2702 = vmul.f32 %v2039, %v2662
        %v2703 = vmul.f32 %v2046, %v2662
        %v2704 = vmul.f32 %v2053, %v2662
        %v2705 = vmul.f32 %v2060, %v2662
        %v2706 = vmul.f32 %v2067, %v2662
        %v2707 = vmul.f32 %v2074, %v2662
        %v2708 = vmul.f32 %v2081, %v2662
        %v2709 = vmul.f32 %v2088, %v2662
        %v2710 = vmul.f32 %v2095, %v2662
        %v2711 = vmul.f32 %v2102, %v2662
        %v2712 = vmul.f32 %v2109, %v2662
        %v2713 = vmul.f32 %v2116, %v2662
        %v2714 = vmul.f32 %v2123, %v2662
        %v2715 = vmul.f32 %v2130, %v2662
        %v2716 = vmul.f32 %v2137, %v2662
        %v2717 = vmul.f32 %v2144, %v2662
        %v2718 = vmul.f32 %v2151, %v2662
        %v2719 = vmul.f32 %v2158, %v2662
        %v2720 = vmul.f32 %v2165, %v2662
        %v2721 = vmul.f32 %v2172, %v2662
        %v2722 = vmul.f32 %v2179, %v2662
        %v2723 = vmul.f32 %v2186, %v2662
        %v2724 = vmul.f32 %v2193, %v2662
        %v2725 = vmul.f32 %v2200, %v2662
        %v2726 = vmul.f32 %v2207, %v2662
        %v2727 = vmul.f32 %v2214, %v2662
        %v2728 = vmul.f32 %v2221, %v2662
        %v2729 = vmul.f32 %v2228, %v2662
        %v2730 = vmul.f32 %v2235, %v2662
        %v2731 = vmul.f32 %v2242, %v2662
        %v2732 = vmul.f32 %v2249, %v2662
        %v2733 = vmul.f32 %v2256, %v2662
        %v2734 = vmul.f32 %v2263, %v2662
        %v2735 = vmul.f32 %v2270, %v2662
        %v2736 = vmul.f32 %v2277, %v2662
        %v2737 = vmul.f32 %v2284, %v2662
        %v2738 = vmul.f32 %v2291, %v2662
        %v2739 = vmul.f32 %v2298, %v2662
        %v2740 = vmul.f32 %v2305, %v2662
        %v2741 = vmul.f32 %v2312, %v2662
        %v2742 = vmul.f32 %v2319, %v2662
        %v2743 = vmul.f32 %v2326, %v2662
        %v2744 = vmul.f32 %v2333, %v2662
        %v2745 = vmul.f32 %v2340, %v2662
        %v2746 = vmul.f32 %v2347, %v2662
        %v2747 = vmul.f32 %v2354, %v2662
        %v2748 = vmul.f32 %v2361, %v2662
        %v2749 = vmul.f32 %v2368, %v2662
        %v2750 = vmul.f32 %v2375, %v2662
        %v2751 = vmul.f32 %v2382, %v2662
        %v2752 = vmul.f32 %v2389, %v2662
        %v2753 = vmul.f32 %v2396, %v2662
        %v2754 = vmul.f32 %v2403, %v2662
        %v2755 = vmul.f32 %v2410, %v2662
        %v2756 = vmul.f32 %v2417, %v2662
        %v2757 = vmul.f32 %v2424, %v2662
        %v2758 = vmul.f32 %v2431, %v2662
        %v2759 = vmul.f32 %v2438, %v2662
        %v2760 = vmul.f32 %v2445, %v2662
        %v2761 = vmul.f32 %v2452, %v2662
        %v2762 = vmul.f32 %v2459, %v2662
        %v2763 = vmul.f32 %v2466, %v2662
        %v2764 = vmul.f32 %v2473, %v2662
        %v2765 = vmul.f32 %v2480, %v2662
        %v2766 = vmul.f32 %v2487, %v2662
        %v2767 = vmul.f32 %v2494, %v2662
        %v2768 = vmul.f32 %v2501, %v2662
        %v2769 = vmul.f32 %v2508, %v2662
        %v2770 = vmul.f32 %v2515, %v2662
        %v2771 = vmul.f32 %v2522, %v2662
        %v2772 = vmul.f32 %v2529, %v2662
        %v2773 = vmul.f32 %v2536, %v2662
        %v2774 = vmul.f32 %v2543, %v2662
        %v2775 = vmul.f32 %v2550, %v2662
        %v2776 = vmul.f32 %v2557, %v2662
        %v2777 = vmul.f32 %v2564, %v2662
        %v2778 = vmul.f32 %v2571, %v2662
        %v2779 = vmul.f32 %v2578, %v2662
        %v2780 = vmul.f32 %v2585, %v2662
        %v2781 = vmul.f32 %v2592, %v2662
        %v2782 = vmul.f32 %v2599, %v2662
        %v2783 = vmul.f32 %v2606, %v2662
        %v2784 = vmul.f32 %v2613, %v2662
        %v2785 = vmul.f32 %v2620, %v2662
        %v2786 = vmul.f32 %v2627, %v2662
        %v2787 = vmul.f32 %v2634, %v2662
        %v2788 = vmul.f32 %v2641, %v2662
        %v2789 = vmul.f32 %v2648, %v2662
        %v2790 = vmul.f32 %v2655, %v2662
        %v2791 = vld [vmem:[%s463] sm:$0x3]
        %v2792 = vld [vmem:[%s463 + $0x2] sm:$0x3]
        %v2793 = vld [vmem:[%s463 + $0x4] sm:$0x3]
        %v2794 = vld [vmem:[%s463 + $0x6] sm:$0x3]
        %v2795 = vld [vmem:[%s463 + $0x8] sm:$0x3]
        %v2796 = vld [vmem:[%s463 + $0xa] sm:$0x3]
        %v2797 = vld [vmem:[%s463 + $0xc] sm:$0x3]
        %v2798 = vld [vmem:[%s463 + $0xe] sm:$0x3]
        %v2799 = vld [vmem:[%s463 + $0x10] sm:$0x3]
        %v2800 = vld [vmem:[%s463 + $0x12] sm:$0x3]
        %v2801 = vld [vmem:[%s463 + $0x14] sm:$0x3]
        %v2802 = vld [vmem:[%s463 + $0x16] sm:$0x3]
        %v2803 = vld [vmem:[%s463 + $0x18] sm:$0x3]
        %v2804 = vld [vmem:[%s463 + $0x1a] sm:$0x3]
        %v2805 = vld [vmem:[%s463 + $0x1c] sm:$0x3]
        %v2806 = vld [vmem:[%s463 + $0x1e] sm:$0x3]
        %v2807 = vld [vmem:[%s463 + $0x20] sm:$0x3]
        %v2808 = vld [vmem:[%s463 + $0x22] sm:$0x3]
        %v2809 = vld [vmem:[%s463 + $0x24] sm:$0x3]
        %v2810 = vld [vmem:[%s463 + $0x26] sm:$0x3]
        %v2811 = vld [vmem:[%s463 + $0x28] sm:$0x3]
        %v2812 = vld [vmem:[%s463 + $0x2a] sm:$0x3]
        %v2813 = vld [vmem:[%s463 + $0x2c] sm:$0x3]
        %v2814 = vld [vmem:[%s463 + $0x2e] sm:$0x3]
        %v2815 = vld [vmem:[%s463 + $0x30] sm:$0x3]
        %v2816 = vld [vmem:[%s463 + $0x32] sm:$0x3]
        %v2817 = vld [vmem:[%s463 + $0x34] sm:$0x3]
        %v2818 = vld [vmem:[%s463 + $0x36] sm:$0x3]
        %v2819 = vld [vmem:[%s463 + $0x38] sm:$0x3]
        %v2820 = vld [vmem:[%s463 + $0x3a] sm:$0x3]
        %v2821 = vld [vmem:[%s463 + $0x3c] sm:$0x3]
        %v2822 = vld [vmem:[%s463 + $0x3e] sm:$0x3]
        %v2823 = vld [vmem:[%s463 + $0x40] sm:$0x3]
        %v2824 = vld [vmem:[%s463 + $0x42] sm:$0x3]
        %v2825 = vld [vmem:[%s463 + $0x44] sm:$0x3]
        %v2826 = vld [vmem:[%s463 + $0x46] sm:$0x3]
        %v2827 = vld [vmem:[%s463 + $0x48] sm:$0x3]
        %v2828 = vld [vmem:[%s463 + $0x4a] sm:$0x3]
        %v2829 = vld [vmem:[%s463 + $0x4c] sm:$0x3]
        %v2830 = vld [vmem:[%s463 + $0x4e] sm:$0x3]
        %v2831 = vld [vmem:[%s463 + $0x50] sm:$0x3]
        %v2832 = vld [vmem:[%s463 + $0x52] sm:$0x3]
        %v2833 = vld [vmem:[%s463 + $0x54] sm:$0x3]
        %v2834 = vld [vmem:[%s463 + $0x56] sm:$0x3]
        %v2835 = vld [vmem:[%s463 + $0x58] sm:$0x3]
        %v2836 = vld [vmem:[%s463 + $0x5a] sm:$0x3]
        %v2837 = vld [vmem:[%s463 + $0x5c] sm:$0x3]
        %v2838 = vld [vmem:[%s463 + $0x5e] sm:$0x3]
        %v2839 = vld [vmem:[%s463 + $0x60] sm:$0x3]
        %v2840 = vld [vmem:[%s463 + $0x62] sm:$0x3]
        %v2841 = vld [vmem:[%s463 + $0x64] sm:$0x3]
        %v2842 = vld [vmem:[%s463 + $0x66] sm:$0x3]
        %v2843 = vld [vmem:[%s463 + $0x68] sm:$0x3]
        %v2844 = vld [vmem:[%s463 + $0x6a] sm:$0x3]
        %v2845 = vld [vmem:[%s463 + $0x6c] sm:$0x3]
        %v2846 = vld [vmem:[%s463 + $0x6e] sm:$0x3]
        %v2847 = vld [vmem:[%s463 + $0x70] sm:$0x3]
        %v2848 = vld [vmem:[%s463 + $0x72] sm:$0x3]
        %v2849 = vld [vmem:[%s463 + $0x74] sm:$0x3]
        %v2850 = vld [vmem:[%s463 + $0x76] sm:$0x3]
        %v2851 = vld [vmem:[%s463 + $0x78] sm:$0x3]
        %v2852 = vld [vmem:[%s463 + $0x7a] sm:$0x3]
        %v2853 = vld [vmem:[%s463 + $0x7c] sm:$0x3]
        %v2854 = vld [vmem:[%s463 + $0x7e] sm:$0x3]
        %v2855 = vld [vmem:[%s463 + $0x80] sm:$0x3]
        %v2856 = vld [vmem:[%s463 + $0x82] sm:$0x3]
        %v2857 = vld [vmem:[%s463 + $0x84] sm:$0x3]
        %v2858 = vld [vmem:[%s463 + $0x86] sm:$0x3]
        %v2859 = vld [vmem:[%s463 + $0x88] sm:$0x3]
        %v2860 = vld [vmem:[%s463 + $0x8a] sm:$0x3]
        %v2861 = vld [vmem:[%s463 + $0x8c] sm:$0x3]
        %v2862 = vld [vmem:[%s463 + $0x8e] sm:$0x3]
        %v2863 = vld [vmem:[%s463 + $0x90] sm:$0x3]
        %v2864 = vld [vmem:[%s463 + $0x92] sm:$0x3]
        %v2865 = vld [vmem:[%s463 + $0x94] sm:$0x3]
        %v2866 = vld [vmem:[%s463 + $0x96] sm:$0x3]
        %v2867 = vld [vmem:[%s463 + $0x98] sm:$0x3]
        %v2868 = vld [vmem:[%s463 + $0x9a] sm:$0x3]
        %v2869 = vld [vmem:[%s463 + $0x9c] sm:$0x3]
        %v2870 = vld [vmem:[%s463 + $0x9e] sm:$0x3]
        %v2871 = vld [vmem:[%s463 + $0xa0] sm:$0x3]
        %v2872 = vld [vmem:[%s463 + $0xa2] sm:$0x3]
        %v2873 = vld [vmem:[%s463 + $0xa4] sm:$0x3]
        %v2874 = vld [vmem:[%s463 + $0xa6] sm:$0x3]
        %v2875 = vld [vmem:[%s463 + $0xa8] sm:$0x3]
        %v2876 = vld [vmem:[%s463 + $0xaa] sm:$0x3]
        %v2877 = vld [vmem:[%s463 + $0xac] sm:$0x3]
        %v2878 = vld [vmem:[%s463 + $0xae] sm:$0x3]
        %v2879 = vld [vmem:[%s463 + $0xb0] sm:$0x3]
        %v2880 = vld [vmem:[%s463 + $0xb2] sm:$0x3]
        %v2881 = vld [vmem:[%s463 + $0xb4] sm:$0x3]
        %v2882 = vld [vmem:[%s463 + $0xb6] sm:$0x3]
        %v2883 = vld [vmem:[%s463 + $0xb8] sm:$0x3]
        %v2884 = vld [vmem:[%s463 + $0xba] sm:$0x3]
        %v2885 = vld [vmem:[%s463 + $0xbc] sm:$0x3]
        %v2886 = vld [vmem:[%s463 + $0xbe] sm:$0x3]
        %v2887 = vld [vmem:[%s463 + $0xc0] sm:$0x3]
        %v2888 = vld [vmem:[%s463 + $0xc2] sm:$0x3]
        %v2889 = vld [vmem:[%s463 + $0xc4] sm:$0x3]
        %v2890 = vld [vmem:[%s463 + $0xc6] sm:$0x3]
        %v2891 = vld [vmem:[%s463 + $0xc8] sm:$0x3]
        %v2892 = vld [vmem:[%s463 + $0xca] sm:$0x3]
        %v2893 = vld [vmem:[%s463 + $0xcc] sm:$0x3]
        %v2894 = vld [vmem:[%s463 + $0xce] sm:$0x3]
        %v2895 = vld [vmem:[%s463 + $0xd0] sm:$0x3]
        %v2896 = vld [vmem:[%s463 + $0xd2] sm:$0x3]
        %v2897 = vld [vmem:[%s463 + $0xd4] sm:$0x3]
        %v2898 = vld [vmem:[%s463 + $0xd6] sm:$0x3]
        %v2899 = vld [vmem:[%s463 + $0xd8] sm:$0x3]
        %v2900 = vld [vmem:[%s463 + $0xda] sm:$0x3]
        %v2901 = vld [vmem:[%s463 + $0xdc] sm:$0x3]
        %v2902 = vld [vmem:[%s463 + $0xde] sm:$0x3]
        %v2903 = vld [vmem:[%s463 + $0xe0] sm:$0x3]
        %v2904 = vld [vmem:[%s463 + $0xe2] sm:$0x3]
        %v2905 = vld [vmem:[%s463 + $0xe4] sm:$0x3]
        %v2906 = vld [vmem:[%s463 + $0xe6] sm:$0x3]
        %v2907 = vld [vmem:[%s463 + $0xe8] sm:$0x3]
        %v2908 = vld [vmem:[%s463 + $0xea] sm:$0x3]
        %v2909 = vld [vmem:[%s463 + $0xec] sm:$0x3]
        %v2910 = vld [vmem:[%s463 + $0xee] sm:$0x3]
        %v2911 = vld [vmem:[%s463 + $0xf0] sm:$0x3]
        %v2912 = vld [vmem:[%s463 + $0xf2] sm:$0x3]
        %v2913 = vld [vmem:[%s463 + $0xf4] sm:$0x3]
        %v2914 = vld [vmem:[%s463 + $0xf6] sm:$0x3]
        %v2915 = vld [vmem:[%s463 + $0xf8] sm:$0x3]
        %v2916 = vld [vmem:[%s463 + $0xfa] sm:$0x3]
        %v2917 = vld [vmem:[%s463 + $0xfc] sm:$0x3]
        %v2918 = vld [vmem:[%s463 + $0xfe] sm:$0x3]
        %vm2919 = vcmask 1041408
        %v2920 = vsel %vm2919, %v2791, 0.0
        %v2921 = vrot.slane %v2920, 4
        %v2922 = vadd.f32 %v2920, %v2921
        %v2923 = vrot.slane %v2922, 2
        %v2924 = vadd.f32 %v2922, %v2923
        %v2925 = vrot.slane %v2924, 1
        %v2926 = vadd.f32 %v2924, %v2925
        %v2927 = vsel %vm2919, %v2792, 0.0
        %v2928 = vrot.slane %v2927, 4
        %v2929 = vadd.f32 %v2927, %v2928
        %v2930 = vrot.slane %v2929, 2
        %v2931 = vadd.f32 %v2929, %v2930
        %v2932 = vrot.slane %v2931, 1
        %v2933 = vadd.f32 %v2931, %v2932
        %v2934 = vsel %vm2919, %v2793, 0.0
        %v2935 = vrot.slane %v2934, 4
        %v2936 = vadd.f32 %v2934, %v2935
        %v2937 = vrot.slane %v2936, 2
        %v2938 = vadd.f32 %v2936, %v2937
        %v2939 = vrot.slane %v2938, 1
        %v2940 = vadd.f32 %v2938, %v2939
        %v2941 = vsel %vm2919, %v2794, 0.0
        %v2942 = vrot.slane %v2941, 4
        %v2943 = vadd.f32 %v2941, %v2942
        %v2944 = vrot.slane %v2943, 2
        %v2945 = vadd.f32 %v2943, %v2944
        %v2946 = vrot.slane %v2945, 1
        %v2947 = vadd.f32 %v2945, %v2946
        %v2948 = vsel %vm2919, %v2795, 0.0
        %v2949 = vrot.slane %v2948, 4
        %v2950 = vadd.f32 %v2948, %v2949
        %v2951 = vrot.slane %v2950, 2
        %v2952 = vadd.f32 %v2950, %v2951
        %v2953 = vrot.slane %v2952, 1
        %v2954 = vadd.f32 %v2952, %v2953
        %v2955 = vsel %vm2919, %v2796, 0.0
        %v2956 = vrot.slane %v2955, 4
        %v2957 = vadd.f32 %v2955, %v2956
        %v2958 = vrot.slane %v2957, 2
        %v2959 = vadd.f32 %v2957, %v2958
        %v2960 = vrot.slane %v2959, 1
        %v2961 = vadd.f32 %v2959, %v2960
        %v2962 = vsel %vm2919, %v2797, 0.0
        %v2963 = vrot.slane %v2962, 4
        %v2964 = vadd.f32 %v2962, %v2963
        %v2965 = vrot.slane %v2964, 2
        %v2966 = vadd.f32 %v2964, %v2965
        %v2967 = vrot.slane %v2966, 1
        %v2968 = vadd.f32 %v2966, %v2967
        %v2969 = vsel %vm2919, %v2798, 0.0
        %v2970 = vrot.slane %v2969, 4
        %v2971 = vadd.f32 %v2969, %v2970
        %v2972 = vrot.slane %v2971, 2
        %v2973 = vadd.f32 %v2971, %v2972
        %v2974 = vrot.slane %v2973, 1
        %v2975 = vadd.f32 %v2973, %v2974
        %v2976 = vsel %vm2919, %v2799, 0.0
        %v2977 = vrot.slane %v2976, 4
        %v2978 = vadd.f32 %v2976, %v2977
        %v2979 = vrot.slane %v2978, 2
        %v2980 = vadd.f32 %v2978, %v2979
        %v2981 = vrot.slane %v2980, 1
        %v2982 = vadd.f32 %v2980, %v2981
        %v2983 = vsel %vm2919, %v2800, 0.0
        %v2984 = vrot.slane %v2983, 4
        %v2985 = vadd.f32 %v2983, %v2984
        %v2986 = vrot.slane %v2985, 2
        %v2987 = vadd.f32 %v2985, %v2986
        %v2988 = vrot.slane %v2987, 1
        %v2989 = vadd.f32 %v2987, %v2988
        %v2990 = vsel %vm2919, %v2801, 0.0
        %v2991 = vrot.slane %v2990, 4
        %v2992 = vadd.f32 %v2990, %v2991
        %v2993 = vrot.slane %v2992, 2
        %v2994 = vadd.f32 %v2992, %v2993
        %v2995 = vrot.slane %v2994, 1
        %v2996 = vadd.f32 %v2994, %v2995
        %v2997 = vsel %vm2919, %v2802, 0.0
        %v2998 = vrot.slane %v2997, 4
        %v2999 = vadd.f32 %v2997, %v2998
        %v3000 = vrot.slane %v2999, 2
        %v3001 = vadd.f32 %v2999, %v3000
        %v3002 = vrot.slane %v3001, 1
        %v3003 = vadd.f32 %v3001, %v3002
        %v3004 = vsel %vm2919, %v2803, 0.0
        %v3005 = vrot.slane %v3004, 4
        %v3006 = vadd.f32 %v3004, %v3005
        %v3007 = vrot.slane %v3006, 2
        %v3008 = vadd.f32 %v3006, %v3007
        %v3009 = vrot.slane %v3008, 1
        %v3010 = vadd.f32 %v3008, %v3009
        %v3011 = vsel %vm2919, %v2804, 0.0
        %v3012 = vrot.slane %v3011, 4
        %v3013 = vadd.f32 %v3011, %v3012
        %v3014 = vrot.slane %v3013, 2
        %v3015 = vadd.f32 %v3013, %v3014
        %v3016 = vrot.slane %v3015, 1
        %v3017 = vadd.f32 %v3015, %v3016
        %v3018 = vsel %vm2919, %v2805, 0.0
        %v3019 = vrot.slane %v3018, 4
        %v3020 = vadd.f32 %v3018, %v3019
        %v3021 = vrot.slane %v3020, 2
        %v3022 = vadd.f32 %v3020, %v3021
        %v3023 = vrot.slane %v3022, 1
        %v3024 = vadd.f32 %v3022, %v3023
        %v3025 = vsel %vm2919, %v2806, 0.0
        %v3026 = vrot.slane %v3025, 4
        %v3027 = vadd.f32 %v3025, %v3026
        %v3028 = vrot.slane %v3027, 2
        %v3029 = vadd.f32 %v3027, %v3028
        %v3030 = vrot.slane %v3029, 1
        %v3031 = vadd.f32 %v3029, %v3030
        %v3032 = vsel %vm2919, %v2807, 0.0
        %v3033 = vrot.slane %v3032, 4
        %v3034 = vadd.f32 %v3032, %v3033
        %v3035 = vrot.slane %v3034, 2
        %v3036 = vadd.f32 %v3034, %v3035
        %v3037 = vrot.slane %v3036, 1
        %v3038 = vadd.f32 %v3036, %v3037
        %v3039 = vsel %vm2919, %v2808, 0.0
        %v3040 = vrot.slane %v3039, 4
        %v3041 = vadd.f32 %v3039, %v3040
        %v3042 = vrot.slane %v3041, 2
        %v3043 = vadd.f32 %v3041, %v3042
        %v3044 = vrot.slane %v3043, 1
        %v3045 = vadd.f32 %v3043, %v3044
        %v3046 = vsel %vm2919, %v2809, 0.0
        %v3047 = vrot.slane %v3046, 4
        %v3048 = vadd.f32 %v3046, %v3047
        %v3049 = vrot.slane %v3048, 2
        %v3050 = vadd.f32 %v3048, %v3049
        %v3051 = vrot.slane %v3050, 1
        %v3052 = vadd.f32 %v3050, %v3051
        %v3053 = vsel %vm2919, %v2810, 0.0
        %v3054 = vrot.slane %v3053, 4
        %v3055 = vadd.f32 %v3053, %v3054
        %v3056 = vrot.slane %v3055, 2
        %v3057 = vadd.f32 %v3055, %v3056
        %v3058 = vrot.slane %v3057, 1
        %v3059 = vadd.f32 %v3057, %v3058
        %v3060 = vsel %vm2919, %v2811, 0.0
        %v3061 = vrot.slane %v3060, 4
        %v3062 = vadd.f32 %v3060, %v3061
        %v3063 = vrot.slane %v3062, 2
        %v3064 = vadd.f32 %v3062, %v3063
        %v3065 = vrot.slane %v3064, 1
        %v3066 = vadd.f32 %v3064, %v3065
        %v3067 = vsel %vm2919, %v2812, 0.0
        %v3068 = vrot.slane %v3067, 4
        %v3069 = vadd.f32 %v3067, %v3068
        %v3070 = vrot.slane %v3069, 2
        %v3071 = vadd.f32 %v3069, %v3070
        %v3072 = vrot.slane %v3071, 1
        %v3073 = vadd.f32 %v3071, %v3072
        %v3074 = vsel %vm2919, %v2813, 0.0
        %v3075 = vrot.slane %v3074, 4
        %v3076 = vadd.f32 %v3074, %v3075
        %v3077 = vrot.slane %v3076, 2
        %v3078 = vadd.f32 %v3076, %v3077
        %v3079 = vrot.slane %v3078, 1
        %v3080 = vadd.f32 %v3078, %v3079
        %v3081 = vsel %vm2919, %v2814, 0.0
        %v3082 = vrot.slane %v3081, 4
        %v3083 = vadd.f32 %v3081, %v3082
        %v3084 = vrot.slane %v3083, 2
        %v3085 = vadd.f32 %v3083, %v3084
        %v3086 = vrot.slane %v3085, 1
        %v3087 = vadd.f32 %v3085, %v3086
        %v3088 = vsel %vm2919, %v2815, 0.0
        %v3089 = vrot.slane %v3088, 4
        %v3090 = vadd.f32 %v3088, %v3089
        %v3091 = vrot.slane %v3090, 2
        %v3092 = vadd.f32 %v3090, %v3091
        %v3093 = vrot.slane %v3092, 1
        %v3094 = vadd.f32 %v3092, %v3093
        %v3095 = vsel %vm2919, %v2816, 0.0
        %v3096 = vrot.slane %v3095, 4
        %v3097 = vadd.f32 %v3095, %v3096
        %v3098 = vrot.slane %v3097, 2
        %v3099 = vadd.f32 %v3097, %v3098
        %v3100 = vrot.slane %v3099, 1
        %v3101 = vadd.f32 %v3099, %v3100
        %v3102 = vsel %vm2919, %v2817, 0.0
        %v3103 = vrot.slane %v3102, 4
        %v3104 = vadd.f32 %v3102, %v3103
        %v3105 = vrot.slane %v3104, 2
        %v3106 = vadd.f32 %v3104, %v3105
        %v3107 = vrot.slane %v3106, 1
        %v3108 = vadd.f32 %v3106, %v3107
        %v3109 = vsel %vm2919, %v2818, 0.0
        %v3110 = vrot.slane %v3109, 4
        %v3111 = vadd.f32 %v3109, %v3110
        %v3112 = vrot.slane %v3111, 2
        %v3113 = vadd.f32 %v3111, %v3112
        %v3114 = vrot.slane %v3113, 1
        %v3115 = vadd.f32 %v3113, %v3114
        %v3116 = vsel %vm2919, %v2819, 0.0
        %v3117 = vrot.slane %v3116, 4
        %v3118 = vadd.f32 %v3116, %v3117
        %v3119 = vrot.slane %v3118, 2
        %v3120 = vadd.f32 %v3118, %v3119
        %v3121 = vrot.slane %v3120, 1
        %v3122 = vadd.f32 %v3120, %v3121
        %v3123 = vsel %vm2919, %v2820, 0.0
        %v3124 = vrot.slane %v3123, 4
        %v3125 = vadd.f32 %v3123, %v3124
        %v3126 = vrot.slane %v3125, 2
        %v3127 = vadd.f32 %v3125, %v3126
        %v3128 = vrot.slane %v3127, 1
        %v3129 = vadd.f32 %v3127, %v3128
        %v3130 = vsel %vm2919, %v2821, 0.0
        %v3131 = vrot.slane %v3130, 4
        %v3132 = vadd.f32 %v3130, %v3131
        %v3133 = vrot.slane %v3132, 2
        %v3134 = vadd.f32 %v3132, %v3133
        %v3135 = vrot.slane %v3134, 1
        %v3136 = vadd.f32 %v3134, %v3135
        %v3137 = vsel %vm2919, %v2822, 0.0
        %v3138 = vrot.slane %v3137, 4
        %v3139 = vadd.f32 %v3137, %v3138
        %v3140 = vrot.slane %v3139, 2
        %v3141 = vadd.f32 %v3139, %v3140
        %v3142 = vrot.slane %v3141, 1
        %v3143 = vadd.f32 %v3141, %v3142
        %v3144 = vsel %vm2919, %v2823, 0.0
        %v3145 = vrot.slane %v3144, 4
        %v3146 = vadd.f32 %v3144, %v3145
        %v3147 = vrot.slane %v3146, 2
        %v3148 = vadd.f32 %v3146, %v3147
        %v3149 = vrot.slane %v3148, 1
        %v3150 = vadd.f32 %v3148, %v3149
        %v3151 = vsel %vm2919, %v2824, 0.0
        %v3152 = vrot.slane %v3151, 4
        %v3153 = vadd.f32 %v3151, %v3152
        %v3154 = vrot.slane %v3153, 2
        %v3155 = vadd.f32 %v3153, %v3154
        %v3156 = vrot.slane %v3155, 1
        %v3157 = vadd.f32 %v3155, %v3156
        %v3158 = vsel %vm2919, %v2825, 0.0
        %v3159 = vrot.slane %v3158, 4
        %v3160 = vadd.f32 %v3158, %v3159
        %v3161 = vrot.slane %v3160, 2
        %v3162 = vadd.f32 %v3160, %v3161
        %v3163 = vrot.slane %v3162, 1
        %v3164 = vadd.f32 %v3162, %v3163
        %v3165 = vsel %vm2919, %v2826, 0.0
        %v3166 = vrot.slane %v3165, 4
        %v3167 = vadd.f32 %v3165, %v3166
        %v3168 = vrot.slane %v3167, 2
        %v3169 = vadd.f32 %v3167, %v3168
        %v3170 = vrot.slane %v3169, 1
        %v3171 = vadd.f32 %v3169, %v3170
        %v3172 = vsel %vm2919, %v2827, 0.0
        %v3173 = vrot.slane %v3172, 4
        %v3174 = vadd.f32 %v3172, %v3173
        %v3175 = vrot.slane %v3174, 2
        %v3176 = vadd.f32 %v3174, %v3175
        %v3177 = vrot.slane %v3176, 1
        %v3178 = vadd.f32 %v3176, %v3177
        %v3179 = vsel %vm2919, %v2828, 0.0
        %v3180 = vrot.slane %v3179, 4
        %v3181 = vadd.f32 %v3179, %v3180
        %v3182 = vrot.slane %v3181, 2
        %v3183 = vadd.f32 %v3181, %v3182
        %v3184 = vrot.slane %v3183, 1
        %v3185 = vadd.f32 %v3183, %v3184
        %v3186 = vsel %vm2919, %v2829, 0.0
        %v3187 = vrot.slane %v3186, 4
        %v3188 = vadd.f32 %v3186, %v3187
        %v3189 = vrot.slane %v3188, 2
        %v3190 = vadd.f32 %v3188, %v3189
        %v3191 = vrot.slane %v3190, 1
        %v3192 = vadd.f32 %v3190, %v3191
        %v3193 = vsel %vm2919, %v2830, 0.0
        %v3194 = vrot.slane %v3193, 4
        %v3195 = vadd.f32 %v3193, %v3194
        %v3196 = vrot.slane %v3195, 2
        %v3197 = vadd.f32 %v3195, %v3196
        %v3198 = vrot.slane %v3197, 1
        %v3199 = vadd.f32 %v3197, %v3198
        %v3200 = vsel %vm2919, %v2831, 0.0
        %v3201 = vrot.slane %v3200, 4
        %v3202 = vadd.f32 %v3200, %v3201
        %v3203 = vrot.slane %v3202, 2
        %v3204 = vadd.f32 %v3202, %v3203
        %v3205 = vrot.slane %v3204, 1
        %v3206 = vadd.f32 %v3204, %v3205
        %v3207 = vsel %vm2919, %v2832, 0.0
        %v3208 = vrot.slane %v3207, 4
        %v3209 = vadd.f32 %v3207, %v3208
        %v3210 = vrot.slane %v3209, 2
        %v3211 = vadd.f32 %v3209, %v3210
        %v3212 = vrot.slane %v3211, 1
        %v3213 = vadd.f32 %v3211, %v3212
        %v3214 = vsel %vm2919, %v2833, 0.0
        %v3215 = vrot.slane %v3214, 4
        %v3216 = vadd.f32 %v3214, %v3215
        %v3217 = vrot.slane %v3216, 2
        %v3218 = vadd.f32 %v3216, %v3217
        %v3219 = vrot.slane %v3218, 1
        %v3220 = vadd.f32 %v3218, %v3219
        %v3221 = vsel %vm2919, %v2834, 0.0
        %v3222 = vrot.slane %v3221, 4
        %v3223 = vadd.f32 %v3221, %v3222
        %v3224 = vrot.slane %v3223, 2
        %v3225 = vadd.f32 %v3223, %v3224
        %v3226 = vrot.slane %v3225, 1
        %v3227 = vadd.f32 %v3225, %v3226
        %v3228 = vsel %vm2919, %v2835, 0.0
        %v3229 = vrot.slane %v3228, 4
        %v3230 = vadd.f32 %v3228, %v3229
        %v3231 = vrot.slane %v3230, 2
        %v3232 = vadd.f32 %v3230, %v3231
        %v3233 = vrot.slane %v3232, 1
        %v3234 = vadd.f32 %v3232, %v3233
        %v3235 = vsel %vm2919, %v2836, 0.0
        %v3236 = vrot.slane %v3235, 4
        %v3237 = vadd.f32 %v3235, %v3236
        %v3238 = vrot.slane %v3237, 2
        %v3239 = vadd.f32 %v3237, %v3238
        %v3240 = vrot.slane %v3239, 1
        %v3241 = vadd.f32 %v3239, %v3240
        %v3242 = vsel %vm2919, %v2837, 0.0
        %v3243 = vrot.slane %v3242, 4
        %v3244 = vadd.f32 %v3242, %v3243
        %v3245 = vrot.slane %v3244, 2
        %v3246 = vadd.f32 %v3244, %v3245
        %v3247 = vrot.slane %v3246, 1
        %v3248 = vadd.f32 %v3246, %v3247
        %v3249 = vsel %vm2919, %v2838, 0.0
        %v3250 = vrot.slane %v3249, 4
        %v3251 = vadd.f32 %v3249, %v3250
        %v3252 = vrot.slane %v3251, 2
        %v3253 = vadd.f32 %v3251, %v3252
        %v3254 = vrot.slane %v3253, 1
        %v3255 = vadd.f32 %v3253, %v3254
        %v3256 = vsel %vm2919, %v2839, 0.0
        %v3257 = vrot.slane %v3256, 4
        %v3258 = vadd.f32 %v3256, %v3257
        %v3259 = vrot.slane %v3258, 2
        %v3260 = vadd.f32 %v3258, %v3259
        %v3261 = vrot.slane %v3260, 1
        %v3262 = vadd.f32 %v3260, %v3261
        %v3263 = vsel %vm2919, %v2840, 0.0
        %v3264 = vrot.slane %v3263, 4
        %v3265 = vadd.f32 %v3263, %v3264
        %v3266 = vrot.slane %v3265, 2
        %v3267 = vadd.f32 %v3265, %v3266
        %v3268 = vrot.slane %v3267, 1
        %v3269 = vadd.f32 %v3267, %v3268
        %v3270 = vsel %vm2919, %v2841, 0.0
        %v3271 = vrot.slane %v3270, 4
        %v3272 = vadd.f32 %v3270, %v3271
        %v3273 = vrot.slane %v3272, 2
        %v3274 = vadd.f32 %v3272, %v3273
        %v3275 = vrot.slane %v3274, 1
        %v3276 = vadd.f32 %v3274, %v3275
        %v3277 = vsel %vm2919, %v2842, 0.0
        %v3278 = vrot.slane %v3277, 4
        %v3279 = vadd.f32 %v3277, %v3278
        %v3280 = vrot.slane %v3279, 2
        %v3281 = vadd.f32 %v3279, %v3280
        %v3282 = vrot.slane %v3281, 1
        %v3283 = vadd.f32 %v3281, %v3282
        %v3284 = vsel %vm2919, %v2843, 0.0
        %v3285 = vrot.slane %v3284, 4
        %v3286 = vadd.f32 %v3284, %v3285
        %v3287 = vrot.slane %v3286, 2
        %v3288 = vadd.f32 %v3286, %v3287
        %v3289 = vrot.slane %v3288, 1
        %v3290 = vadd.f32 %v3288, %v3289
        %v3291 = vsel %vm2919, %v2844, 0.0
        %v3292 = vrot.slane %v3291, 4
        %v3293 = vadd.f32 %v3291, %v3292
        %v3294 = vrot.slane %v3293, 2
        %v3295 = vadd.f32 %v3293, %v3294
        %v3296 = vrot.slane %v3295, 1
        %v3297 = vadd.f32 %v3295, %v3296
        %v3298 = vsel %vm2919, %v2845, 0.0
        %v3299 = vrot.slane %v3298, 4
        %v3300 = vadd.f32 %v3298, %v3299
        %v3301 = vrot.slane %v3300, 2
        %v3302 = vadd.f32 %v3300, %v3301
        %v3303 = vrot.slane %v3302, 1
        %v3304 = vadd.f32 %v3302, %v3303
        %v3305 = vsel %vm2919, %v2846, 0.0
        %v3306 = vrot.slane %v3305, 4
        %v3307 = vadd.f32 %v3305, %v3306
        %v3308 = vrot.slane %v3307, 2
        %v3309 = vadd.f32 %v3307, %v3308
        %v3310 = vrot.slane %v3309, 1
        %v3311 = vadd.f32 %v3309, %v3310
        %v3312 = vsel %vm2919, %v2847, 0.0
        %v3313 = vrot.slane %v3312, 4
        %v3314 = vadd.f32 %v3312, %v3313
        %v3315 = vrot.slane %v3314, 2
        %v3316 = vadd.f32 %v3314, %v3315
        %v3317 = vrot.slane %v3316, 1
        %v3318 = vadd.f32 %v3316, %v3317
        %v3319 = vsel %vm2919, %v2848, 0.0
        %v3320 = vrot.slane %v3319, 4
        %v3321 = vadd.f32 %v3319, %v3320
        %v3322 = vrot.slane %v3321, 2
        %v3323 = vadd.f32 %v3321, %v3322
        %v3324 = vrot.slane %v3323, 1
        %v3325 = vadd.f32 %v3323, %v3324
        %v3326 = vsel %vm2919, %v2849, 0.0
        %v3327 = vrot.slane %v3326, 4
        %v3328 = vadd.f32 %v3326, %v3327
        %v3329 = vrot.slane %v3328, 2
        %v3330 = vadd.f32 %v3328, %v3329
        %v3331 = vrot.slane %v3330, 1
        %v3332 = vadd.f32 %v3330, %v3331
        %v3333 = vsel %vm2919, %v2850, 0.0
        %v3334 = vrot.slane %v3333, 4
        %v3335 = vadd.f32 %v3333, %v3334
        %v3336 = vrot.slane %v3335, 2
        %v3337 = vadd.f32 %v3335, %v3336
        %v3338 = vrot.slane %v3337, 1
        %v3339 = vadd.f32 %v3337, %v3338
        %v3340 = vsel %vm2919, %v2851, 0.0
        %v3341 = vrot.slane %v3340, 4
        %v3342 = vadd.f32 %v3340, %v3341
        %v3343 = vrot.slane %v3342, 2
        %v3344 = vadd.f32 %v3342, %v3343
        %v3345 = vrot.slane %v3344, 1
        %v3346 = vadd.f32 %v3344, %v3345
        %v3347 = vsel %vm2919, %v2852, 0.0
        %v3348 = vrot.slane %v3347, 4
        %v3349 = vadd.f32 %v3347, %v3348
        %v3350 = vrot.slane %v3349, 2
        %v3351 = vadd.f32 %v3349, %v3350
        %v3352 = vrot.slane %v3351, 1
        %v3353 = vadd.f32 %v3351, %v3352
        %v3354 = vsel %vm2919, %v2853, 0.0
        %v3355 = vrot.slane %v3354, 4
        %v3356 = vadd.f32 %v3354, %v3355
        %v3357 = vrot.slane %v3356, 2
        %v3358 = vadd.f32 %v3356, %v3357
        %v3359 = vrot.slane %v3358, 1
        %v3360 = vadd.f32 %v3358, %v3359
        %v3361 = vsel %vm2919, %v2854, 0.0
        %v3362 = vrot.slane %v3361, 4
        %v3363 = vadd.f32 %v3361, %v3362
        %v3364 = vrot.slane %v3363, 2
        %v3365 = vadd.f32 %v3363, %v3364
        %v3366 = vrot.slane %v3365, 1
        %v3367 = vadd.f32 %v3365, %v3366
        %v3368 = vsel %vm2919, %v2855, 0.0
        %v3369 = vrot.slane %v3368, 4
        %v3370 = vadd.f32 %v3368, %v3369
        %v3371 = vrot.slane %v3370, 2
        %v3372 = vadd.f32 %v3370, %v3371
        %v3373 = vrot.slane %v3372, 1
        %v3374 = vadd.f32 %v3372, %v3373
        %v3375 = vsel %vm2919, %v2856, 0.0
        %v3376 = vrot.slane %v3375, 4
        %v3377 = vadd.f32 %v3375, %v3376
        %v3378 = vrot.slane %v3377, 2
        %v3379 = vadd.f32 %v3377, %v3378
        %v3380 = vrot.slane %v3379, 1
        %v3381 = vadd.f32 %v3379, %v3380
        %v3382 = vsel %vm2919, %v2857, 0.0
        %v3383 = vrot.slane %v3382, 4
        %v3384 = vadd.f32 %v3382, %v3383
        %v3385 = vrot.slane %v3384, 2
        %v3386 = vadd.f32 %v3384, %v3385
        %v3387 = vrot.slane %v3386, 1
        %v3388 = vadd.f32 %v3386, %v3387
        %v3389 = vsel %vm2919, %v2858, 0.0
        %v3390 = vrot.slane %v3389, 4
        %v3391 = vadd.f32 %v3389, %v3390
        %v3392 = vrot.slane %v3391, 2
        %v3393 = vadd.f32 %v3391, %v3392
        %v3394 = vrot.slane %v3393, 1
        %v3395 = vadd.f32 %v3393, %v3394
        %v3396 = vsel %vm2919, %v2859, 0.0
        %v3397 = vrot.slane %v3396, 4
        %v3398 = vadd.f32 %v3396, %v3397
        %v3399 = vrot.slane %v3398, 2
        %v3400 = vadd.f32 %v3398, %v3399
        %v3401 = vrot.slane %v3400, 1
        %v3402 = vadd.f32 %v3400, %v3401
        %v3403 = vsel %vm2919, %v2860, 0.0
        %v3404 = vrot.slane %v3403, 4
        %v3405 = vadd.f32 %v3403, %v3404
        %v3406 = vrot.slane %v3405, 2
        %v3407 = vadd.f32 %v3405, %v3406
        %v3408 = vrot.slane %v3407, 1
        %v3409 = vadd.f32 %v3407, %v3408
        %v3410 = vsel %vm2919, %v2861, 0.0
        %v3411 = vrot.slane %v3410, 4
        %v3412 = vadd.f32 %v3410, %v3411
        %v3413 = vrot.slane %v3412, 2
        %v3414 = vadd.f32 %v3412, %v3413
        %v3415 = vrot.slane %v3414, 1
        %v3416 = vadd.f32 %v3414, %v3415
        %v3417 = vsel %vm2919, %v2862, 0.0
        %v3418 = vrot.slane %v3417, 4
        %v3419 = vadd.f32 %v3417, %v3418
        %v3420 = vrot.slane %v3419, 2
        %v3421 = vadd.f32 %v3419, %v3420
        %v3422 = vrot.slane %v3421, 1
        %v3423 = vadd.f32 %v3421, %v3422
        %v3424 = vsel %vm2919, %v2863, 0.0
        %v3425 = vrot.slane %v3424, 4
        %v3426 = vadd.f32 %v3424, %v3425
        %v3427 = vrot.slane %v3426, 2
        %v3428 = vadd.f32 %v3426, %v3427
        %v3429 = vrot.slane %v3428, 1
        %v3430 = vadd.f32 %v3428, %v3429
        %v3431 = vsel %vm2919, %v2864, 0.0
        %v3432 = vrot.slane %v3431, 4
        %v3433 = vadd.f32 %v3431, %v3432
        %v3434 = vrot.slane %v3433, 2
        %v3435 = vadd.f32 %v3433, %v3434
        %v3436 = vrot.slane %v3435, 1
        %v3437 = vadd.f32 %v3435, %v3436
        %v3438 = vsel %vm2919, %v2865, 0.0
        %v3439 = vrot.slane %v3438, 4
        %v3440 = vadd.f32 %v3438, %v3439
        %v3441 = vrot.slane %v3440, 2
        %v3442 = vadd.f32 %v3440, %v3441
        %v3443 = vrot.slane %v3442, 1
        %v3444 = vadd.f32 %v3442, %v3443
        %v3445 = vsel %vm2919, %v2866, 0.0
        %v3446 = vrot.slane %v3445, 4
        %v3447 = vadd.f32 %v3445, %v3446
        %v3448 = vrot.slane %v3447, 2
        %v3449 = vadd.f32 %v3447, %v3448
        %v3450 = vrot.slane %v3449, 1
        %v3451 = vadd.f32 %v3449, %v3450
        %v3452 = vsel %vm2919, %v2867, 0.0
        %v3453 = vrot.slane %v3452, 4
        %v3454 = vadd.f32 %v3452, %v3453
        %v3455 = vrot.slane %v3454, 2
        %v3456 = vadd.f32 %v3454, %v3455
        %v3457 = vrot.slane %v3456, 1
        %v3458 = vadd.f32 %v3456, %v3457
        %v3459 = vsel %vm2919, %v2868, 0.0
        %v3460 = vrot.slane %v3459, 4
        %v3461 = vadd.f32 %v3459, %v3460
        %v3462 = vrot.slane %v3461, 2
        %v3463 = vadd.f32 %v3461, %v3462
        %v3464 = vrot.slane %v3463, 1
        %v3465 = vadd.f32 %v3463, %v3464
        %v3466 = vsel %vm2919, %v2869, 0.0
        %v3467 = vrot.slane %v3466, 4
        %v3468 = vadd.f32 %v3466, %v3467
        %v3469 = vrot.slane %v3468, 2
        %v3470 = vadd.f32 %v3468, %v3469
        %v3471 = vrot.slane %v3470, 1
        %v3472 = vadd.f32 %v3470, %v3471
        %v3473 = vsel %vm2919, %v2870, 0.0
        %v3474 = vrot.slane %v3473, 4
        %v3475 = vadd.f32 %v3473, %v3474
        %v3476 = vrot.slane %v3475, 2
        %v3477 = vadd.f32 %v3475, %v3476
        %v3478 = vrot.slane %v3477, 1
        %v3479 = vadd.f32 %v3477, %v3478
        %v3480 = vsel %vm2919, %v2871, 0.0
        %v3481 = vrot.slane %v3480, 4
        %v3482 = vadd.f32 %v3480, %v3481
        %v3483 = vrot.slane %v3482, 2
        %v3484 = vadd.f32 %v3482, %v3483
        %v3485 = vrot.slane %v3484, 1
        %v3486 = vadd.f32 %v3484, %v3485
        %v3487 = vsel %vm2919, %v2872, 0.0
        %v3488 = vrot.slane %v3487, 4
        %v3489 = vadd.f32 %v3487, %v3488
        %v3490 = vrot.slane %v3489, 2
        %v3491 = vadd.f32 %v3489, %v3490
        %v3492 = vrot.slane %v3491, 1
        %v3493 = vadd.f32 %v3491, %v3492
        %v3494 = vsel %vm2919, %v2873, 0.0
        %v3495 = vrot.slane %v3494, 4
        %v3496 = vadd.f32 %v3494, %v3495
        %v3497 = vrot.slane %v3496, 2
        %v3498 = vadd.f32 %v3496, %v3497
        %v3499 = vrot.slane %v3498, 1
        %v3500 = vadd.f32 %v3498, %v3499
        %v3501 = vsel %vm2919, %v2874, 0.0
        %v3502 = vrot.slane %v3501, 4
        %v3503 = vadd.f32 %v3501, %v3502
        %v3504 = vrot.slane %v3503, 2
        %v3505 = vadd.f32 %v3503, %v3504
        %v3506 = vrot.slane %v3505, 1
        %v3507 = vadd.f32 %v3505, %v3506
        %v3508 = vsel %vm2919, %v2875, 0.0
        %v3509 = vrot.slane %v3508, 4
        %v3510 = vadd.f32 %v3508, %v3509
        %v3511 = vrot.slane %v3510, 2
        %v3512 = vadd.f32 %v3510, %v3511
        %v3513 = vrot.slane %v3512, 1
        %v3514 = vadd.f32 %v3512, %v3513
        %v3515 = vsel %vm2919, %v2876, 0.0
        %v3516 = vrot.slane %v3515, 4
        %v3517 = vadd.f32 %v3515, %v3516
        %v3518 = vrot.slane %v3517, 2
        %v3519 = vadd.f32 %v3517, %v3518
        %v3520 = vrot.slane %v3519, 1
        %v3521 = vadd.f32 %v3519, %v3520
        %v3522 = vsel %vm2919, %v2877, 0.0
        %v3523 = vrot.slane %v3522, 4
        %v3524 = vadd.f32 %v3522, %v3523
        %v3525 = vrot.slane %v3524, 2
        %v3526 = vadd.f32 %v3524, %v3525
        %v3527 = vrot.slane %v3526, 1
        %v3528 = vadd.f32 %v3526, %v3527
        %v3529 = vsel %vm2919, %v2878, 0.0
        %v3530 = vrot.slane %v3529, 4
        %v3531 = vadd.f32 %v3529, %v3530
        %v3532 = vrot.slane %v3531, 2
        %v3533 = vadd.f32 %v3531, %v3532
        %v3534 = vrot.slane %v3533, 1
        %v3535 = vadd.f32 %v3533, %v3534
        %v3536 = vsel %vm2919, %v2879, 0.0
        %v3537 = vrot.slane %v3536, 4
        %v3538 = vadd.f32 %v3536, %v3537
        %v3539 = vrot.slane %v3538, 2
        %v3540 = vadd.f32 %v3538, %v3539
        %v3541 = vrot.slane %v3540, 1
        %v3542 = vadd.f32 %v3540, %v3541
        %v3543 = vsel %vm2919, %v2880, 0.0
        %v3544 = vrot.slane %v3543, 4
        %v3545 = vadd.f32 %v3543, %v3544
        %v3546 = vrot.slane %v3545, 2
        %v3547 = vadd.f32 %v3545, %v3546
        %v3548 = vrot.slane %v3547, 1
        %v3549 = vadd.f32 %v3547, %v3548
        %v3550 = vsel %vm2919, %v2881, 0.0
        %v3551 = vrot.slane %v3550, 4
        %v3552 = vadd.f32 %v3550, %v3551
        %v3553 = vrot.slane %v3552, 2
        %v3554 = vadd.f32 %v3552, %v3553
        %v3555 = vrot.slane %v3554, 1
        %v3556 = vadd.f32 %v3554, %v3555
        %v3557 = vsel %vm2919, %v2882, 0.0
        %v3558 = vrot.slane %v3557, 4
        %v3559 = vadd.f32 %v3557, %v3558
        %v3560 = vrot.slane %v3559, 2
        %v3561 = vadd.f32 %v3559, %v3560
        %v3562 = vrot.slane %v3561, 1
        %v3563 = vadd.f32 %v3561, %v3562
        %v3564 = vsel %vm2919, %v2883, 0.0
        %v3565 = vrot.slane %v3564, 4
        %v3566 = vadd.f32 %v3564, %v3565
        %v3567 = vrot.slane %v3566, 2
        %v3568 = vadd.f32 %v3566, %v3567
        %v3569 = vrot.slane %v3568, 1
        %v3570 = vadd.f32 %v3568, %v3569
        %v3571 = vsel %vm2919, %v2884, 0.0
        %v3572 = vrot.slane %v3571, 4
        %v3573 = vadd.f32 %v3571, %v3572
        %v3574 = vrot.slane %v3573, 2
        %v3575 = vadd.f32 %v3573, %v3574
        %v3576 = vrot.slane %v3575, 1
        %v3577 = vadd.f32 %v3575, %v3576
        %v3578 = vsel %vm2919, %v2885, 0.0
        %v3579 = vrot.slane %v3578, 4
        %v3580 = vadd.f32 %v3578, %v3579
        %v3581 = vrot.slane %v3580, 2
        %v3582 = vadd.f32 %v3580, %v3581
        %v3583 = vrot.slane %v3582, 1
        %v3584 = vadd.f32 %v3582, %v3583
        %v3585 = vsel %vm2919, %v2886, 0.0
        %v3586 = vrot.slane %v3585, 4
        %v3587 = vadd.f32 %v3585, %v3586
        %v3588 = vrot.slane %v3587, 2
        %v3589 = vadd.f32 %v3587, %v3588
        %v3590 = vrot.slane %v3589, 1
        %v3591 = vadd.f32 %v3589, %v3590
        %v3592 = vsel %vm2919, %v2887, 0.0
        %v3593 = vrot.slane %v3592, 4
        %v3594 = vadd.f32 %v3592, %v3593
        %v3595 = vrot.slane %v3594, 2
        %v3596 = vadd.f32 %v3594, %v3595
        %v3597 = vrot.slane %v3596, 1
        %v3598 = vadd.f32 %v3596, %v3597
        %v3599 = vsel %vm2919, %v2888, 0.0
        %v3600 = vrot.slane %v3599, 4
        %v3601 = vadd.f32 %v3599, %v3600
        %v3602 = vrot.slane %v3601, 2
        %v3603 = vadd.f32 %v3601, %v3602
        %v3604 = vrot.slane %v3603, 1
        %v3605 = vadd.f32 %v3603, %v3604
        %v3606 = vsel %vm2919, %v2889, 0.0
        %v3607 = vrot.slane %v3606, 4
        %v3608 = vadd.f32 %v3606, %v3607
        %v3609 = vrot.slane %v3608, 2
        %v3610 = vadd.f32 %v3608, %v3609
        %v3611 = vrot.slane %v3610, 1
        %v3612 = vadd.f32 %v3610, %v3611
        %v3613 = vsel %vm2919, %v2890, 0.0
        %v3614 = vrot.slane %v3613, 4
        %v3615 = vadd.f32 %v3613, %v3614
        %v3616 = vrot.slane %v3615, 2
        %v3617 = vadd.f32 %v3615, %v3616
        %v3618 = vrot.slane %v3617, 1
        %v3619 = vadd.f32 %v3617, %v3618
        %v3620 = vsel %vm2919, %v2891, 0.0
        %v3621 = vrot.slane %v3620, 4
        %v3622 = vadd.f32 %v3620, %v3621
        %v3623 = vrot.slane %v3622, 2
        %v3624 = vadd.f32 %v3622, %v3623
        %v3625 = vrot.slane %v3624, 1
        %v3626 = vadd.f32 %v3624, %v3625
        %v3627 = vsel %vm2919, %v2892, 0.0
        %v3628 = vrot.slane %v3627, 4
        %v3629 = vadd.f32 %v3627, %v3628
        %v3630 = vrot.slane %v3629, 2
        %v3631 = vadd.f32 %v3629, %v3630
        %v3632 = vrot.slane %v3631, 1
        %v3633 = vadd.f32 %v3631, %v3632
        %v3634 = vsel %vm2919, %v2893, 0.0
        %v3635 = vrot.slane %v3634, 4
        %v3636 = vadd.f32 %v3634, %v3635
        %v3637 = vrot.slane %v3636, 2
        %v3638 = vadd.f32 %v3636, %v3637
        %v3639 = vrot.slane %v3638, 1
        %v3640 = vadd.f32 %v3638, %v3639
        %v3641 = vsel %vm2919, %v2894, 0.0
        %v3642 = vrot.slane %v3641, 4
        %v3643 = vadd.f32 %v3641, %v3642
        %v3644 = vrot.slane %v3643, 2
        %v3645 = vadd.f32 %v3643, %v3644
        %v3646 = vrot.slane %v3645, 1
        %v3647 = vadd.f32 %v3645, %v3646
        %v3648 = vsel %vm2919, %v2895, 0.0
        %v3649 = vrot.slane %v3648, 4
        %v3650 = vadd.f32 %v3648, %v3649
        %v3651 = vrot.slane %v3650, 2
        %v3652 = vadd.f32 %v3650, %v3651
        %v3653 = vrot.slane %v3652, 1
        %v3654 = vadd.f32 %v3652, %v3653
        %v3655 = vsel %vm2919, %v2896, 0.0
        %v3656 = vrot.slane %v3655, 4
        %v3657 = vadd.f32 %v3655, %v3656
        %v3658 = vrot.slane %v3657, 2
        %v3659 = vadd.f32 %v3657, %v3658
        %v3660 = vrot.slane %v3659, 1
        %v3661 = vadd.f32 %v3659, %v3660
        %v3662 = vsel %vm2919, %v2897, 0.0
        %v3663 = vrot.slane %v3662, 4
        %v3664 = vadd.f32 %v3662, %v3663
        %v3665 = vrot.slane %v3664, 2
        %v3666 = vadd.f32 %v3664, %v3665
        %v3667 = vrot.slane %v3666, 1
        %v3668 = vadd.f32 %v3666, %v3667
        %v3669 = vsel %vm2919, %v2898, 0.0
        %v3670 = vrot.slane %v3669, 4
        %v3671 = vadd.f32 %v3669, %v3670
        %v3672 = vrot.slane %v3671, 2
        %v3673 = vadd.f32 %v3671, %v3672
        %v3674 = vrot.slane %v3673, 1
        %v3675 = vadd.f32 %v3673, %v3674
        %v3676 = vsel %vm2919, %v2899, 0.0
        %v3677 = vrot.slane %v3676, 4
        %v3678 = vadd.f32 %v3676, %v3677
        %v3679 = vrot.slane %v3678, 2
        %v3680 = vadd.f32 %v3678, %v3679
        %v3681 = vrot.slane %v3680, 1
        %v3682 = vadd.f32 %v3680, %v3681
        %v3683 = vsel %vm2919, %v2900, 0.0
        %v3684 = vrot.slane %v3683, 4
        %v3685 = vadd.f32 %v3683, %v3684
        %v3686 = vrot.slane %v3685, 2
        %v3687 = vadd.f32 %v3685, %v3686
        %v3688 = vrot.slane %v3687, 1
        %v3689 = vadd.f32 %v3687, %v3688
        %v3690 = vsel %vm2919, %v2901, 0.0
        %v3691 = vrot.slane %v3690, 4
        %v3692 = vadd.f32 %v3690, %v3691
        %v3693 = vrot.slane %v3692, 2
        %v3694 = vadd.f32 %v3692, %v3693
        %v3695 = vrot.slane %v3694, 1
        %v3696 = vadd.f32 %v3694, %v3695
        %v3697 = vsel %vm2919, %v2902, 0.0
        %v3698 = vrot.slane %v3697, 4
        %v3699 = vadd.f32 %v3697, %v3698
        %v3700 = vrot.slane %v3699, 2
        %v3701 = vadd.f32 %v3699, %v3700
        %v3702 = vrot.slane %v3701, 1
        %v3703 = vadd.f32 %v3701, %v3702
        %v3704 = vsel %vm2919, %v2903, 0.0
        %v3705 = vrot.slane %v3704, 4
        %v3706 = vadd.f32 %v3704, %v3705
        %v3707 = vrot.slane %v3706, 2
        %v3708 = vadd.f32 %v3706, %v3707
        %v3709 = vrot.slane %v3708, 1
        %v3710 = vadd.f32 %v3708, %v3709
        %v3711 = vsel %vm2919, %v2904, 0.0
        %v3712 = vrot.slane %v3711, 4
        %v3713 = vadd.f32 %v3711, %v3712
        %v3714 = vrot.slane %v3713, 2
        %v3715 = vadd.f32 %v3713, %v3714
        %v3716 = vrot.slane %v3715, 1
        %v3717 = vadd.f32 %v3715, %v3716
        %v3718 = vsel %vm2919, %v2905, 0.0
        %v3719 = vrot.slane %v3718, 4
        %v3720 = vadd.f32 %v3718, %v3719
        %v3721 = vrot.slane %v3720, 2
        %v3722 = vadd.f32 %v3720, %v3721
        %v3723 = vrot.slane %v3722, 1
        %v3724 = vadd.f32 %v3722, %v3723
        %v3725 = vsel %vm2919, %v2906, 0.0
        %v3726 = vrot.slane %v3725, 4
        %v3727 = vadd.f32 %v3725, %v3726
        %v3728 = vrot.slane %v3727, 2
        %v3729 = vadd.f32 %v3727, %v3728
        %v3730 = vrot.slane %v3729, 1
        %v3731 = vadd.f32 %v3729, %v3730
        %v3732 = vsel %vm2919, %v2907, 0.0
        %v3733 = vrot.slane %v3732, 4
        %v3734 = vadd.f32 %v3732, %v3733
        %v3735 = vrot.slane %v3734, 2
        %v3736 = vadd.f32 %v3734, %v3735
        %v3737 = vrot.slane %v3736, 1
        %v3738 = vadd.f32 %v3736, %v3737
        %v3739 = vsel %vm2919, %v2908, 0.0
        %v3740 = vrot.slane %v3739, 4
        %v3741 = vadd.f32 %v3739, %v3740
        %v3742 = vrot.slane %v3741, 2
        %v3743 = vadd.f32 %v3741, %v3742
        %v3744 = vrot.slane %v3743, 1
        %v3745 = vadd.f32 %v3743, %v3744
        %v3746 = vsel %vm2919, %v2909, 0.0
        %v3747 = vrot.slane %v3746, 4
        %v3748 = vadd.f32 %v3746, %v3747
        %v3749 = vrot.slane %v3748, 2
        %v3750 = vadd.f32 %v3748, %v3749
        %v3751 = vrot.slane %v3750, 1
        %v3752 = vadd.f32 %v3750, %v3751
        %v3753 = vsel %vm2919, %v2910, 0.0
        %v3754 = vrot.slane %v3753, 4
        %v3755 = vadd.f32 %v3753, %v3754
        %v3756 = vrot.slane %v3755, 2
        %v3757 = vadd.f32 %v3755, %v3756
        %v3758 = vrot.slane %v3757, 1
        %v3759 = vadd.f32 %v3757, %v3758
        %v3760 = vsel %vm2919, %v2911, 0.0
        %v3761 = vrot.slane %v3760, 4
        %v3762 = vadd.f32 %v3760, %v3761
        %v3763 = vrot.slane %v3762, 2
        %v3764 = vadd.f32 %v3762, %v3763
        %v3765 = vrot.slane %v3764, 1
        %v3766 = vadd.f32 %v3764, %v3765
        %v3767 = vsel %vm2919, %v2912, 0.0
        %v3768 = vrot.slane %v3767, 4
        %v3769 = vadd.f32 %v3767, %v3768
        %v3770 = vrot.slane %v3769, 2
        %v3771 = vadd.f32 %v3769, %v3770
        %v3772 = vrot.slane %v3771, 1
        %v3773 = vadd.f32 %v3771, %v3772
        %v3774 = vsel %vm2919, %v2913, 0.0
        %v3775 = vrot.slane %v3774, 4
        %v3776 = vadd.f32 %v3774, %v3775
        %v3777 = vrot.slane %v3776, 2
        %v3778 = vadd.f32 %v3776, %v3777
        %v3779 = vrot.slane %v3778, 1
        %v3780 = vadd.f32 %v3778, %v3779
        %v3781 = vsel %vm2919, %v2914, 0.0
        %v3782 = vrot.slane %v3781, 4
        %v3783 = vadd.f32 %v3781, %v3782
        %v3784 = vrot.slane %v3783, 2
        %v3785 = vadd.f32 %v3783, %v3784
        %v3786 = vrot.slane %v3785, 1
        %v3787 = vadd.f32 %v3785, %v3786
        %v3788 = vsel %vm2919, %v2915, 0.0
        %v3789 = vrot.slane %v3788, 4
        %v3790 = vadd.f32 %v3788, %v3789
        %v3791 = vrot.slane %v3790, 2
        %v3792 = vadd.f32 %v3790, %v3791
        %v3793 = vrot.slane %v3792, 1
        %v3794 = vadd.f32 %v3792, %v3793
        %v3795 = vsel %vm2919, %v2916, 0.0
        %v3796 = vrot.slane %v3795, 4
        %v3797 = vadd.f32 %v3795, %v3796
        %v3798 = vrot.slane %v3797, 2
        %v3799 = vadd.f32 %v3797, %v3798
        %v3800 = vrot.slane %v3799, 1
        %v3801 = vadd.f32 %v3799, %v3800
        %v3802 = vsel %vm2919, %v2917, 0.0
        %v3803 = vrot.slane %v3802, 4
        %v3804 = vadd.f32 %v3802, %v3803
        %v3805 = vrot.slane %v3804, 2
        %v3806 = vadd.f32 %v3804, %v3805
        %v3807 = vrot.slane %v3806, 1
        %v3808 = vadd.f32 %v3806, %v3807
        %v3809 = vsel %vm2919, %v2918, 0.0
        %v3810 = vrot.slane %v3809, 4
        %v3811 = vadd.f32 %v3809, %v3810
        %v3812 = vrot.slane %v3811, 2
        %v3813 = vadd.f32 %v3811, %v3812
        %v3814 = vrot.slane %v3813, 1
        %v3815 = vadd.f32 %v3813, %v3814
        %v3816 = vld [vmem:[%s469] sm:$0x7]
        %v3817 = vld [vmem:[%s469 + $0x4] sm:$0x7]
        %v3818 = vld [vmem:[%s469 + $0x8] sm:$0x7]
        %v3819 = vld [vmem:[%s469 + $0xc] sm:$0x7]
        %v3820 = vld [vmem:[%s469 + $0x10] sm:$0x7]
        %v3821 = vld [vmem:[%s469 + $0x14] sm:$0x7]
        %v3822 = vld [vmem:[%s469 + $0x18] sm:$0x7]
        %v3823 = vld [vmem:[%s469 + $0x1c] sm:$0x7]
        %v3824 = vld [vmem:[%s469 + $0x20] sm:$0x7]
        %v3825 = vld [vmem:[%s469 + $0x24] sm:$0x7]
        %v3826 = vld [vmem:[%s469 + $0x28] sm:$0x7]
        %v3827 = vld [vmem:[%s469 + $0x2c] sm:$0x7]
        %v3828 = vld [vmem:[%s469 + $0x30] sm:$0x7]
        %v3829 = vld [vmem:[%s469 + $0x34] sm:$0x7]
        %v3830 = vld [vmem:[%s469 + $0x38] sm:$0x7]
        %v3831 = vld [vmem:[%s469 + $0x3c] sm:$0x7]
        %v3832 = vld [vmem:[%s469 + $0x40] sm:$0x7]
        %v3833 = vld [vmem:[%s469 + $0x44] sm:$0x7]
        %v3834 = vld [vmem:[%s469 + $0x48] sm:$0x7]
        %v3835 = vld [vmem:[%s469 + $0x4c] sm:$0x7]
        %v3836 = vld [vmem:[%s469 + $0x50] sm:$0x7]
        %v3837 = vld [vmem:[%s469 + $0x54] sm:$0x7]
        %v3838 = vld [vmem:[%s469 + $0x58] sm:$0x7]
        %v3839 = vld [vmem:[%s469 + $0x5c] sm:$0x7]
        %v3840 = vld [vmem:[%s469 + $0x60] sm:$0x7]
        %v3841 = vld [vmem:[%s469 + $0x64] sm:$0x7]
        %v3842 = vld [vmem:[%s469 + $0x68] sm:$0x7]
        %v3843 = vld [vmem:[%s469 + $0x6c] sm:$0x7]
        %v3844 = vld [vmem:[%s469 + $0x70] sm:$0x7]
        %v3845 = vld [vmem:[%s469 + $0x74] sm:$0x7]
        %v3846 = vld [vmem:[%s469 + $0x78] sm:$0x7]
        %v3847 = vld [vmem:[%s469 + $0x7c] sm:$0x7]
        %v3848 = vld [vmem:[%s469 + $0x80] sm:$0x7]
        %v3849 = vld [vmem:[%s469 + $0x84] sm:$0x7]
        %v3850 = vld [vmem:[%s469 + $0x88] sm:$0x7]
        %v3851 = vld [vmem:[%s469 + $0x8c] sm:$0x7]
        %v3852 = vld [vmem:[%s469 + $0x90] sm:$0x7]
        %v3853 = vld [vmem:[%s469 + $0x94] sm:$0x7]
        %v3854 = vld [vmem:[%s469 + $0x98] sm:$0x7]
        %v3855 = vld [vmem:[%s469 + $0x9c] sm:$0x7]
        %v3856 = vld [vmem:[%s469 + $0xa0] sm:$0x7]
        %v3857 = vld [vmem:[%s469 + $0xa4] sm:$0x7]
        %v3858 = vld [vmem:[%s469 + $0xa8] sm:$0x7]
        %v3859 = vld [vmem:[%s469 + $0xac] sm:$0x7]
        %v3860 = vld [vmem:[%s469 + $0xb0] sm:$0x7]
        %v3861 = vld [vmem:[%s469 + $0xb4] sm:$0x7]
        %v3862 = vld [vmem:[%s469 + $0xb8] sm:$0x7]
        %v3863 = vld [vmem:[%s469 + $0xbc] sm:$0x7]
        %v3864 = vld [vmem:[%s469 + $0xc0] sm:$0x7]
        %v3865 = vld [vmem:[%s469 + $0xc4] sm:$0x7]
        %v3866 = vld [vmem:[%s469 + $0xc8] sm:$0x7]
        %v3867 = vld [vmem:[%s469 + $0xcc] sm:$0x7]
        %v3868 = vld [vmem:[%s469 + $0xd0] sm:$0x7]
        %v3869 = vld [vmem:[%s469 + $0xd4] sm:$0x7]
        %v3870 = vld [vmem:[%s469 + $0xd8] sm:$0x7]
        %v3871 = vld [vmem:[%s469 + $0xdc] sm:$0x7]
        %v3872 = vld [vmem:[%s469 + $0xe0] sm:$0x7]
        %v3873 = vld [vmem:[%s469 + $0xe4] sm:$0x7]
        %v3874 = vld [vmem:[%s469 + $0xe8] sm:$0x7]
        %v3875 = vld [vmem:[%s469 + $0xec] sm:$0x7]
        %v3876 = vld [vmem:[%s469 + $0xf0] sm:$0x7]
        %v3877 = vld [vmem:[%s469 + $0xf4] sm:$0x7]
        %v3878 = vld [vmem:[%s469 + $0xf8] sm:$0x7]
        %v3879 = vld [vmem:[%s469 + $0xfc] sm:$0x7]
        %v3880 = vld [vmem:[%s469 + $0x100] sm:$0x7]
        %v3881 = vld [vmem:[%s469 + $0x104] sm:$0x7]
        %v3882 = vld [vmem:[%s469 + $0x108] sm:$0x7]
        %v3883 = vld [vmem:[%s469 + $0x10c] sm:$0x7]
        %v3884 = vld [vmem:[%s469 + $0x110] sm:$0x7]
        %v3885 = vld [vmem:[%s469 + $0x114] sm:$0x7]
        %v3886 = vld [vmem:[%s469 + $0x118] sm:$0x7]
        %v3887 = vld [vmem:[%s469 + $0x11c] sm:$0x7]
        %v3888 = vld [vmem:[%s469 + $0x120] sm:$0x7]
        %v3889 = vld [vmem:[%s469 + $0x124] sm:$0x7]
        %v3890 = vld [vmem:[%s469 + $0x128] sm:$0x7]
        %v3891 = vld [vmem:[%s469 + $0x12c] sm:$0x7]
        %v3892 = vld [vmem:[%s469 + $0x130] sm:$0x7]
        %v3893 = vld [vmem:[%s469 + $0x134] sm:$0x7]
        %v3894 = vld [vmem:[%s469 + $0x138] sm:$0x7]
        %v3895 = vld [vmem:[%s469 + $0x13c] sm:$0x7]
        %v3896 = vld [vmem:[%s469 + $0x140] sm:$0x7]
        %v3897 = vld [vmem:[%s469 + $0x144] sm:$0x7]
        %v3898 = vld [vmem:[%s469 + $0x148] sm:$0x7]
        %v3899 = vld [vmem:[%s469 + $0x14c] sm:$0x7]
        %v3900 = vld [vmem:[%s469 + $0x150] sm:$0x7]
        %v3901 = vld [vmem:[%s469 + $0x154] sm:$0x7]
        %v3902 = vld [vmem:[%s469 + $0x158] sm:$0x7]
        %v3903 = vld [vmem:[%s469 + $0x15c] sm:$0x7]
        %v3904 = vld [vmem:[%s469 + $0x160] sm:$0x7]
        %v3905 = vld [vmem:[%s469 + $0x164] sm:$0x7]
        %v3906 = vld [vmem:[%s469 + $0x168] sm:$0x7]
        %v3907 = vld [vmem:[%s469 + $0x16c] sm:$0x7]
        %v3908 = vld [vmem:[%s469 + $0x170] sm:$0x7]
        %v3909 = vld [vmem:[%s469 + $0x174] sm:$0x7]
        %v3910 = vld [vmem:[%s469 + $0x178] sm:$0x7]
        %v3911 = vld [vmem:[%s469 + $0x17c] sm:$0x7]
        %v3912 = vld [vmem:[%s469 + $0x180] sm:$0x7]
        %v3913 = vld [vmem:[%s469 + $0x184] sm:$0x7]
        %v3914 = vld [vmem:[%s469 + $0x188] sm:$0x7]
        %v3915 = vld [vmem:[%s469 + $0x18c] sm:$0x7]
        %v3916 = vld [vmem:[%s469 + $0x190] sm:$0x7]
        %v3917 = vld [vmem:[%s469 + $0x194] sm:$0x7]
        %v3918 = vld [vmem:[%s469 + $0x198] sm:$0x7]
        %v3919 = vld [vmem:[%s469 + $0x19c] sm:$0x7]
        %v3920 = vld [vmem:[%s469 + $0x1a0] sm:$0x7]
        %v3921 = vld [vmem:[%s469 + $0x1a4] sm:$0x7]
        %v3922 = vld [vmem:[%s469 + $0x1a8] sm:$0x7]
        %v3923 = vld [vmem:[%s469 + $0x1ac] sm:$0x7]
        %v3924 = vld [vmem:[%s469 + $0x1b0] sm:$0x7]
        %v3925 = vld [vmem:[%s469 + $0x1b4] sm:$0x7]
        %v3926 = vld [vmem:[%s469 + $0x1b8] sm:$0x7]
        %v3927 = vld [vmem:[%s469 + $0x1bc] sm:$0x7]
        %v3928 = vld [vmem:[%s469 + $0x1c0] sm:$0x7]
        %v3929 = vld [vmem:[%s469 + $0x1c4] sm:$0x7]
        %v3930 = vld [vmem:[%s469 + $0x1c8] sm:$0x7]
        %v3931 = vld [vmem:[%s469 + $0x1cc] sm:$0x7]
        %v3932 = vld [vmem:[%s469 + $0x1d0] sm:$0x7]
        %v3933 = vld [vmem:[%s469 + $0x1d4] sm:$0x7]
        %v3934 = vld [vmem:[%s469 + $0x1d8] sm:$0x7]
        %v3935 = vld [vmem:[%s469 + $0x1dc] sm:$0x7]
        %v3936 = vld [vmem:[%s469 + $0x1e0] sm:$0x7]
        %v3937 = vld [vmem:[%s469 + $0x1e4] sm:$0x7]
        %v3938 = vld [vmem:[%s469 + $0x1e8] sm:$0x7]
        %v3939 = vld [vmem:[%s469 + $0x1ec] sm:$0x7]
        %v3940 = vld [vmem:[%s469 + $0x1f0] sm:$0x7]
        %v3941 = vld [vmem:[%s469 + $0x1f4] sm:$0x7]
        %v3942 = vld [vmem:[%s469 + $0x1f8] sm:$0x7]
        %v3943 = vld [vmem:[%s469 + $0x1fc] sm:$0x7]
        %vm3944 = vcmask 1042432
        %v3945 = vsel %vm3944, %v3816, 0.0
        %v3946 = vrot.slane %v3945, 4
        %v3947 = vadd.f32 %v3945, %v3946
        %v3948 = vrot.slane %v3947, 2
        %v3949 = vadd.f32 %v3947, %v3948
        %v3950 = vrot.slane %v3949, 1
        %v3951 = vadd.f32 %v3949, %v3950
        %v3952 = vsel %vm3944, %v3817, 0.0
        %v3953 = vrot.slane %v3952, 4
        %v3954 = vadd.f32 %v3952, %v3953
        %v3955 = vrot.slane %v3954, 2
        %v3956 = vadd.f32 %v3954, %v3955
        %v3957 = vrot.slane %v3956, 1
        %v3958 = vadd.f32 %v3956, %v3957
        %v3959 = vsel %vm3944, %v3818, 0.0
        %v3960 = vrot.slane %v3959, 4
        %v3961 = vadd.f32 %v3959, %v3960
        %v3962 = vrot.slane %v3961, 2
        %v3963 = vadd.f32 %v3961, %v3962
        %v3964 = vrot.slane %v3963, 1
        %v3965 = vadd.f32 %v3963, %v3964
        %v3966 = vsel %vm3944, %v3819, 0.0
        %v3967 = vrot.slane %v3966, 4
        %v3968 = vadd.f32 %v3966, %v3967
        %v3969 = vrot.slane %v3968, 2
        %v3970 = vadd.f32 %v3968, %v3969
        %v3971 = vrot.slane %v3970, 1
        %v3972 = vadd.f32 %v3970, %v3971
        %v3973 = vsel %vm3944, %v3820, 0.0
        %v3974 = vrot.slane %v3973, 4
        %v3975 = vadd.f32 %v3973, %v3974
        %v3976 = vrot.slane %v3975, 2
        %v3977 = vadd.f32 %v3975, %v3976
        %v3978 = vrot.slane %v3977, 1
        %v3979 = vadd.f32 %v3977, %v3978
        %v3980 = vsel %vm3944, %v3821, 0.0
        %v3981 = vrot.slane %v3980, 4
        %v3982 = vadd.f32 %v3980, %v3981
        %v3983 = vrot.slane %v3982, 2
        %v3984 = vadd.f32 %v3982, %v3983
        %v3985 = vrot.slane %v3984, 1
        %v3986 = vadd.f32 %v3984, %v3985
        %v3987 = vsel %vm3944, %v3822, 0.0
        %v3988 = vrot.slane %v3987, 4
        %v3989 = vadd.f32 %v3987, %v3988
        %v3990 = vrot.slane %v3989, 2
        %v3991 = vadd.f32 %v3989, %v3990
        %v3992 = vrot.slane %v3991, 1
        %v3993 = vadd.f32 %v3991, %v3992
        %v3994 = vsel %vm3944, %v3823, 0.0
        %v3995 = vrot.slane %v3994, 4
        %v3996 = vadd.f32 %v3994, %v3995
        %v3997 = vrot.slane %v3996, 2
        %v3998 = vadd.f32 %v3996, %v3997
        %v3999 = vrot.slane %v3998, 1
        %v4000 = vadd.f32 %v3998, %v3999
        %v4001 = vsel %vm3944, %v3824, 0.0
        %v4002 = vrot.slane %v4001, 4
        %v4003 = vadd.f32 %v4001, %v4002
        %v4004 = vrot.slane %v4003, 2
        %v4005 = vadd.f32 %v4003, %v4004
        %v4006 = vrot.slane %v4005, 1
        %v4007 = vadd.f32 %v4005, %v4006
        %v4008 = vsel %vm3944, %v3825, 0.0
        %v4009 = vrot.slane %v4008, 4
        %v4010 = vadd.f32 %v4008, %v4009
        %v4011 = vrot.slane %v4010, 2
        %v4012 = vadd.f32 %v4010, %v4011
        %v4013 = vrot.slane %v4012, 1
        %v4014 = vadd.f32 %v4012, %v4013
        %v4015 = vsel %vm3944, %v3826, 0.0
        %v4016 = vrot.slane %v4015, 4
        %v4017 = vadd.f32 %v4015, %v4016
        %v4018 = vrot.slane %v4017, 2
        %v4019 = vadd.f32 %v4017, %v4018
        %v4020 = vrot.slane %v4019, 1
        %v4021 = vadd.f32 %v4019, %v4020
        %v4022 = vsel %vm3944, %v3827, 0.0
        %v4023 = vrot.slane %v4022, 4
        %v4024 = vadd.f32 %v4022, %v4023
        %v4025 = vrot.slane %v4024, 2
        %v4026 = vadd.f32 %v4024, %v4025
        %v4027 = vrot.slane %v4026, 1
        %v4028 = vadd.f32 %v4026, %v4027
        %v4029 = vsel %vm3944, %v3828, 0.0
        %v4030 = vrot.slane %v4029, 4
        %v4031 = vadd.f32 %v4029, %v4030
        %v4032 = vrot.slane %v4031, 2
        %v4033 = vadd.f32 %v4031, %v4032
        %v4034 = vrot.slane %v4033, 1
        %v4035 = vadd.f32 %v4033, %v4034
        %v4036 = vsel %vm3944, %v3829, 0.0
        %v4037 = vrot.slane %v4036, 4
        %v4038 = vadd.f32 %v4036, %v4037
        %v4039 = vrot.slane %v4038, 2
        %v4040 = vadd.f32 %v4038, %v4039
        %v4041 = vrot.slane %v4040, 1
        %v4042 = vadd.f32 %v4040, %v4041
        %v4043 = vsel %vm3944, %v3830, 0.0
        %v4044 = vrot.slane %v4043, 4
        %v4045 = vadd.f32 %v4043, %v4044
        %v4046 = vrot.slane %v4045, 2
        %v4047 = vadd.f32 %v4045, %v4046
        %v4048 = vrot.slane %v4047, 1
        %v4049 = vadd.f32 %v4047, %v4048
        %v4050 = vsel %vm3944, %v3831, 0.0
        %v4051 = vrot.slane %v4050, 4
        %v4052 = vadd.f32 %v4050, %v4051
        %v4053 = vrot.slane %v4052, 2
        %v4054 = vadd.f32 %v4052, %v4053
        %v4055 = vrot.slane %v4054, 1
        %v4056 = vadd.f32 %v4054, %v4055
        %v4057 = vsel %vm3944, %v3832, 0.0
        %v4058 = vrot.slane %v4057, 4
        %v4059 = vadd.f32 %v4057, %v4058
        %v4060 = vrot.slane %v4059, 2
        %v4061 = vadd.f32 %v4059, %v4060
        %v4062 = vrot.slane %v4061, 1
        %v4063 = vadd.f32 %v4061, %v4062
        %v4064 = vsel %vm3944, %v3833, 0.0
        %v4065 = vrot.slane %v4064, 4
        %v4066 = vadd.f32 %v4064, %v4065
        %v4067 = vrot.slane %v4066, 2
        %v4068 = vadd.f32 %v4066, %v4067
        %v4069 = vrot.slane %v4068, 1
        %v4070 = vadd.f32 %v4068, %v4069
        %v4071 = vsel %vm3944, %v3834, 0.0
        %v4072 = vrot.slane %v4071, 4
        %v4073 = vadd.f32 %v4071, %v4072
        %v4074 = vrot.slane %v4073, 2
        %v4075 = vadd.f32 %v4073, %v4074
        %v4076 = vrot.slane %v4075, 1
        %v4077 = vadd.f32 %v4075, %v4076
        %v4078 = vsel %vm3944, %v3835, 0.0
        %v4079 = vrot.slane %v4078, 4
        %v4080 = vadd.f32 %v4078, %v4079
        %v4081 = vrot.slane %v4080, 2
        %v4082 = vadd.f32 %v4080, %v4081
        %v4083 = vrot.slane %v4082, 1
        %v4084 = vadd.f32 %v4082, %v4083
        %v4085 = vsel %vm3944, %v3836, 0.0
        %v4086 = vrot.slane %v4085, 4
        %v4087 = vadd.f32 %v4085, %v4086
        %v4088 = vrot.slane %v4087, 2
        %v4089 = vadd.f32 %v4087, %v4088
        %v4090 = vrot.slane %v4089, 1
        %v4091 = vadd.f32 %v4089, %v4090
        %v4092 = vsel %vm3944, %v3837, 0.0
        %v4093 = vrot.slane %v4092, 4
        %v4094 = vadd.f32 %v4092, %v4093
        %v4095 = vrot.slane %v4094, 2
        %v4096 = vadd.f32 %v4094, %v4095
        %v4097 = vrot.slane %v4096, 1
        %v4098 = vadd.f32 %v4096, %v4097
        %v4099 = vsel %vm3944, %v3838, 0.0
        %v4100 = vrot.slane %v4099, 4
        %v4101 = vadd.f32 %v4099, %v4100
        %v4102 = vrot.slane %v4101, 2
        %v4103 = vadd.f32 %v4101, %v4102
        %v4104 = vrot.slane %v4103, 1
        %v4105 = vadd.f32 %v4103, %v4104
        %v4106 = vsel %vm3944, %v3839, 0.0
        %v4107 = vrot.slane %v4106, 4
        %v4108 = vadd.f32 %v4106, %v4107
        %v4109 = vrot.slane %v4108, 2
        %v4110 = vadd.f32 %v4108, %v4109
        %v4111 = vrot.slane %v4110, 1
        %v4112 = vadd.f32 %v4110, %v4111
        %v4113 = vsel %vm3944, %v3840, 0.0
        %v4114 = vrot.slane %v4113, 4
        %v4115 = vadd.f32 %v4113, %v4114
        %v4116 = vrot.slane %v4115, 2
        %v4117 = vadd.f32 %v4115, %v4116
        %v4118 = vrot.slane %v4117, 1
        %v4119 = vadd.f32 %v4117, %v4118
        %v4120 = vsel %vm3944, %v3841, 0.0
        %v4121 = vrot.slane %v4120, 4
        %v4122 = vadd.f32 %v4120, %v4121
        %v4123 = vrot.slane %v4122, 2
        %v4124 = vadd.f32 %v4122, %v4123
        %v4125 = vrot.slane %v4124, 1
        %v4126 = vadd.f32 %v4124, %v4125
        %v4127 = vsel %vm3944, %v3842, 0.0
        %v4128 = vrot.slane %v4127, 4
        %v4129 = vadd.f32 %v4127, %v4128
        %v4130 = vrot.slane %v4129, 2
        %v4131 = vadd.f32 %v4129, %v4130
        %v4132 = vrot.slane %v4131, 1
        %v4133 = vadd.f32 %v4131, %v4132
        %v4134 = vsel %vm3944, %v3843, 0.0
        %v4135 = vrot.slane %v4134, 4
        %v4136 = vadd.f32 %v4134, %v4135
        %v4137 = vrot.slane %v4136, 2
        %v4138 = vadd.f32 %v4136, %v4137
        %v4139 = vrot.slane %v4138, 1
        %v4140 = vadd.f32 %v4138, %v4139
        %v4141 = vsel %vm3944, %v3844, 0.0
        %v4142 = vrot.slane %v4141, 4
        %v4143 = vadd.f32 %v4141, %v4142
        %v4144 = vrot.slane %v4143, 2
        %v4145 = vadd.f32 %v4143, %v4144
        %v4146 = vrot.slane %v4145, 1
        %v4147 = vadd.f32 %v4145, %v4146
        %v4148 = vsel %vm3944, %v3845, 0.0
        %v4149 = vrot.slane %v4148, 4
        %v4150 = vadd.f32 %v4148, %v4149
        %v4151 = vrot.slane %v4150, 2
        %v4152 = vadd.f32 %v4150, %v4151
        %v4153 = vrot.slane %v4152, 1
        %v4154 = vadd.f32 %v4152, %v4153
        %v4155 = vsel %vm3944, %v3846, 0.0
        %v4156 = vrot.slane %v4155, 4
        %v4157 = vadd.f32 %v4155, %v4156
        %v4158 = vrot.slane %v4157, 2
        %v4159 = vadd.f32 %v4157, %v4158
        %v4160 = vrot.slane %v4159, 1
        %v4161 = vadd.f32 %v4159, %v4160
        %v4162 = vsel %vm3944, %v3847, 0.0
        %v4163 = vrot.slane %v4162, 4
        %v4164 = vadd.f32 %v4162, %v4163
        %v4165 = vrot.slane %v4164, 2
        %v4166 = vadd.f32 %v4164, %v4165
        %v4167 = vrot.slane %v4166, 1
        %v4168 = vadd.f32 %v4166, %v4167
        %v4169 = vsel %vm3944, %v3848, 0.0
        %v4170 = vrot.slane %v4169, 4
        %v4171 = vadd.f32 %v4169, %v4170
        %v4172 = vrot.slane %v4171, 2
        %v4173 = vadd.f32 %v4171, %v4172
        %v4174 = vrot.slane %v4173, 1
        %v4175 = vadd.f32 %v4173, %v4174
        %v4176 = vsel %vm3944, %v3849, 0.0
        %v4177 = vrot.slane %v4176, 4
        %v4178 = vadd.f32 %v4176, %v4177
        %v4179 = vrot.slane %v4178, 2
        %v4180 = vadd.f32 %v4178, %v4179
        %v4181 = vrot.slane %v4180, 1
        %v4182 = vadd.f32 %v4180, %v4181
        %v4183 = vsel %vm3944, %v3850, 0.0
        %v4184 = vrot.slane %v4183, 4
        %v4185 = vadd.f32 %v4183, %v4184
        %v4186 = vrot.slane %v4185, 2
        %v4187 = vadd.f32 %v4185, %v4186
        %v4188 = vrot.slane %v4187, 1
        %v4189 = vadd.f32 %v4187, %v4188
        %v4190 = vsel %vm3944, %v3851, 0.0
        %v4191 = vrot.slane %v4190, 4
        %v4192 = vadd.f32 %v4190, %v4191
        %v4193 = vrot.slane %v4192, 2
        %v4194 = vadd.f32 %v4192, %v4193
        %v4195 = vrot.slane %v4194, 1
        %v4196 = vadd.f32 %v4194, %v4195
        %v4197 = vsel %vm3944, %v3852, 0.0
        %v4198 = vrot.slane %v4197, 4
        %v4199 = vadd.f32 %v4197, %v4198
        %v4200 = vrot.slane %v4199, 2
        %v4201 = vadd.f32 %v4199, %v4200
        %v4202 = vrot.slane %v4201, 1
        %v4203 = vadd.f32 %v4201, %v4202
        %v4204 = vsel %vm3944, %v3853, 0.0
        %v4205 = vrot.slane %v4204, 4
        %v4206 = vadd.f32 %v4204, %v4205
        %v4207 = vrot.slane %v4206, 2
        %v4208 = vadd.f32 %v4206, %v4207
        %v4209 = vrot.slane %v4208, 1
        %v4210 = vadd.f32 %v4208, %v4209
        %v4211 = vsel %vm3944, %v3854, 0.0
        %v4212 = vrot.slane %v4211, 4
        %v4213 = vadd.f32 %v4211, %v4212
        %v4214 = vrot.slane %v4213, 2
        %v4215 = vadd.f32 %v4213, %v4214
        %v4216 = vrot.slane %v4215, 1
        %v4217 = vadd.f32 %v4215, %v4216
        %v4218 = vsel %vm3944, %v3855, 0.0
        %v4219 = vrot.slane %v4218, 4
        %v4220 = vadd.f32 %v4218, %v4219
        %v4221 = vrot.slane %v4220, 2
        %v4222 = vadd.f32 %v4220, %v4221
        %v4223 = vrot.slane %v4222, 1
        %v4224 = vadd.f32 %v4222, %v4223
        %v4225 = vsel %vm3944, %v3856, 0.0
        %v4226 = vrot.slane %v4225, 4
        %v4227 = vadd.f32 %v4225, %v4226
        %v4228 = vrot.slane %v4227, 2
        %v4229 = vadd.f32 %v4227, %v4228
        %v4230 = vrot.slane %v4229, 1
        %v4231 = vadd.f32 %v4229, %v4230
        %v4232 = vsel %vm3944, %v3857, 0.0
        %v4233 = vrot.slane %v4232, 4
        %v4234 = vadd.f32 %v4232, %v4233
        %v4235 = vrot.slane %v4234, 2
        %v4236 = vadd.f32 %v4234, %v4235
        %v4237 = vrot.slane %v4236, 1
        %v4238 = vadd.f32 %v4236, %v4237
        %v4239 = vsel %vm3944, %v3858, 0.0
        %v4240 = vrot.slane %v4239, 4
        %v4241 = vadd.f32 %v4239, %v4240
        %v4242 = vrot.slane %v4241, 2
        %v4243 = vadd.f32 %v4241, %v4242
        %v4244 = vrot.slane %v4243, 1
        %v4245 = vadd.f32 %v4243, %v4244
        %v4246 = vsel %vm3944, %v3859, 0.0
        %v4247 = vrot.slane %v4246, 4
        %v4248 = vadd.f32 %v4246, %v4247
        %v4249 = vrot.slane %v4248, 2
        %v4250 = vadd.f32 %v4248, %v4249
        %v4251 = vrot.slane %v4250, 1
        %v4252 = vadd.f32 %v4250, %v4251
        %v4253 = vsel %vm3944, %v3860, 0.0
        %v4254 = vrot.slane %v4253, 4
        %v4255 = vadd.f32 %v4253, %v4254
        %v4256 = vrot.slane %v4255, 2
        %v4257 = vadd.f32 %v4255, %v4256
        %v4258 = vrot.slane %v4257, 1
        %v4259 = vadd.f32 %v4257, %v4258
        %v4260 = vsel %vm3944, %v3861, 0.0
        %v4261 = vrot.slane %v4260, 4
        %v4262 = vadd.f32 %v4260, %v4261
        %v4263 = vrot.slane %v4262, 2
        %v4264 = vadd.f32 %v4262, %v4263
        %v4265 = vrot.slane %v4264, 1
        %v4266 = vadd.f32 %v4264, %v4265
        %v4267 = vsel %vm3944, %v3862, 0.0
        %v4268 = vrot.slane %v4267, 4
        %v4269 = vadd.f32 %v4267, %v4268
        %v4270 = vrot.slane %v4269, 2
        %v4271 = vadd.f32 %v4269, %v4270
        %v4272 = vrot.slane %v4271, 1
        %v4273 = vadd.f32 %v4271, %v4272
        %v4274 = vsel %vm3944, %v3863, 0.0
        %v4275 = vrot.slane %v4274, 4
        %v4276 = vadd.f32 %v4274, %v4275
        %v4277 = vrot.slane %v4276, 2
        %v4278 = vadd.f32 %v4276, %v4277
        %v4279 = vrot.slane %v4278, 1
        %v4280 = vadd.f32 %v4278, %v4279
        %v4281 = vsel %vm3944, %v3864, 0.0
        %v4282 = vrot.slane %v4281, 4
        %v4283 = vadd.f32 %v4281, %v4282
        %v4284 = vrot.slane %v4283, 2
        %v4285 = vadd.f32 %v4283, %v4284
        %v4286 = vrot.slane %v4285, 1
        %v4287 = vadd.f32 %v4285, %v4286
        %v4288 = vsel %vm3944, %v3865, 0.0
        %v4289 = vrot.slane %v4288, 4
        %v4290 = vadd.f32 %v4288, %v4289
        %v4291 = vrot.slane %v4290, 2
        %v4292 = vadd.f32 %v4290, %v4291
        %v4293 = vrot.slane %v4292, 1
        %v4294 = vadd.f32 %v4292, %v4293
        %v4295 = vsel %vm3944, %v3866, 0.0
        %v4296 = vrot.slane %v4295, 4
        %v4297 = vadd.f32 %v4295, %v4296
        %v4298 = vrot.slane %v4297, 2
        %v4299 = vadd.f32 %v4297, %v4298
        %v4300 = vrot.slane %v4299, 1
        %v4301 = vadd.f32 %v4299, %v4300
        %v4302 = vsel %vm3944, %v3867, 0.0
        %v4303 = vrot.slane %v4302, 4
        %v4304 = vadd.f32 %v4302, %v4303
        %v4305 = vrot.slane %v4304, 2
        %v4306 = vadd.f32 %v4304, %v4305
        %v4307 = vrot.slane %v4306, 1
        %v4308 = vadd.f32 %v4306, %v4307
        %v4309 = vsel %vm3944, %v3868, 0.0
        %v4310 = vrot.slane %v4309, 4
        %v4311 = vadd.f32 %v4309, %v4310
        %v4312 = vrot.slane %v4311, 2
        %v4313 = vadd.f32 %v4311, %v4312
        %v4314 = vrot.slane %v4313, 1
        %v4315 = vadd.f32 %v4313, %v4314
        %v4316 = vsel %vm3944, %v3869, 0.0
        %v4317 = vrot.slane %v4316, 4
        %v4318 = vadd.f32 %v4316, %v4317
        %v4319 = vrot.slane %v4318, 2
        %v4320 = vadd.f32 %v4318, %v4319
        %v4321 = vrot.slane %v4320, 1
        %v4322 = vadd.f32 %v4320, %v4321
        %v4323 = vsel %vm3944, %v3870, 0.0
        %v4324 = vrot.slane %v4323, 4
        %v4325 = vadd.f32 %v4323, %v4324
        %v4326 = vrot.slane %v4325, 2
        %v4327 = vadd.f32 %v4325, %v4326
        %v4328 = vrot.slane %v4327, 1
        %v4329 = vadd.f32 %v4327, %v4328
        %v4330 = vsel %vm3944, %v3871, 0.0
        %v4331 = vrot.slane %v4330, 4
        %v4332 = vadd.f32 %v4330, %v4331
        %v4333 = vrot.slane %v4332, 2
        %v4334 = vadd.f32 %v4332, %v4333
        %v4335 = vrot.slane %v4334, 1
        %v4336 = vadd.f32 %v4334, %v4335
        %v4337 = vsel %vm3944, %v3872, 0.0
        %v4338 = vrot.slane %v4337, 4
        %v4339 = vadd.f32 %v4337, %v4338
        %v4340 = vrot.slane %v4339, 2
        %v4341 = vadd.f32 %v4339, %v4340
        %v4342 = vrot.slane %v4341, 1
        %v4343 = vadd.f32 %v4341, %v4342
        %v4344 = vsel %vm3944, %v3873, 0.0
        %v4345 = vrot.slane %v4344, 4
        %v4346 = vadd.f32 %v4344, %v4345
        %v4347 = vrot.slane %v4346, 2
        %v4348 = vadd.f32 %v4346, %v4347
        %v4349 = vrot.slane %v4348, 1
        %v4350 = vadd.f32 %v4348, %v4349
        %v4351 = vsel %vm3944, %v3874, 0.0
        %v4352 = vrot.slane %v4351, 4
        %v4353 = vadd.f32 %v4351, %v4352
        %v4354 = vrot.slane %v4353, 2
        %v4355 = vadd.f32 %v4353, %v4354
        %v4356 = vrot.slane %v4355, 1
        %v4357 = vadd.f32 %v4355, %v4356
        %v4358 = vsel %vm3944, %v3875, 0.0
        %v4359 = vrot.slane %v4358, 4
        %v4360 = vadd.f32 %v4358, %v4359
        %v4361 = vrot.slane %v4360, 2
        %v4362 = vadd.f32 %v4360, %v4361
        %v4363 = vrot.slane %v4362, 1
        %v4364 = vadd.f32 %v4362, %v4363
        %v4365 = vsel %vm3944, %v3876, 0.0
        %v4366 = vrot.slane %v4365, 4
        %v4367 = vadd.f32 %v4365, %v4366
        %v4368 = vrot.slane %v4367, 2
        %v4369 = vadd.f32 %v4367, %v4368
        %v4370 = vrot.slane %v4369, 1
        %v4371 = vadd.f32 %v4369, %v4370
        %v4372 = vsel %vm3944, %v3877, 0.0
        %v4373 = vrot.slane %v4372, 4
        %v4374 = vadd.f32 %v4372, %v4373
        %v4375 = vrot.slane %v4374, 2
        %v4376 = vadd.f32 %v4374, %v4375
        %v4377 = vrot.slane %v4376, 1
        %v4378 = vadd.f32 %v4376, %v4377
        %v4379 = vsel %vm3944, %v3878, 0.0
        %v4380 = vrot.slane %v4379, 4
        %v4381 = vadd.f32 %v4379, %v4380
        %v4382 = vrot.slane %v4381, 2
        %v4383 = vadd.f32 %v4381, %v4382
        %v4384 = vrot.slane %v4383, 1
        %v4385 = vadd.f32 %v4383, %v4384
        %v4386 = vsel %vm3944, %v3879, 0.0
        %v4387 = vrot.slane %v4386, 4
        %v4388 = vadd.f32 %v4386, %v4387
        %v4389 = vrot.slane %v4388, 2
        %v4390 = vadd.f32 %v4388, %v4389
        %v4391 = vrot.slane %v4390, 1
        %v4392 = vadd.f32 %v4390, %v4391
        %v4393 = vsel %vm3944, %v3880, 0.0
        %v4394 = vrot.slane %v4393, 4
        %v4395 = vadd.f32 %v4393, %v4394
        %v4396 = vrot.slane %v4395, 2
        %v4397 = vadd.f32 %v4395, %v4396
        %v4398 = vrot.slane %v4397, 1
        %v4399 = vadd.f32 %v4397, %v4398
        %v4400 = vsel %vm3944, %v3881, 0.0
        %v4401 = vrot.slane %v4400, 4
        %v4402 = vadd.f32 %v4400, %v4401
        %v4403 = vrot.slane %v4402, 2
        %v4404 = vadd.f32 %v4402, %v4403
        %v4405 = vrot.slane %v4404, 1
        %v4406 = vadd.f32 %v4404, %v4405
        %v4407 = vsel %vm3944, %v3882, 0.0
        %v4408 = vrot.slane %v4407, 4
        %v4409 = vadd.f32 %v4407, %v4408
        %v4410 = vrot.slane %v4409, 2
        %v4411 = vadd.f32 %v4409, %v4410
        %v4412 = vrot.slane %v4411, 1
        %v4413 = vadd.f32 %v4411, %v4412
        %v4414 = vsel %vm3944, %v3883, 0.0
        %v4415 = vrot.slane %v4414, 4
        %v4416 = vadd.f32 %v4414, %v4415
        %v4417 = vrot.slane %v4416, 2
        %v4418 = vadd.f32 %v4416, %v4417
        %v4419 = vrot.slane %v4418, 1
        %v4420 = vadd.f32 %v4418, %v4419
        %v4421 = vsel %vm3944, %v3884, 0.0
        %v4422 = vrot.slane %v4421, 4
        %v4423 = vadd.f32 %v4421, %v4422
        %v4424 = vrot.slane %v4423, 2
        %v4425 = vadd.f32 %v4423, %v4424
        %v4426 = vrot.slane %v4425, 1
        %v4427 = vadd.f32 %v4425, %v4426
        %v4428 = vsel %vm3944, %v3885, 0.0
        %v4429 = vrot.slane %v4428, 4
        %v4430 = vadd.f32 %v4428, %v4429
        %v4431 = vrot.slane %v4430, 2
        %v4432 = vadd.f32 %v4430, %v4431
        %v4433 = vrot.slane %v4432, 1
        %v4434 = vadd.f32 %v4432, %v4433
        %v4435 = vsel %vm3944, %v3886, 0.0
        %v4436 = vrot.slane %v4435, 4
        %v4437 = vadd.f32 %v4435, %v4436
        %v4438 = vrot.slane %v4437, 2
        %v4439 = vadd.f32 %v4437, %v4438
        %v4440 = vrot.slane %v4439, 1
        %v4441 = vadd.f32 %v4439, %v4440
        %v4442 = vsel %vm3944, %v3887, 0.0
        %v4443 = vrot.slane %v4442, 4
        %v4444 = vadd.f32 %v4442, %v4443
        %v4445 = vrot.slane %v4444, 2
        %v4446 = vadd.f32 %v4444, %v4445
        %v4447 = vrot.slane %v4446, 1
        %v4448 = vadd.f32 %v4446, %v4447
        %v4449 = vsel %vm3944, %v3888, 0.0
        %v4450 = vrot.slane %v4449, 4
        %v4451 = vadd.f32 %v4449, %v4450
        %v4452 = vrot.slane %v4451, 2
        %v4453 = vadd.f32 %v4451, %v4452
        %v4454 = vrot.slane %v4453, 1
        %v4455 = vadd.f32 %v4453, %v4454
        %v4456 = vsel %vm3944, %v3889, 0.0
        %v4457 = vrot.slane %v4456, 4
        %v4458 = vadd.f32 %v4456, %v4457
        %v4459 = vrot.slane %v4458, 2
        %v4460 = vadd.f32 %v4458, %v4459
        %v4461 = vrot.slane %v4460, 1
        %v4462 = vadd.f32 %v4460, %v4461
        %v4463 = vsel %vm3944, %v3890, 0.0
        %v4464 = vrot.slane %v4463, 4
        %v4465 = vadd.f32 %v4463, %v4464
        %v4466 = vrot.slane %v4465, 2
        %v4467 = vadd.f32 %v4465, %v4466
        %v4468 = vrot.slane %v4467, 1
        %v4469 = vadd.f32 %v4467, %v4468
        %v4470 = vsel %vm3944, %v3891, 0.0
        %v4471 = vrot.slane %v4470, 4
        %v4472 = vadd.f32 %v4470, %v4471
        %v4473 = vrot.slane %v4472, 2
        %v4474 = vadd.f32 %v4472, %v4473
        %v4475 = vrot.slane %v4474, 1
        %v4476 = vadd.f32 %v4474, %v4475
        %v4477 = vsel %vm3944, %v3892, 0.0
        %v4478 = vrot.slane %v4477, 4
        %v4479 = vadd.f32 %v4477, %v4478
        %v4480 = vrot.slane %v4479, 2
        %v4481 = vadd.f32 %v4479, %v4480
        %v4482 = vrot.slane %v4481, 1
        %v4483 = vadd.f32 %v4481, %v4482
        %v4484 = vsel %vm3944, %v3893, 0.0
        %v4485 = vrot.slane %v4484, 4
        %v4486 = vadd.f32 %v4484, %v4485
        %v4487 = vrot.slane %v4486, 2
        %v4488 = vadd.f32 %v4486, %v4487
        %v4489 = vrot.slane %v4488, 1
        %v4490 = vadd.f32 %v4488, %v4489
        %v4491 = vsel %vm3944, %v3894, 0.0
        %v4492 = vrot.slane %v4491, 4
        %v4493 = vadd.f32 %v4491, %v4492
        %v4494 = vrot.slane %v4493, 2
        %v4495 = vadd.f32 %v4493, %v4494
        %v4496 = vrot.slane %v4495, 1
        %v4497 = vadd.f32 %v4495, %v4496
        %v4498 = vsel %vm3944, %v3895, 0.0
        %v4499 = vrot.slane %v4498, 4
        %v4500 = vadd.f32 %v4498, %v4499
        %v4501 = vrot.slane %v4500, 2
        %v4502 = vadd.f32 %v4500, %v4501
        %v4503 = vrot.slane %v4502, 1
        %v4504 = vadd.f32 %v4502, %v4503
        %v4505 = vsel %vm3944, %v3896, 0.0
        %v4506 = vrot.slane %v4505, 4
        %v4507 = vadd.f32 %v4505, %v4506
        %v4508 = vrot.slane %v4507, 2
        %v4509 = vadd.f32 %v4507, %v4508
        %v4510 = vrot.slane %v4509, 1
        %v4511 = vadd.f32 %v4509, %v4510
        %v4512 = vsel %vm3944, %v3897, 0.0
        %v4513 = vrot.slane %v4512, 4
        %v4514 = vadd.f32 %v4512, %v4513
        %v4515 = vrot.slane %v4514, 2
        %v4516 = vadd.f32 %v4514, %v4515
        %v4517 = vrot.slane %v4516, 1
        %v4518 = vadd.f32 %v4516, %v4517
        %v4519 = vsel %vm3944, %v3898, 0.0
        %v4520 = vrot.slane %v4519, 4
        %v4521 = vadd.f32 %v4519, %v4520
        %v4522 = vrot.slane %v4521, 2
        %v4523 = vadd.f32 %v4521, %v4522
        %v4524 = vrot.slane %v4523, 1
        %v4525 = vadd.f32 %v4523, %v4524
        %v4526 = vsel %vm3944, %v3899, 0.0
        %v4527 = vrot.slane %v4526, 4
        %v4528 = vadd.f32 %v4526, %v4527
        %v4529 = vrot.slane %v4528, 2
        %v4530 = vadd.f32 %v4528, %v4529
        %v4531 = vrot.slane %v4530, 1
        %v4532 = vadd.f32 %v4530, %v4531
        %v4533 = vsel %vm3944, %v3900, 0.0
        %v4534 = vrot.slane %v4533, 4
        %v4535 = vadd.f32 %v4533, %v4534
        %v4536 = vrot.slane %v4535, 2
        %v4537 = vadd.f32 %v4535, %v4536
        %v4538 = vrot.slane %v4537, 1
        %v4539 = vadd.f32 %v4537, %v4538
        %v4540 = vsel %vm3944, %v3901, 0.0
        %v4541 = vrot.slane %v4540, 4
        %v4542 = vadd.f32 %v4540, %v4541
        %v4543 = vrot.slane %v4542, 2
        %v4544 = vadd.f32 %v4542, %v4543
        %v4545 = vrot.slane %v4544, 1
        %v4546 = vadd.f32 %v4544, %v4545
        %v4547 = vsel %vm3944, %v3902, 0.0
        %v4548 = vrot.slane %v4547, 4
        %v4549 = vadd.f32 %v4547, %v4548
        %v4550 = vrot.slane %v4549, 2
        %v4551 = vadd.f32 %v4549, %v4550
        %v4552 = vrot.slane %v4551, 1
        %v4553 = vadd.f32 %v4551, %v4552
        %v4554 = vsel %vm3944, %v3903, 0.0
        %v4555 = vrot.slane %v4554, 4
        %v4556 = vadd.f32 %v4554, %v4555
        %v4557 = vrot.slane %v4556, 2
        %v4558 = vadd.f32 %v4556, %v4557
        %v4559 = vrot.slane %v4558, 1
        %v4560 = vadd.f32 %v4558, %v4559
        %v4561 = vsel %vm3944, %v3904, 0.0
        %v4562 = vrot.slane %v4561, 4
        %v4563 = vadd.f32 %v4561, %v4562
        %v4564 = vrot.slane %v4563, 2
        %v4565 = vadd.f32 %v4563, %v4564
        %v4566 = vrot.slane %v4565, 1
        %v4567 = vadd.f32 %v4565, %v4566
        %v4568 = vsel %vm3944, %v3905, 0.0
        %v4569 = vrot.slane %v4568, 4
        %v4570 = vadd.f32 %v4568, %v4569
        %v4571 = vrot.slane %v4570, 2
        %v4572 = vadd.f32 %v4570, %v4571
        %v4573 = vrot.slane %v4572, 1
        %v4574 = vadd.f32 %v4572, %v4573
        %v4575 = vsel %vm3944, %v3906, 0.0
        %v4576 = vrot.slane %v4575, 4
        %v4577 = vadd.f32 %v4575, %v4576
        %v4578 = vrot.slane %v4577, 2
        %v4579 = vadd.f32 %v4577, %v4578
        %v4580 = vrot.slane %v4579, 1
        %v4581 = vadd.f32 %v4579, %v4580
        %v4582 = vsel %vm3944, %v3907, 0.0
        %v4583 = vrot.slane %v4582, 4
        %v4584 = vadd.f32 %v4582, %v4583
        %v4585 = vrot.slane %v4584, 2
        %v4586 = vadd.f32 %v4584, %v4585
        %v4587 = vrot.slane %v4586, 1
        %v4588 = vadd.f32 %v4586, %v4587
        %v4589 = vsel %vm3944, %v3908, 0.0
        %v4590 = vrot.slane %v4589, 4
        %v4591 = vadd.f32 %v4589, %v4590
        %v4592 = vrot.slane %v4591, 2
        %v4593 = vadd.f32 %v4591, %v4592
        %v4594 = vrot.slane %v4593, 1
        %v4595 = vadd.f32 %v4593, %v4594
        %v4596 = vsel %vm3944, %v3909, 0.0
        %v4597 = vrot.slane %v4596, 4
        %v4598 = vadd.f32 %v4596, %v4597
        %v4599 = vrot.slane %v4598, 2
        %v4600 = vadd.f32 %v4598, %v4599
        %v4601 = vrot.slane %v4600, 1
        %v4602 = vadd.f32 %v4600, %v4601
        %v4603 = vsel %vm3944, %v3910, 0.0
        %v4604 = vrot.slane %v4603, 4
        %v4605 = vadd.f32 %v4603, %v4604
        %v4606 = vrot.slane %v4605, 2
        %v4607 = vadd.f32 %v4605, %v4606
        %v4608 = vrot.slane %v4607, 1
        %v4609 = vadd.f32 %v4607, %v4608
        %v4610 = vsel %vm3944, %v3911, 0.0
        %v4611 = vrot.slane %v4610, 4
        %v4612 = vadd.f32 %v4610, %v4611
        %v4613 = vrot.slane %v4612, 2
        %v4614 = vadd.f32 %v4612, %v4613
        %v4615 = vrot.slane %v4614, 1
        %v4616 = vadd.f32 %v4614, %v4615
        %v4617 = vsel %vm3944, %v3912, 0.0
        %v4618 = vrot.slane %v4617, 4
        %v4619 = vadd.f32 %v4617, %v4618
        %v4620 = vrot.slane %v4619, 2
        %v4621 = vadd.f32 %v4619, %v4620
        %v4622 = vrot.slane %v4621, 1
        %v4623 = vadd.f32 %v4621, %v4622
        %v4624 = vsel %vm3944, %v3913, 0.0
        %v4625 = vrot.slane %v4624, 4
        %v4626 = vadd.f32 %v4624, %v4625
        %v4627 = vrot.slane %v4626, 2
        %v4628 = vadd.f32 %v4626, %v4627
        %v4629 = vrot.slane %v4628, 1
        %v4630 = vadd.f32 %v4628, %v4629
        %v4631 = vsel %vm3944, %v3914, 0.0
        %v4632 = vrot.slane %v4631, 4
        %v4633 = vadd.f32 %v4631, %v4632
        %v4634 = vrot.slane %v4633, 2
        %v4635 = vadd.f32 %v4633, %v4634
        %v4636 = vrot.slane %v4635, 1
        %v4637 = vadd.f32 %v4635, %v4636
        %v4638 = vsel %vm3944, %v3915, 0.0
        %v4639 = vrot.slane %v4638, 4
        %v4640 = vadd.f32 %v4638, %v4639
        %v4641 = vrot.slane %v4640, 2
        %v4642 = vadd.f32 %v4640, %v4641
        %v4643 = vrot.slane %v4642, 1
        %v4644 = vadd.f32 %v4642, %v4643
        %v4645 = vsel %vm3944, %v3916, 0.0
        %v4646 = vrot.slane %v4645, 4
        %v4647 = vadd.f32 %v4645, %v4646
        %v4648 = vrot.slane %v4647, 2
        %v4649 = vadd.f32 %v4647, %v4648
        %v4650 = vrot.slane %v4649, 1
        %v4651 = vadd.f32 %v4649, %v4650
        %v4652 = vsel %vm3944, %v3917, 0.0
        %v4653 = vrot.slane %v4652, 4
        %v4654 = vadd.f32 %v4652, %v4653
        %v4655 = vrot.slane %v4654, 2
        %v4656 = vadd.f32 %v4654, %v4655
        %v4657 = vrot.slane %v4656, 1
        %v4658 = vadd.f32 %v4656, %v4657
        %v4659 = vsel %vm3944, %v3918, 0.0
        %v4660 = vrot.slane %v4659, 4
        %v4661 = vadd.f32 %v4659, %v4660
        %v4662 = vrot.slane %v4661, 2
        %v4663 = vadd.f32 %v4661, %v4662
        %v4664 = vrot.slane %v4663, 1
        %v4665 = vadd.f32 %v4663, %v4664
        %v4666 = vsel %vm3944, %v3919, 0.0
        %v4667 = vrot.slane %v4666, 4
        %v4668 = vadd.f32 %v4666, %v4667
        %v4669 = vrot.slane %v4668, 2
        %v4670 = vadd.f32 %v4668, %v4669
        %v4671 = vrot.slane %v4670, 1
        %v4672 = vadd.f32 %v4670, %v4671
        %v4673 = vsel %vm3944, %v3920, 0.0
        %v4674 = vrot.slane %v4673, 4
        %v4675 = vadd.f32 %v4673, %v4674
        %v4676 = vrot.slane %v4675, 2
        %v4677 = vadd.f32 %v4675, %v4676
        %v4678 = vrot.slane %v4677, 1
        %v4679 = vadd.f32 %v4677, %v4678
        %v4680 = vsel %vm3944, %v3921, 0.0
        %v4681 = vrot.slane %v4680, 4
        %v4682 = vadd.f32 %v4680, %v4681
        %v4683 = vrot.slane %v4682, 2
        %v4684 = vadd.f32 %v4682, %v4683
        %v4685 = vrot.slane %v4684, 1
        %v4686 = vadd.f32 %v4684, %v4685
        %v4687 = vsel %vm3944, %v3922, 0.0
        %v4688 = vrot.slane %v4687, 4
        %v4689 = vadd.f32 %v4687, %v4688
        %v4690 = vrot.slane %v4689, 2
        %v4691 = vadd.f32 %v4689, %v4690
        %v4692 = vrot.slane %v4691, 1
        %v4693 = vadd.f32 %v4691, %v4692
        %v4694 = vsel %vm3944, %v3923, 0.0
        %v4695 = vrot.slane %v4694, 4
        %v4696 = vadd.f32 %v4694, %v4695
        %v4697 = vrot.slane %v4696, 2
        %v4698 = vadd.f32 %v4696, %v4697
        %v4699 = vrot.slane %v4698, 1
        %v4700 = vadd.f32 %v4698, %v4699
        %v4701 = vsel %vm3944, %v3924, 0.0
        %v4702 = vrot.slane %v4701, 4
        %v4703 = vadd.f32 %v4701, %v4702
        %v4704 = vrot.slane %v4703, 2
        %v4705 = vadd.f32 %v4703, %v4704
        %v4706 = vrot.slane %v4705, 1
        %v4707 = vadd.f32 %v4705, %v4706
        %v4708 = vsel %vm3944, %v3925, 0.0
        %v4709 = vrot.slane %v4708, 4
        %v4710 = vadd.f32 %v4708, %v4709
        %v4711 = vrot.slane %v4710, 2
        %v4712 = vadd.f32 %v4710, %v4711
        %v4713 = vrot.slane %v4712, 1
        %v4714 = vadd.f32 %v4712, %v4713
        %v4715 = vsel %vm3944, %v3926, 0.0
        %v4716 = vrot.slane %v4715, 4
        %v4717 = vadd.f32 %v4715, %v4716
        %v4718 = vrot.slane %v4717, 2
        %v4719 = vadd.f32 %v4717, %v4718
        %v4720 = vrot.slane %v4719, 1
        %v4721 = vadd.f32 %v4719, %v4720
        %v4722 = vsel %vm3944, %v3927, 0.0
        %v4723 = vrot.slane %v4722, 4
        %v4724 = vadd.f32 %v4722, %v4723
        %v4725 = vrot.slane %v4724, 2
        %v4726 = vadd.f32 %v4724, %v4725
        %v4727 = vrot.slane %v4726, 1
        %v4728 = vadd.f32 %v4726, %v4727
        %v4729 = vsel %vm3944, %v3928, 0.0
        %v4730 = vrot.slane %v4729, 4
        %v4731 = vadd.f32 %v4729, %v4730
        %v4732 = vrot.slane %v4731, 2
        %v4733 = vadd.f32 %v4731, %v4732
        %v4734 = vrot.slane %v4733, 1
        %v4735 = vadd.f32 %v4733, %v4734
        %v4736 = vsel %vm3944, %v3929, 0.0
        %v4737 = vrot.slane %v4736, 4
        %v4738 = vadd.f32 %v4736, %v4737
        %v4739 = vrot.slane %v4738, 2
        %v4740 = vadd.f32 %v4738, %v4739
        %v4741 = vrot.slane %v4740, 1
        %v4742 = vadd.f32 %v4740, %v4741
        %v4743 = vsel %vm3944, %v3930, 0.0
        %v4744 = vrot.slane %v4743, 4
        %v4745 = vadd.f32 %v4743, %v4744
        %v4746 = vrot.slane %v4745, 2
        %v4747 = vadd.f32 %v4745, %v4746
        %v4748 = vrot.slane %v4747, 1
        %v4749 = vadd.f32 %v4747, %v4748
        %v4750 = vsel %vm3944, %v3931, 0.0
        %v4751 = vrot.slane %v4750, 4
        %v4752 = vadd.f32 %v4750, %v4751
        %v4753 = vrot.slane %v4752, 2
        %v4754 = vadd.f32 %v4752, %v4753
        %v4755 = vrot.slane %v4754, 1
        %v4756 = vadd.f32 %v4754, %v4755
        %v4757 = vsel %vm3944, %v3932, 0.0
        %v4758 = vrot.slane %v4757, 4
        %v4759 = vadd.f32 %v4757, %v4758
        %v4760 = vrot.slane %v4759, 2
        %v4761 = vadd.f32 %v4759, %v4760
        %v4762 = vrot.slane %v4761, 1
        %v4763 = vadd.f32 %v4761, %v4762
        %v4764 = vsel %vm3944, %v3933, 0.0
        %v4765 = vrot.slane %v4764, 4
        %v4766 = vadd.f32 %v4764, %v4765
        %v4767 = vrot.slane %v4766, 2
        %v4768 = vadd.f32 %v4766, %v4767
        %v4769 = vrot.slane %v4768, 1
        %v4770 = vadd.f32 %v4768, %v4769
        %v4771 = vsel %vm3944, %v3934, 0.0
        %v4772 = vrot.slane %v4771, 4
        %v4773 = vadd.f32 %v4771, %v4772
        %v4774 = vrot.slane %v4773, 2
        %v4775 = vadd.f32 %v4773, %v4774
        %v4776 = vrot.slane %v4775, 1
        %v4777 = vadd.f32 %v4775, %v4776
        %v4778 = vsel %vm3944, %v3935, 0.0
        %v4779 = vrot.slane %v4778, 4
        %v4780 = vadd.f32 %v4778, %v4779
        %v4781 = vrot.slane %v4780, 2
        %v4782 = vadd.f32 %v4780, %v4781
        %v4783 = vrot.slane %v4782, 1
        %v4784 = vadd.f32 %v4782, %v4783
        %v4785 = vsel %vm3944, %v3936, 0.0
        %v4786 = vrot.slane %v4785, 4
        %v4787 = vadd.f32 %v4785, %v4786
        %v4788 = vrot.slane %v4787, 2
        %v4789 = vadd.f32 %v4787, %v4788
        %v4790 = vrot.slane %v4789, 1
        %v4791 = vadd.f32 %v4789, %v4790
        %v4792 = vsel %vm3944, %v3937, 0.0
        %v4793 = vrot.slane %v4792, 4
        %v4794 = vadd.f32 %v4792, %v4793
        %v4795 = vrot.slane %v4794, 2
        %v4796 = vadd.f32 %v4794, %v4795
        %v4797 = vrot.slane %v4796, 1
        %v4798 = vadd.f32 %v4796, %v4797
        %v4799 = vsel %vm3944, %v3938, 0.0
        %v4800 = vrot.slane %v4799, 4
        %v4801 = vadd.f32 %v4799, %v4800
        %v4802 = vrot.slane %v4801, 2
        %v4803 = vadd.f32 %v4801, %v4802
        %v4804 = vrot.slane %v4803, 1
        %v4805 = vadd.f32 %v4803, %v4804
        %v4806 = vsel %vm3944, %v3939, 0.0
        %v4807 = vrot.slane %v4806, 4
        %v4808 = vadd.f32 %v4806, %v4807
        %v4809 = vrot.slane %v4808, 2
        %v4810 = vadd.f32 %v4808, %v4809
        %v4811 = vrot.slane %v4810, 1
        %v4812 = vadd.f32 %v4810, %v4811
        %v4813 = vsel %vm3944, %v3940, 0.0
        %v4814 = vrot.slane %v4813, 4
        %v4815 = vadd.f32 %v4813, %v4814
        %v4816 = vrot.slane %v4815, 2
        %v4817 = vadd.f32 %v4815, %v4816
        %v4818 = vrot.slane %v4817, 1
        %v4819 = vadd.f32 %v4817, %v4818
        %v4820 = vsel %vm3944, %v3941, 0.0
        %v4821 = vrot.slane %v4820, 4
        %v4822 = vadd.f32 %v4820, %v4821
        %v4823 = vrot.slane %v4822, 2
        %v4824 = vadd.f32 %v4822, %v4823
        %v4825 = vrot.slane %v4824, 1
        %v4826 = vadd.f32 %v4824, %v4825
        %v4827 = vsel %vm3944, %v3942, 0.0
        %v4828 = vrot.slane %v4827, 4
        %v4829 = vadd.f32 %v4827, %v4828
        %v4830 = vrot.slane %v4829, 2
        %v4831 = vadd.f32 %v4829, %v4830
        %v4832 = vrot.slane %v4831, 1
        %v4833 = vadd.f32 %v4831, %v4832
        %v4834 = vsel %vm3944, %v3943, 0.0
        %v4835 = vrot.slane %v4834, 4
        %v4836 = vadd.f32 %v4834, %v4835
        %v4837 = vrot.slane %v4836, 2
        %v4838 = vadd.f32 %v4836, %v4837
        %v4839 = vrot.slane %v4838, 1
        %v4840 = vadd.f32 %v4838, %v4839
        %v4841 = vld [vmem:[%s439] sm:$0xff]
        %v4842 = vld [vmem:[%s439 + $0x8] sm:$0xff]
        %v4843 = vld [vmem:[%s439 + $0x10] sm:$0xff]
        %v4844 = vld [vmem:[%s439 + $0x18] sm:$0xff]
        %v4845 = vld [vmem:[%s439 + $0x20] sm:$0xff]
        %v4846 = vld [vmem:[%s439 + $0x28] sm:$0xff]
        %v4847 = vld [vmem:[%s439 + $0x30] sm:$0xff]
        %v4848 = vld [vmem:[%s439 + $0x38] sm:$0xff]
        %v4849 = vld [vmem:[%s439 + $0x40] sm:$0xff]
        %v4850 = vld [vmem:[%s439 + $0x48] sm:$0xff]
        %v4851 = vld [vmem:[%s439 + $0x50] sm:$0xff]
        %v4852 = vld [vmem:[%s439 + $0x58] sm:$0xff]
        %v4853 = vld [vmem:[%s439 + $0x60] sm:$0xff]
        %v4854 = vld [vmem:[%s439 + $0x68] sm:$0xff]
        %v4855 = vld [vmem:[%s439 + $0x70] sm:$0xff]
        %v4856 = vld [vmem:[%s439 + $0x78] sm:$0xff]
        %v4857 = vld [vmem:[%s445] sm:$0xff]
        %v4858 = vld [vmem:[%s445 + $0x8] sm:$0xff]
        %v4859 = vld [vmem:[%s445 + $0x10] sm:$0xff]
        %v4860 = vld [vmem:[%s445 + $0x18] sm:$0xff]
        %v4861 = vld [vmem:[%s445 + $0x20] sm:$0xff]
        %v4862 = vld [vmem:[%s445 + $0x28] sm:$0xff]
        %v4863 = vld [vmem:[%s445 + $0x30] sm:$0xff]
        %v4864 = vld [vmem:[%s445 + $0x38] sm:$0xff]
        %v4865 = vld [vmem:[%s445 + $0x40] sm:$0xff]
        %v4866 = vld [vmem:[%s445 + $0x48] sm:$0xff]
        %v4867 = vld [vmem:[%s445 + $0x50] sm:$0xff]
        %v4868 = vld [vmem:[%s445 + $0x58] sm:$0xff]
        %v4869 = vld [vmem:[%s445 + $0x60] sm:$0xff]
        %v4870 = vld [vmem:[%s445 + $0x68] sm:$0xff]
        %v4871 = vld [vmem:[%s445 + $0x70] sm:$0xff]
        %v4872 = vld [vmem:[%s445 + $0x78] sm:$0xff]
        %vm5001 = vcmask 1041409
        %v5002 = vsel %vm5001, %v1504, %v1503
        %vm5003 = vcmask 1042434
        %v5004 = vsel %vm5003, %v1505, %v5002
        %vm5005 = vcmask 1043459
        %v5006 = vsel %vm5005, %v1506, %v5004
        %vm5007 = vcmask 1044484
        %v5008 = vsel %vm5007, %v1507, %v5006
        %vm5009 = vcmask 1045509
        %v5010 = vsel %vm5009, %v1508, %v5008
        %vm5011 = vcmask 1046534
        %v5012 = vsel %vm5011, %v1509, %v5010
        %vm5013 = vcmask 1047559
        %v5014 = vsel %vm5013, %v1510, %v5012
        %v5015 = vsel %vm5001, %v1512, %v1511
        %v5016 = vsel %vm5003, %v1513, %v5015
        %v5017 = vsel %vm5005, %v1514, %v5016
        %v5018 = vsel %vm5007, %v1515, %v5017
        %v5019 = vsel %vm5009, %v1516, %v5018
        %v5020 = vsel %vm5011, %v1517, %v5019
        %v5021 = vsel %vm5013, %v1518, %v5020
        %v5022 = vsel %vm5001, %v1520, %v1519
        %v5023 = vsel %vm5003, %v1521, %v5022
        %v5024 = vsel %vm5005, %v1522, %v5023
        %v5025 = vsel %vm5007, %v1523, %v5024
        %v5026 = vsel %vm5009, %v1524, %v5025
        %v5027 = vsel %vm5011, %v1525, %v5026
        %v5028 = vsel %vm5013, %v1526, %v5027
        %v5029 = vsel %vm5001, %v1528, %v1527
        %v5030 = vsel %vm5003, %v1529, %v5029
        %v5031 = vsel %vm5005, %v1530, %v5030
        %v5032 = vsel %vm5007, %v1531, %v5031
        %v5033 = vsel %vm5009, %v1532, %v5032
        %v5034 = vsel %vm5011, %v1533, %v5033
        %v5035 = vsel %vm5013, %v1534, %v5034
        %v5036 = vsel %vm5001, %v1536, %v1535
        %v5037 = vsel %vm5003, %v1537, %v5036
        %v5038 = vsel %vm5005, %v1538, %v5037
        %v5039 = vsel %vm5007, %v1539, %v5038
        %v5040 = vsel %vm5009, %v1540, %v5039
        %v5041 = vsel %vm5011, %v1541, %v5040
        %v5042 = vsel %vm5013, %v1542, %v5041
        %v5043 = vsel %vm5001, %v1544, %v1543
        %v5044 = vsel %vm5003, %v1545, %v5043
        %v5045 = vsel %vm5005, %v1546, %v5044
        %v5046 = vsel %vm5007, %v1547, %v5045
        %v5047 = vsel %vm5009, %v1548, %v5046
        %v5048 = vsel %vm5011, %v1549, %v5047
        %v5049 = vsel %vm5013, %v1550, %v5048
        %v5050 = vsel %vm5001, %v1552, %v1551
        %v5051 = vsel %vm5003, %v1553, %v5050
        %v5052 = vsel %vm5005, %v1554, %v5051
        %v5053 = vsel %vm5007, %v1555, %v5052
        %v5054 = vsel %vm5009, %v1556, %v5053
        %v5055 = vsel %vm5011, %v1557, %v5054
        %v5056 = vsel %vm5013, %v1558, %v5055
        %v5057 = vsel %vm5001, %v1560, %v1559
        %v5058 = vsel %vm5003, %v1561, %v5057
        %v5059 = vsel %vm5005, %v1562, %v5058
        %v5060 = vsel %vm5007, %v1563, %v5059
        %v5061 = vsel %vm5009, %v1564, %v5060
        %v5062 = vsel %vm5011, %v1565, %v5061
        %v5063 = vsel %vm5013, %v1566, %v5062
        %v5064 = vsel %vm5001, %v1568, %v1567
        %v5065 = vsel %vm5003, %v1569, %v5064
        %v5066 = vsel %vm5005, %v1570, %v5065
        %v5067 = vsel %vm5007, %v1571, %v5066
        %v5068 = vsel %vm5009, %v1572, %v5067
        %v5069 = vsel %vm5011, %v1573, %v5068
        %v5070 = vsel %vm5013, %v1574, %v5069
        %v5071 = vsel %vm5001, %v1576, %v1575
        %v5072 = vsel %vm5003, %v1577, %v5071
        %v5073 = vsel %vm5005, %v1578, %v5072
        %v5074 = vsel %vm5007, %v1579, %v5073
        %v5075 = vsel %vm5009, %v1580, %v5074
        %v5076 = vsel %vm5011, %v1581, %v5075
        %v5077 = vsel %vm5013, %v1582, %v5076
        %v5078 = vsel %vm5001, %v1584, %v1583
        %v5079 = vsel %vm5003, %v1585, %v5078
        %v5080 = vsel %vm5005, %v1586, %v5079
        %v5081 = vsel %vm5007, %v1587, %v5080
        %v5082 = vsel %vm5009, %v1588, %v5081
        %v5083 = vsel %vm5011, %v1589, %v5082
        %v5084 = vsel %vm5013, %v1590, %v5083
        %v5085 = vsel %vm5001, %v1592, %v1591
        %v5086 = vsel %vm5003, %v1593, %v5085
        %v5087 = vsel %vm5005, %v1594, %v5086
        %v5088 = vsel %vm5007, %v1595, %v5087
        %v5089 = vsel %vm5009, %v1596, %v5088
        %v5090 = vsel %vm5011, %v1597, %v5089
        %v5091 = vsel %vm5013, %v1598, %v5090
        %v5092 = vsel %vm5001, %v1600, %v1599
        %v5093 = vsel %vm5003, %v1601, %v5092
        %v5094 = vsel %vm5005, %v1602, %v5093
        %v5095 = vsel %vm5007, %v1603, %v5094
        %v5096 = vsel %vm5009, %v1604, %v5095
        %v5097 = vsel %vm5011, %v1605, %v5096
        %v5098 = vsel %vm5013, %v1606, %v5097
        %v5099 = vsel %vm5001, %v1608, %v1607
        %v5100 = vsel %vm5003, %v1609, %v5099
        %v5101 = vsel %vm5005, %v1610, %v5100
        %v5102 = vsel %vm5007, %v1611, %v5101
        %v5103 = vsel %vm5009, %v1612, %v5102
        %v5104 = vsel %vm5011, %v1613, %v5103
        %v5105 = vsel %vm5013, %v1614, %v5104
        %v5106 = vsel %vm5001, %v1616, %v1615
        %v5107 = vsel %vm5003, %v1617, %v5106
        %v5108 = vsel %vm5005, %v1618, %v5107
        %v5109 = vsel %vm5007, %v1619, %v5108
        %v5110 = vsel %vm5009, %v1620, %v5109
        %v5111 = vsel %vm5011, %v1621, %v5110
        %v5112 = vsel %vm5013, %v1622, %v5111
        %v5113 = vsel %vm5001, %v1624, %v1623
        %v5114 = vsel %vm5003, %v1625, %v5113
        %v5115 = vsel %vm5005, %v1626, %v5114
        %v5116 = vsel %vm5007, %v1627, %v5115
        %v5117 = vsel %vm5009, %v1628, %v5116
        %v5118 = vsel %vm5011, %v1629, %v5117
        %v5119 = vsel %vm5013, %v1630, %v5118
        %v5264 = vsel %vm5001, %v2664, %v2663
        %v5265 = vsel %vm5003, %v2665, %v5264
        %v5266 = vsel %vm5005, %v2666, %v5265
        %v5267 = vsel %vm5007, %v2667, %v5266
        %v5268 = vsel %vm5009, %v2668, %v5267
        %v5269 = vsel %vm5011, %v2669, %v5268
        %v5270 = vsel %vm5013, %v2670, %v5269
        %v5271 = vsel %vm5001, %v2672, %v2671
        %v5272 = vsel %vm5003, %v2673, %v5271
        %v5273 = vsel %vm5005, %v2674, %v5272
        %v5274 = vsel %vm5007, %v2675, %v5273
        %v5275 = vsel %vm5009, %v2676, %v5274
        %v5276 = vsel %vm5011, %v2677, %v5275
        %v5277 = vsel %vm5013, %v2678, %v5276
        %v5278 = vsel %vm5001, %v2680, %v2679
        %v5279 = vsel %vm5003, %v2681, %v5278
        %v5280 = vsel %vm5005, %v2682, %v5279
        %v5281 = vsel %vm5007, %v2683, %v5280
        %v5282 = vsel %vm5009, %v2684, %v5281
        %v5283 = vsel %vm5011, %v2685, %v5282
        %v5284 = vsel %vm5013, %v2686, %v5283
        %v5285 = vsel %vm5001, %v2688, %v2687
        %v5286 = vsel %vm5003, %v2689, %v5285
        %v5287 = vsel %vm5005, %v2690, %v5286
        %v5288 = vsel %vm5007, %v2691, %v5287
        %v5289 = vsel %vm5009, %v2692, %v5288
        %v5290 = vsel %vm5011, %v2693, %v5289
        %v5291 = vsel %vm5013, %v2694, %v5290
        %v5292 = vsel %vm5001, %v2696, %v2695
        %v5293 = vsel %vm5003, %v2697, %v5292
        %v5294 = vsel %vm5005, %v2698, %v5293
        %v5295 = vsel %vm5007, %v2699, %v5294
        %v5296 = vsel %vm5009, %v2700, %v5295
        %v5297 = vsel %vm5011, %v2701, %v5296
        %v5298 = vsel %vm5013, %v2702, %v5297
        %v5299 = vsel %vm5001, %v2704, %v2703
        %v5300 = vsel %vm5003, %v2705, %v5299
        %v5301 = vsel %vm5005, %v2706, %v5300
        %v5302 = vsel %vm5007, %v2707, %v5301
        %v5303 = vsel %vm5009, %v2708, %v5302
        %v5304 = vsel %vm5011, %v2709, %v5303
        %v5305 = vsel %vm5013, %v2710, %v5304
        %v5306 = vsel %vm5001, %v2712, %v2711
        %v5307 = vsel %vm5003, %v2713, %v5306
        %v5308 = vsel %vm5005, %v2714, %v5307
        %v5309 = vsel %vm5007, %v2715, %v5308
        %v5310 = vsel %vm5009, %v2716, %v5309
        %v5311 = vsel %vm5011, %v2717, %v5310
        %v5312 = vsel %vm5013, %v2718, %v5311
        %v5313 = vsel %vm5001, %v2720, %v2719
        %v5314 = vsel %vm5003, %v2721, %v5313
        %v5315 = vsel %vm5005, %v2722, %v5314
        %v5316 = vsel %vm5007, %v2723, %v5315
        %v5317 = vsel %vm5009, %v2724, %v5316
        %v5318 = vsel %vm5011, %v2725, %v5317
        %v5319 = vsel %vm5013, %v2726, %v5318
        %v5320 = vsel %vm5001, %v2728, %v2727
        %v5321 = vsel %vm5003, %v2729, %v5320
        %v5322 = vsel %vm5005, %v2730, %v5321
        %v5323 = vsel %vm5007, %v2731, %v5322
        %v5324 = vsel %vm5009, %v2732, %v5323
        %v5325 = vsel %vm5011, %v2733, %v5324
        %v5326 = vsel %vm5013, %v2734, %v5325
        %v5327 = vsel %vm5001, %v2736, %v2735
        %v5328 = vsel %vm5003, %v2737, %v5327
        %v5329 = vsel %vm5005, %v2738, %v5328
        %v5330 = vsel %vm5007, %v2739, %v5329
        %v5331 = vsel %vm5009, %v2740, %v5330
        %v5332 = vsel %vm5011, %v2741, %v5331
        %v5333 = vsel %vm5013, %v2742, %v5332
        %v5334 = vsel %vm5001, %v2744, %v2743
        %v5335 = vsel %vm5003, %v2745, %v5334
        %v5336 = vsel %vm5005, %v2746, %v5335
        %v5337 = vsel %vm5007, %v2747, %v5336
        %v5338 = vsel %vm5009, %v2748, %v5337
        %v5339 = vsel %vm5011, %v2749, %v5338
        %v5340 = vsel %vm5013, %v2750, %v5339
        %v5341 = vsel %vm5001, %v2752, %v2751
        %v5342 = vsel %vm5003, %v2753, %v5341
        %v5343 = vsel %vm5005, %v2754, %v5342
        %v5344 = vsel %vm5007, %v2755, %v5343
        %v5345 = vsel %vm5009, %v2756, %v5344
        %v5346 = vsel %vm5011, %v2757, %v5345
        %v5347 = vsel %vm5013, %v2758, %v5346
        %v5348 = vsel %vm5001, %v2760, %v2759
        %v5349 = vsel %vm5003, %v2761, %v5348
        %v5350 = vsel %vm5005, %v2762, %v5349
        %v5351 = vsel %vm5007, %v2763, %v5350
        %v5352 = vsel %vm5009, %v2764, %v5351
        %v5353 = vsel %vm5011, %v2765, %v5352
        %v5354 = vsel %vm5013, %v2766, %v5353
        %v5355 = vsel %vm5001, %v2768, %v2767
        %v5356 = vsel %vm5003, %v2769, %v5355
        %v5357 = vsel %vm5005, %v2770, %v5356
        %v5358 = vsel %vm5007, %v2771, %v5357
        %v5359 = vsel %vm5009, %v2772, %v5358
        %v5360 = vsel %vm5011, %v2773, %v5359
        %v5361 = vsel %vm5013, %v2774, %v5360
        %v5362 = vsel %vm5001, %v2776, %v2775
        %v5363 = vsel %vm5003, %v2777, %v5362
        %v5364 = vsel %vm5005, %v2778, %v5363
        %v5365 = vsel %vm5007, %v2779, %v5364
        %v5366 = vsel %vm5009, %v2780, %v5365
        %v5367 = vsel %vm5011, %v2781, %v5366
        %v5368 = vsel %vm5013, %v2782, %v5367
        %v5369 = vsel %vm5001, %v2784, %v2783
        %v5370 = vsel %vm5003, %v2785, %v5369
        %v5371 = vsel %vm5005, %v2786, %v5370
        %v5372 = vsel %vm5007, %v2787, %v5371
        %v5373 = vsel %vm5009, %v2788, %v5372
        %v5374 = vsel %vm5011, %v2789, %v5373
        %v5375 = vsel %vm5013, %v2790, %v5374
        %v5520 = vsel %vm5001, %v2933, %v2926
        %v5521 = vsel %vm5003, %v2940, %v5520
        %v5522 = vsel %vm5005, %v2947, %v5521
        %v5523 = vsel %vm5007, %v2954, %v5522
        %v5524 = vsel %vm5009, %v2961, %v5523
        %v5525 = vsel %vm5011, %v2968, %v5524
        %v5526 = vsel %vm5013, %v2975, %v5525
        %v5527 = vsel %vm5001, %v2989, %v2982
        %v5528 = vsel %vm5003, %v2996, %v5527
        %v5529 = vsel %vm5005, %v3003, %v5528
        %v5530 = vsel %vm5007, %v3010, %v5529
        %v5531 = vsel %vm5009, %v3017, %v5530
        %v5532 = vsel %vm5011, %v3024, %v5531
        %v5533 = vsel %vm5013, %v3031, %v5532
        %v5534 = vsel %vm5001, %v3045, %v3038
        %v5535 = vsel %vm5003, %v3052, %v5534
        %v5536 = vsel %vm5005, %v3059, %v5535
        %v5537 = vsel %vm5007, %v3066, %v5536
        %v5538 = vsel %vm5009, %v3073, %v5537
        %v5539 = vsel %vm5011, %v3080, %v5538
        %v5540 = vsel %vm5013, %v3087, %v5539
        %v5541 = vsel %vm5001, %v3101, %v3094
        %v5542 = vsel %vm5003, %v3108, %v5541
        %v5543 = vsel %vm5005, %v3115, %v5542
        %v5544 = vsel %vm5007, %v3122, %v5543
        %v5545 = vsel %vm5009, %v3129, %v5544
        %v5546 = vsel %vm5011, %v3136, %v5545
        %v5547 = vsel %vm5013, %v3143, %v5546
        %v5548 = vsel %vm5001, %v3157, %v3150
        %v5549 = vsel %vm5003, %v3164, %v5548
        %v5550 = vsel %vm5005, %v3171, %v5549
        %v5551 = vsel %vm5007, %v3178, %v5550
        %v5552 = vsel %vm5009, %v3185, %v5551
        %v5553 = vsel %vm5011, %v3192, %v5552
        %v5554 = vsel %vm5013, %v3199, %v5553
        %v5555 = vsel %vm5001, %v3213, %v3206
        %v5556 = vsel %vm5003, %v3220, %v5555
        %v5557 = vsel %vm5005, %v3227, %v5556
        %v5558 = vsel %vm5007, %v3234, %v5557
        %v5559 = vsel %vm5009, %v3241, %v5558
        %v5560 = vsel %vm5011, %v3248, %v5559
        %v5561 = vsel %vm5013, %v3255, %v5560
        %v5562 = vsel %vm5001, %v3269, %v3262
        %v5563 = vsel %vm5003, %v3276, %v5562
        %v5564 = vsel %vm5005, %v3283, %v5563
        %v5565 = vsel %vm5007, %v3290, %v5564
        %v5566 = vsel %vm5009, %v3297, %v5565
        %v5567 = vsel %vm5011, %v3304, %v5566
        %v5568 = vsel %vm5013, %v3311, %v5567
        %v5569 = vsel %vm5001, %v3325, %v3318
        %v5570 = vsel %vm5003, %v3332, %v5569
        %v5571 = vsel %vm5005, %v3339, %v5570
        %v5572 = vsel %vm5007, %v3346, %v5571
        %v5573 = vsel %vm5009, %v3353, %v5572
        %v5574 = vsel %vm5011, %v3360, %v5573
        %v5575 = vsel %vm5013, %v3367, %v5574
        %v5576 = vsel %vm5001, %v3381, %v3374
        %v5577 = vsel %vm5003, %v3388, %v5576
        %v5578 = vsel %vm5005, %v3395, %v5577
        %v5579 = vsel %vm5007, %v3402, %v5578
        %v5580 = vsel %vm5009, %v3409, %v5579
        %v5581 = vsel %vm5011, %v3416, %v5580
        %v5582 = vsel %vm5013, %v3423, %v5581
        %v5583 = vsel %vm5001, %v3437, %v3430
        %v5584 = vsel %vm5003, %v3444, %v5583
        %v5585 = vsel %vm5005, %v3451, %v5584
        %v5586 = vsel %vm5007, %v3458, %v5585
        %v5587 = vsel %vm5009, %v3465, %v5586
        %v5588 = vsel %vm5011, %v3472, %v5587
        %v5589 = vsel %vm5013, %v3479, %v5588
        %v5590 = vsel %vm5001, %v3493, %v3486
        %v5591 = vsel %vm5003, %v3500, %v5590
        %v5592 = vsel %vm5005, %v3507, %v5591
        %v5593 = vsel %vm5007, %v3514, %v5592
        %v5594 = vsel %vm5009, %v3521, %v5593
        %v5595 = vsel %vm5011, %v3528, %v5594
        %v5596 = vsel %vm5013, %v3535, %v5595
        %v5597 = vsel %vm5001, %v3549, %v3542
        %v5598 = vsel %vm5003, %v3556, %v5597
        %v5599 = vsel %vm5005, %v3563, %v5598
        %v5600 = vsel %vm5007, %v3570, %v5599
        %v5601 = vsel %vm5009, %v3577, %v5600
        %v5602 = vsel %vm5011, %v3584, %v5601
        %v5603 = vsel %vm5013, %v3591, %v5602
        %v5604 = vsel %vm5001, %v3605, %v3598
        %v5605 = vsel %vm5003, %v3612, %v5604
        %v5606 = vsel %vm5005, %v3619, %v5605
        %v5607 = vsel %vm5007, %v3626, %v5606
        %v5608 = vsel %vm5009, %v3633, %v5607
        %v5609 = vsel %vm5011, %v3640, %v5608
        %v5610 = vsel %vm5013, %v3647, %v5609
        %v5611 = vsel %vm5001, %v3661, %v3654
        %v5612 = vsel %vm5003, %v3668, %v5611
        %v5613 = vsel %vm5005, %v3675, %v5612
        %v5614 = vsel %vm5007, %v3682, %v5613
        %v5615 = vsel %vm5009, %v3689, %v5614
        %v5616 = vsel %vm5011, %v3696, %v5615
        %v5617 = vsel %vm5013, %v3703, %v5616
        %v5618 = vsel %vm5001, %v3717, %v3710
        %v5619 = vsel %vm5003, %v3724, %v5618
        %v5620 = vsel %vm5005, %v3731, %v5619
        %v5621 = vsel %vm5007, %v3738, %v5620
        %v5622 = vsel %vm5009, %v3745, %v5621
        %v5623 = vsel %vm5011, %v3752, %v5622
        %v5624 = vsel %vm5013, %v3759, %v5623
        %v5625 = vsel %vm5001, %v3773, %v3766
        %v5626 = vsel %vm5003, %v3780, %v5625
        %v5627 = vsel %vm5005, %v3787, %v5626
        %v5628 = vsel %vm5007, %v3794, %v5627
        %v5629 = vsel %vm5009, %v3801, %v5628
        %v5630 = vsel %vm5011, %v3808, %v5629
        %v5631 = vsel %vm5013, %v3815, %v5630
        %v5776 = vsel %vm5001, %v3958, %v3951
        %v5777 = vsel %vm5003, %v3965, %v5776
        %v5778 = vsel %vm5005, %v3972, %v5777
        %v5779 = vsel %vm5007, %v3979, %v5778
        %v5780 = vsel %vm5009, %v3986, %v5779
        %v5781 = vsel %vm5011, %v3993, %v5780
        %v5782 = vsel %vm5013, %v4000, %v5781
        %v5783 = vsel %vm5001, %v4014, %v4007
        %v5784 = vsel %vm5003, %v4021, %v5783
        %v5785 = vsel %vm5005, %v4028, %v5784
        %v5786 = vsel %vm5007, %v4035, %v5785
        %v5787 = vsel %vm5009, %v4042, %v5786
        %v5788 = vsel %vm5011, %v4049, %v5787
        %v5789 = vsel %vm5013, %v4056, %v5788
        %v5790 = vsel %vm5001, %v4070, %v4063
        %v5791 = vsel %vm5003, %v4077, %v5790
        %v5792 = vsel %vm5005, %v4084, %v5791
        %v5793 = vsel %vm5007, %v4091, %v5792
        %v5794 = vsel %vm5009, %v4098, %v5793
        %v5795 = vsel %vm5011, %v4105, %v5794
        %v5796 = vsel %vm5013, %v4112, %v5795
        %v5797 = vsel %vm5001, %v4126, %v4119
        %v5798 = vsel %vm5003, %v4133, %v5797
        %v5799 = vsel %vm5005, %v4140, %v5798
        %v5800 = vsel %vm5007, %v4147, %v5799
        %v5801 = vsel %vm5009, %v4154, %v5800
        %v5802 = vsel %vm5011, %v4161, %v5801
        %v5803 = vsel %vm5013, %v4168, %v5802
        %v5804 = vsel %vm5001, %v4182, %v4175
        %v5805 = vsel %vm5003, %v4189, %v5804
        %v5806 = vsel %vm5005, %v4196, %v5805
        %v5807 = vsel %vm5007, %v4203, %v5806
        %v5808 = vsel %vm5009, %v4210, %v5807
        %v5809 = vsel %vm5011, %v4217, %v5808
        %v5810 = vsel %vm5013, %v4224, %v5809
        %v5811 = vsel %vm5001, %v4238, %v4231
        %v5812 = vsel %vm5003, %v4245, %v5811
        %v5813 = vsel %vm5005, %v4252, %v5812
        %v5814 = vsel %vm5007, %v4259, %v5813
        %v5815 = vsel %vm5009, %v4266, %v5814
        %v5816 = vsel %vm5011, %v4273, %v5815
        %v5817 = vsel %vm5013, %v4280, %v5816
        %v5818 = vsel %vm5001, %v4294, %v4287
        %v5819 = vsel %vm5003, %v4301, %v5818
        %v5820 = vsel %vm5005, %v4308, %v5819
        %v5821 = vsel %vm5007, %v4315, %v5820
        %v5822 = vsel %vm5009, %v4322, %v5821
        %v5823 = vsel %vm5011, %v4329, %v5822
        %v5824 = vsel %vm5013, %v4336, %v5823
        %v5825 = vsel %vm5001, %v4350, %v4343
        %v5826 = vsel %vm5003, %v4357, %v5825
        %v5827 = vsel %vm5005, %v4364, %v5826
        %v5828 = vsel %vm5007, %v4371, %v5827
        %v5829 = vsel %vm5009, %v4378, %v5828
        %v5830 = vsel %vm5011, %v4385, %v5829
        %v5831 = vsel %vm5013, %v4392, %v5830
        %v5832 = vsel %vm5001, %v4406, %v4399
        %v5833 = vsel %vm5003, %v4413, %v5832
        %v5834 = vsel %vm5005, %v4420, %v5833
        %v5835 = vsel %vm5007, %v4427, %v5834
        %v5836 = vsel %vm5009, %v4434, %v5835
        %v5837 = vsel %vm5011, %v4441, %v5836
        %v5838 = vsel %vm5013, %v4448, %v5837
        %v5839 = vsel %vm5001, %v4462, %v4455
        %v5840 = vsel %vm5003, %v4469, %v5839
        %v5841 = vsel %vm5005, %v4476, %v5840
        %v5842 = vsel %vm5007, %v4483, %v5841
        %v5843 = vsel %vm5009, %v4490, %v5842
        %v5844 = vsel %vm5011, %v4497, %v5843
        %v5845 = vsel %vm5013, %v4504, %v5844
        %v5846 = vsel %vm5001, %v4518, %v4511
        %v5847 = vsel %vm5003, %v4525, %v5846
        %v5848 = vsel %vm5005, %v4532, %v5847
        %v5849 = vsel %vm5007, %v4539, %v5848
        %v5850 = vsel %vm5009, %v4546, %v5849
        %v5851 = vsel %vm5011, %v4553, %v5850
        %v5852 = vsel %vm5013, %v4560, %v5851
        %v5853 = vsel %vm5001, %v4574, %v4567
        %v5854 = vsel %vm5003, %v4581, %v5853
        %v5855 = vsel %vm5005, %v4588, %v5854
        %v5856 = vsel %vm5007, %v4595, %v5855
        %v5857 = vsel %vm5009, %v4602, %v5856
        %v5858 = vsel %vm5011, %v4609, %v5857
        %v5859 = vsel %vm5013, %v4616, %v5858
        %v5860 = vsel %vm5001, %v4630, %v4623
        %v5861 = vsel %vm5003, %v4637, %v5860
        %v5862 = vsel %vm5005, %v4644, %v5861
        %v5863 = vsel %vm5007, %v4651, %v5862
        %v5864 = vsel %vm5009, %v4658, %v5863
        %v5865 = vsel %vm5011, %v4665, %v5864
        %v5866 = vsel %vm5013, %v4672, %v5865
        %v5867 = vsel %vm5001, %v4686, %v4679
        %v5868 = vsel %vm5003, %v4693, %v5867
        %v5869 = vsel %vm5005, %v4700, %v5868
        %v5870 = vsel %vm5007, %v4707, %v5869
        %v5871 = vsel %vm5009, %v4714, %v5870
        %v5872 = vsel %vm5011, %v4721, %v5871
        %v5873 = vsel %vm5013, %v4728, %v5872
        %v5874 = vsel %vm5001, %v4742, %v4735
        %v5875 = vsel %vm5003, %v4749, %v5874
        %v5876 = vsel %vm5005, %v4756, %v5875
        %v5877 = vsel %vm5007, %v4763, %v5876
        %v5878 = vsel %vm5009, %v4770, %v5877
        %v5879 = vsel %vm5011, %v4777, %v5878
        %v5880 = vsel %vm5013, %v4784, %v5879
        %v5881 = vsel %vm5001, %v4798, %v4791
        %v5882 = vsel %vm5003, %v4805, %v5881
        %v5883 = vsel %vm5005, %v4812, %v5882
        %v5884 = vsel %vm5007, %v4819, %v5883
        %v5885 = vsel %vm5009, %v4826, %v5884
        %v5886 = vsel %vm5011, %v4833, %v5885
        %v5887 = vsel %vm5013, %v4840, %v5886
        %v5904 = vld [vmem:[%s6] sm:$0xff]
        %v5905 = vld [vmem:[%s6 + $0x8] sm:$0xff]
        %v5906 = vld [vmem:[%s6 + $0x10] sm:$0xff]
        %v5907 = vld [vmem:[%s6 + $0x18] sm:$0xff]
        %v5908 = vld [vmem:[%s6 + $0x20] sm:$0xff]
        %v5909 = vld [vmem:[%s6 + $0x28] sm:$0xff]
        %v5910 = vld [vmem:[%s6 + $0x30] sm:$0xff]
        %v5911 = vld [vmem:[%s6 + $0x38] sm:$0xff]
        %v5912 = vld [vmem:[%s6 + $0x40] sm:$0xff]
        %v5913 = vld [vmem:[%s6 + $0x48] sm:$0xff]
        %v5914 = vld [vmem:[%s6 + $0x50] sm:$0xff]
        %v5915 = vld [vmem:[%s6 + $0x58] sm:$0xff]
        %v5916 = vld [vmem:[%s6 + $0x60] sm:$0xff]
        %v5917 = vld [vmem:[%s6 + $0x68] sm:$0xff]
        %v5918 = vld [vmem:[%s6 + $0x70] sm:$0xff]
        %v5919 = vld [vmem:[%s6 + $0x78] sm:$0xff]
        %v5920 = vld [vmem:[%s6 + $0x80] sm:$0xff]
        %v5921 = vld [vmem:[%s6 + $0x88] sm:$0xff]
        %v5922 = vld [vmem:[%s6 + $0x90] sm:$0xff]
        %v5923 = vld [vmem:[%s6 + $0x98] sm:$0xff]
        %v5924 = vld [vmem:[%s6 + $0xa0] sm:$0xff]
        %v5925 = vld [vmem:[%s6 + $0xa8] sm:$0xff]
        %v5926 = vld [vmem:[%s6 + $0xb0] sm:$0xff]
        %v5927 = vld [vmem:[%s6 + $0xb8] sm:$0xff]
        %v5928 = vld [vmem:[%s6 + $0xc0] sm:$0xff]
        %v5929 = vld [vmem:[%s6 + $0xc8] sm:$0xff]
        %v5930 = vld [vmem:[%s6 + $0xd0] sm:$0xff]
        %v5931 = vld [vmem:[%s6 + $0xd8] sm:$0xff]
        %v5932 = vld [vmem:[%s6 + $0xe0] sm:$0xff]
        %v5933 = vld [vmem:[%s6 + $0xe8] sm:$0xff]
        %v5934 = vld [vmem:[%s6 + $0xf0] sm:$0xff]
        %v5935 = vld [vmem:[%s6 + $0xf8] sm:$0xff]
        %v5936 = vld [vmem:[%s6 + $0x100] sm:$0xff]
        %v5937 = vld [vmem:[%s6 + $0x108] sm:$0xff]
        %v5938 = vld [vmem:[%s6 + $0x110] sm:$0xff]
        %v5939 = vld [vmem:[%s6 + $0x118] sm:$0xff]
        %v5940 = vld [vmem:[%s6 + $0x120] sm:$0xff]
        %v5941 = vld [vmem:[%s6 + $0x128] sm:$0xff]
        %v5942 = vld [vmem:[%s6 + $0x130] sm:$0xff]
        %v5943 = vld [vmem:[%s6 + $0x138] sm:$0xff]
        %v5944 = vld [vmem:[%s6 + $0x140] sm:$0xff]
        %v5945 = vld [vmem:[%s6 + $0x148] sm:$0xff]
        %v5946 = vld [vmem:[%s6 + $0x150] sm:$0xff]
        %v5947 = vld [vmem:[%s6 + $0x158] sm:$0xff]
        %v5948 = vld [vmem:[%s6 + $0x160] sm:$0xff]
        %v5949 = vld [vmem:[%s6 + $0x168] sm:$0xff]
        %v5950 = vld [vmem:[%s6 + $0x170] sm:$0xff]
        %v5951 = vld [vmem:[%s6 + $0x178] sm:$0xff]
        %v5952 = vld [vmem:[%s6 + $0x180] sm:$0xff]
        %v5953 = vld [vmem:[%s6 + $0x188] sm:$0xff]
        %v5954 = vld [vmem:[%s6 + $0x190] sm:$0xff]
        %v5955 = vld [vmem:[%s6 + $0x198] sm:$0xff]
        %v5956 = vld [vmem:[%s6 + $0x1a0] sm:$0xff]
        %v5957 = vld [vmem:[%s6 + $0x1a8] sm:$0xff]
        %v5958 = vld [vmem:[%s6 + $0x1b0] sm:$0xff]
        %v5959 = vld [vmem:[%s6 + $0x1b8] sm:$0xff]
        %v5960 = vld [vmem:[%s6 + $0x1c0] sm:$0xff]
        %v5961 = vld [vmem:[%s6 + $0x1c8] sm:$0xff]
        %v5962 = vld [vmem:[%s6 + $0x1d0] sm:$0xff]
        %v5963 = vld [vmem:[%s6 + $0x1d8] sm:$0xff]
        %v5964 = vld [vmem:[%s6 + $0x1e0] sm:$0xff]
        %v5965 = vld [vmem:[%s6 + $0x1e8] sm:$0xff]
        %v5966 = vld [vmem:[%s6 + $0x1f0] sm:$0xff]
        %v5967 = vld [vmem:[%s6 + $0x1f8] sm:$0xff]
        %v5968 = vld [vmem:[%s6 + $0x200] sm:$0xff]
        %v5969 = vld [vmem:[%s6 + $0x208] sm:$0xff]
        %v5970 = vld [vmem:[%s6 + $0x210] sm:$0xff]
        %v5971 = vld [vmem:[%s6 + $0x218] sm:$0xff]
        %v5972 = vld [vmem:[%s6 + $0x220] sm:$0xff]
        %v5973 = vld [vmem:[%s6 + $0x228] sm:$0xff]
        %v5974 = vld [vmem:[%s6 + $0x230] sm:$0xff]
        %v5975 = vld [vmem:[%s6 + $0x238] sm:$0xff]
        %v5976 = vld [vmem:[%s6 + $0x240] sm:$0xff]
        %v5977 = vld [vmem:[%s6 + $0x248] sm:$0xff]
        %v5978 = vld [vmem:[%s6 + $0x250] sm:$0xff]
        %v5979 = vld [vmem:[%s6 + $0x258] sm:$0xff]
        %v5980 = vld [vmem:[%s6 + $0x260] sm:$0xff]
        %v5981 = vld [vmem:[%s6 + $0x268] sm:$0xff]
        %v5982 = vld [vmem:[%s6 + $0x270] sm:$0xff]
        %v5983 = vld [vmem:[%s6 + $0x278] sm:$0xff]
        %v5984 = vld [vmem:[%s6 + $0x280] sm:$0xff]
        %v5985 = vld [vmem:[%s6 + $0x288] sm:$0xff]
        %v5986 = vld [vmem:[%s6 + $0x290] sm:$0xff]
        %v5987 = vld [vmem:[%s6 + $0x298] sm:$0xff]
        %v5988 = vld [vmem:[%s6 + $0x2a0] sm:$0xff]
        %v5989 = vld [vmem:[%s6 + $0x2a8] sm:$0xff]
        %v5990 = vld [vmem:[%s6 + $0x2b0] sm:$0xff]
        %v5991 = vld [vmem:[%s6 + $0x2b8] sm:$0xff]
        %v5992 = vld [vmem:[%s6 + $0x2c0] sm:$0xff]
        %v5993 = vld [vmem:[%s6 + $0x2c8] sm:$0xff]
        %v5994 = vld [vmem:[%s6 + $0x2d0] sm:$0xff]
        %v5995 = vld [vmem:[%s6 + $0x2d8] sm:$0xff]
        %v5996 = vld [vmem:[%s6 + $0x2e0] sm:$0xff]
        %v5997 = vld [vmem:[%s6 + $0x2e8] sm:$0xff]
        %v5998 = vld [vmem:[%s6 + $0x2f0] sm:$0xff]
        %v5999 = vld [vmem:[%s6 + $0x2f8] sm:$0xff]
        %v6000 = vld [vmem:[%s7] sm:$0x1]
        %v6002 = vperm.slane %v6000, 0
        %6004 = vmatpush.msra.mxu0 %v5919
        %6005 = vmatpush.msra.mxu0 %v5918
        %6006 = vmatpush.msra.mxu0 %v5917
        %6007 = vmatpush.msra.mxu0 %v5916
        %6008 = vmatpush.msra.mxu0 %v5915
        %6009 = vmatpush.msra.mxu0 %v5914
        %6010 = vmatpush.msra.mxu0 %v5913
        %6011 = vmatpush.msra.mxu0 %v5912
        %6012 = vmatpush.msra.mxu0 %v5911
        %6013 = vmatpush.msra.mxu0 %v5910
        %6014 = vmatpush.msra.mxu0 %v5909
        %6015 = vmatpush.msra.mxu0 %v5908
        %6016 = vmatpush.msra.mxu0 %v5907
        %6017 = vmatpush.msra.mxu0 %v5906
        %6018 = vmatpush.msra.mxu0 %v5905
        %6019 = vmatpush.msra.mxu0 %v5904
        %6020 = vmatmul.f32.gmra.mxu0 %v4841
        %v6021 = vpop.f32.mrf.mxu0
        %v6022 = vadd.f32 %v6002, %v6021
        %6023 = vmatmul.f32.gmra.mxu0 %v4842
        %v6024 = vpop.f32.mrf.mxu0
        %v6025 = vadd.f32 %v6002, %v6024
        %6026 = vmatmul.f32.gmra.mxu0 %v4843
        %v6027 = vpop.f32.mrf.mxu0
        %v6028 = vadd.f32 %v6002, %v6027
        %6029 = vmatmul.f32.gmra.mxu0 %v4844
        %v6030 = vpop.f32.mrf.mxu0
        %v6031 = vadd.f32 %v6002, %v6030
        %6032 = vmatmul.f32.gmra.mxu0 %v4845
        %v6033 = vpop.f32.mrf.mxu0
        %v6034 = vadd.f32 %v6002, %v6033
        %6035 = vmatmul.f32.gmra.mxu0 %v4846
        %v6036 = vpop.f32.mrf.mxu0
        %v6037 = vadd.f32 %v6002, %v6036
        %6038 = vmatmul.f32.gmra.mxu0 %v4847
        %v6039 = vpop.f32.mrf.mxu0
        %v6040 = vadd.f32 %v6002, %v6039
        %6041 = vmatmul.f32.gmra.mxu0 %v4848
        %v6042 = vpop.f32.mrf.mxu0
        %v6043 = vadd.f32 %v6002, %v6042
        %6044 = vmatmul.f32.gmra.mxu0 %v4849
        %v6045 = vpop.f32.mrf.mxu0
        %v6046 = vadd.f32 %v6002, %v6045
        %6047 = vmatmul.f32.gmra.mxu0 %v4850
        %v6048 = vpop.f32.mrf.mxu0
        %v6049 = vadd.f32 %v6002, %v6048
        %6050 = vmatmul.f32.gmra.mxu0 %v4851
        %v6051 = vpop.f32.mrf.mxu0
        %v6052 = vadd.f32 %v6002, %v6051
        %6053 = vmatmul.f32.gmra.mxu0 %v4852
        %v6054 = vpop.f32.mrf.mxu0
        %v6055 = vadd.f32 %v6002, %v6054
        %6056 = vmatmul.f32.gmra.mxu0 %v4853
        %v6057 = vpop.f32.mrf.mxu0
        %v6058 = vadd.f32 %v6002, %v6057
        %6059 = vmatmul.f32.gmra.mxu0 %v4854
        %v6060 = vpop.f32.mrf.mxu0
        %v6061 = vadd.f32 %v6002, %v6060
        %6062 = vmatmul.f32.gmra.mxu0 %v4855
        %v6063 = vpop.f32.mrf.mxu0
        %v6064 = vadd.f32 %v6002, %v6063
        %6065 = vmatmul.f32.gmra.mxu0 %v4856
        %v6066 = vpop.f32.mrf.mxu0
        %v6067 = vadd.f32 %v6002, %v6066
        %6068 = vdwg.mxu0
        %6069 = vmatpush.msra.mxu0 %v5935
        %6070 = vmatpush.msra.mxu0 %v5934
        %6071 = vmatpush.msra.mxu0 %v5933
        %6072 = vmatpush.msra.mxu0 %v5932
        %6073 = vmatpush.msra.mxu0 %v5931
        %6074 = vmatpush.msra.mxu0 %v5930
        %6075 = vmatpush.msra.mxu0 %v5929
        %6076 = vmatpush.msra.mxu0 %v5928
        %6077 = vmatpush.msra.mxu0 %v5927
        %6078 = vmatpush.msra.mxu0 %v5926
        %6079 = vmatpush.msra.mxu0 %v5925
        %6080 = vmatpush.msra.mxu0 %v5924
        %6081 = vmatpush.msra.mxu0 %v5923
        %6082 = vmatpush.msra.mxu0 %v5922
        %6083 = vmatpush.msra.mxu0 %v5921
        %6084 = vmatpush.msra.mxu0 %v5920
        %6085 = vmatmul.f32.gmra.mxu0 %v4857
        %v6086 = vpop.f32.mrf.mxu0
        %v6087 = vadd.f32 %v6022, %v6086
        %6088 = vmatmul.f32.gmra.mxu0 %v4858
        %v6089 = vpop.f32.mrf.mxu0
        %v6090 = vadd.f32 %v6025, %v6089
        %6091 = vmatmul.f32.gmra.mxu0 %v4859
        %v6092 = vpop.f32.mrf.mxu0
        %v6093 = vadd.f32 %v6028, %v6092
        %6094 = vmatmul.f32.gmra.mxu0 %v4860
        %v6095 = vpop.f32.mrf.mxu0
        %v6096 = vadd.f32 %v6031, %v6095
        %6097 = vmatmul.f32.gmra.mxu0 %v4861
        %v6098 = vpop.f32.mrf.mxu0
        %v6099 = vadd.f32 %v6034, %v6098
        %6100 = vmatmul.f32.gmra.mxu0 %v4862
        %v6101 = vpop.f32.mrf.mxu0
        %v6102 = vadd.f32 %v6037, %v6101
        %6103 = vmatmul.f32.gmra.mxu0 %v4863
        %v6104 = vpop.f32.mrf.mxu0
        %v6105 = vadd.f32 %v6040, %v6104
        %6106 = vmatmul.f32.gmra.mxu0 %v4864
        %v6107 = vpop.f32.mrf.mxu0
        %v6108 = vadd.f32 %v6043, %v6107
        %6109 = vmatmul.f32.gmra.mxu0 %v4865
        %v6110 = vpop.f32.mrf.mxu0
        %v6111 = vadd.f32 %v6046, %v6110
        %6112 = vmatmul.f32.gmra.mxu0 %v4866
        %v6113 = vpop.f32.mrf.mxu0
        %v6114 = vadd.f32 %v6049, %v6113
        %6115 = vmatmul.f32.gmra.mxu0 %v4867
        %v6116 = vpop.f32.mrf.mxu0
        %v6117 = vadd.f32 %v6052, %v6116
        %6118 = vmatmul.f32.gmra.mxu0 %v4868
        %v6119 = vpop.f32.mrf.mxu0
        %v6120 = vadd.f32 %v6055, %v6119
        %6121 = vmatmul.f32.gmra.mxu0 %v4869
        %v6122 = vpop.f32.mrf.mxu0
        %v6123 = vadd.f32 %v6058, %v6122
        %6124 = vmatmul.f32.gmra.mxu0 %v4870
        %v6125 = vpop.f32.mrf.mxu0
        %v6126 = vadd.f32 %v6061, %v6125
        %6127 = vmatmul.f32.gmra.mxu0 %v4871
        %v6128 = vpop.f32.mrf.mxu0
        %v6129 = vadd.f32 %v6064, %v6128
        %6130 = vmatmul.f32.gmra.mxu0 %v4872
        %v6131 = vpop.f32.mrf.mxu0
        %v6132 = vadd.f32 %v6067, %v6131
        %6133 = vdwg.mxu0
        %6134 = vmatpush.msra.mxu0 %v5951
        %6135 = vmatpush.msra.mxu0 %v5950
        %6136 = vmatpush.msra.mxu0 %v5949
        %6137 = vmatpush.msra.mxu0 %v5948
        %6138 = vmatpush.msra.mxu0 %v5947
        %6139 = vmatpush.msra.mxu0 %v5946
        %6140 = vmatpush.msra.mxu0 %v5945
        %6141 = vmatpush.msra.mxu0 %v5944
        %6142 = vmatpush.msra.mxu0 %v5943
        %6143 = vmatpush.msra.mxu0 %v5942
        %6144 = vmatpush.msra.mxu0 %v5941
        %6145 = vmatpush.msra.mxu0 %v5940
        %6146 = vmatpush.msra.mxu0 %v5939
        %6147 = vmatpush.msra.mxu0 %v5938
        %6148 = vmatpush.msra.mxu0 %v5937
        %6149 = vmatpush.msra.mxu0 %v5936
        %6150 = vmatmul.f32.gmra.mxu0 %v5014
        %v6151 = vpop.f32.mrf.mxu0
        %v6152 = vadd.f32 %v6087, %v6151
        %6153 = vmatmul.f32.gmra.mxu0 %v5021
        %v6154 = vpop.f32.mrf.mxu0
        %v6155 = vadd.f32 %v6090, %v6154
        %6156 = vmatmul.f32.gmra.mxu0 %v5028
        %v6157 = vpop.f32.mrf.mxu0
        %v6158 = vadd.f32 %v6093, %v6157
        %6159 = vmatmul.f32.gmra.mxu0 %v5035
        %v6160 = vpop.f32.mrf.mxu0
        %v6161 = vadd.f32 %v6096, %v6160
        %6162 = vmatmul.f32.gmra.mxu0 %v5042
        %v6163 = vpop.f32.mrf.mxu0
        %v6164 = vadd.f32 %v6099, %v6163
        %6165 = vmatmul.f32.gmra.mxu0 %v5049
        %v6166 = vpop.f32.mrf.mxu0
        %v6167 = vadd.f32 %v6102, %v6166
        %6168 = vmatmul.f32.gmra.mxu0 %v5056
        %v6169 = vpop.f32.mrf.mxu0
        %v6170 = vadd.f32 %v6105, %v6169
        %6171 = vmatmul.f32.gmra.mxu0 %v5063
        %v6172 = vpop.f32.mrf.mxu0
        %v6173 = vadd.f32 %v6108, %v6172
        %6174 = vmatmul.f32.gmra.mxu0 %v5070
        %v6175 = vpop.f32.mrf.mxu0
        %v6176 = vadd.f32 %v6111, %v6175
        %6177 = vmatmul.f32.gmra.mxu0 %v5077
        %v6178 = vpop.f32.mrf.mxu0
        %v6179 = vadd.f32 %v6114, %v6178
        %6180 = vmatmul.f32.gmra.mxu0 %v5084
        %v6181 = vpop.f32.mrf.mxu0
        %v6182 = vadd.f32 %v6117, %v6181
        %6183 = vmatmul.f32.gmra.mxu0 %v5091
        %v6184 = vpop.f32.mrf.mxu0
        %v6185 = vadd.f32 %v6120, %v6184
        %6186 = vmatmul.f32.gmra.mxu0 %v5098
        %v6187 = vpop.f32.mrf.mxu0
        %v6188 = vadd.f32 %v6123, %v6187
        %6189 = vmatmul.f32.gmra.mxu0 %v5105
        %v6190 = vpop.f32.mrf.mxu0
        %v6191 = vadd.f32 %v6126, %v6190
        %6192 = vmatmul.f32.gmra.mxu0 %v5112
        %v6193 = vpop.f32.mrf.mxu0
        %v6194 = vadd.f32 %v6129, %v6193
        %6195 = vmatmul.f32.gmra.mxu0 %v5119
        %v6196 = vpop.f32.mrf.mxu0
        %v6197 = vadd.f32 %v6132, %v6196
        %6198 = vdwg.mxu0
        %6199 = vmatpush.msra.mxu0 %v5967
        %6200 = vmatpush.msra.mxu0 %v5966
        %6201 = vmatpush.msra.mxu0 %v5965
        %6202 = vmatpush.msra.mxu0 %v5964
        %6203 = vmatpush.msra.mxu0 %v5963
        %6204 = vmatpush.msra.mxu0 %v5962
        %6205 = vmatpush.msra.mxu0 %v5961
        %6206 = vmatpush.msra.mxu0 %v5960
        %6207 = vmatpush.msra.mxu0 %v5959
        %6208 = vmatpush.msra.mxu0 %v5958
        %6209 = vmatpush.msra.mxu0 %v5957
        %6210 = vmatpush.msra.mxu0 %v5956
        %6211 = vmatpush.msra.mxu0 %v5955
        %6212 = vmatpush.msra.mxu0 %v5954
        %6213 = vmatpush.msra.mxu0 %v5953
        %6214 = vmatpush.msra.mxu0 %v5952
        %6215 = vmatmul.f32.gmra.mxu0 %v5270
        %v6216 = vpop.f32.mrf.mxu0
        %v6217 = vadd.f32 %v6152, %v6216
        %6218 = vmatmul.f32.gmra.mxu0 %v5277
        %v6219 = vpop.f32.mrf.mxu0
        %v6220 = vadd.f32 %v6155, %v6219
        %6221 = vmatmul.f32.gmra.mxu0 %v5284
        %v6222 = vpop.f32.mrf.mxu0
        %v6223 = vadd.f32 %v6158, %v6222
        %6224 = vmatmul.f32.gmra.mxu0 %v5291
        %v6225 = vpop.f32.mrf.mxu0
        %v6226 = vadd.f32 %v6161, %v6225
        %6227 = vmatmul.f32.gmra.mxu0 %v5298
        %v6228 = vpop.f32.mrf.mxu0
        %v6229 = vadd.f32 %v6164, %v6228
        %6230 = vmatmul.f32.gmra.mxu0 %v5305
        %v6231 = vpop.f32.mrf.mxu0
        %v6232 = vadd.f32 %v6167, %v6231
        %6233 = vmatmul.f32.gmra.mxu0 %v5312
        %v6234 = vpop.f32.mrf.mxu0
        %v6235 = vadd.f32 %v6170, %v6234
        %6236 = vmatmul.f32.gmra.mxu0 %v5319
        %v6237 = vpop.f32.mrf.mxu0
        %v6238 = vadd.f32 %v6173, %v6237
        %6239 = vmatmul.f32.gmra.mxu0 %v5326
        %v6240 = vpop.f32.mrf.mxu0
        %v6241 = vadd.f32 %v6176, %v6240
        %6242 = vmatmul.f32.gmra.mxu0 %v5333
        %v6243 = vpop.f32.mrf.mxu0
        %v6244 = vadd.f32 %v6179, %v6243
        %6245 = vmatmul.f32.gmra.mxu0 %v5340
        %v6246 = vpop.f32.mrf.mxu0
        %v6247 = vadd.f32 %v6182, %v6246
        %6248 = vmatmul.f32.gmra.mxu0 %v5347
        %v6249 = vpop.f32.mrf.mxu0
        %v6250 = vadd.f32 %v6185, %v6249
        %6251 = vmatmul.f32.gmra.mxu0 %v5354
        %v6252 = vpop.f32.mrf.mxu0
        %v6253 = vadd.f32 %v6188, %v6252
        %6254 = vmatmul.f32.gmra.mxu0 %v5361
        %v6255 = vpop.f32.mrf.mxu0
        %v6256 = vadd.f32 %v6191, %v6255
        %6257 = vmatmul.f32.gmra.mxu0 %v5368
        %v6258 = vpop.f32.mrf.mxu0
        %v6259 = vadd.f32 %v6194, %v6258
        %6260 = vmatmul.f32.gmra.mxu0 %v5375
        %v6261 = vpop.f32.mrf.mxu0
        %v6262 = vadd.f32 %v6197, %v6261
        %6263 = vdwg.mxu0
        %6264 = vmatpush.msra.mxu0 %v5983
        %6265 = vmatpush.msra.mxu0 %v5982
        %6266 = vmatpush.msra.mxu0 %v5981
        %6267 = vmatpush.msra.mxu0 %v5980
        %6268 = vmatpush.msra.mxu0 %v5979
        %6269 = vmatpush.msra.mxu0 %v5978
        %6270 = vmatpush.msra.mxu0 %v5977
        %6271 = vmatpush.msra.mxu0 %v5976
        %6272 = vmatpush.msra.mxu0 %v5975
        %6273 = vmatpush.msra.mxu0 %v5974
        %6274 = vmatpush.msra.mxu0 %v5973
        %6275 = vmatpush.msra.mxu0 %v5972
        %6276 = vmatpush.msra.mxu0 %v5971
        %6277 = vmatpush.msra.mxu0 %v5970
        %6278 = vmatpush.msra.mxu0 %v5969
        %6279 = vmatpush.msra.mxu0 %v5968
        %6280 = vmatmul.f32.gmra.mxu0 %v5526
        %v6281 = vpop.f32.mrf.mxu0
        %v6282 = vadd.f32 %v6217, %v6281
        %6283 = vmatmul.f32.gmra.mxu0 %v5533
        %v6284 = vpop.f32.mrf.mxu0
        %v6285 = vadd.f32 %v6220, %v6284
        %6286 = vmatmul.f32.gmra.mxu0 %v5540
        %v6287 = vpop.f32.mrf.mxu0
        %v6288 = vadd.f32 %v6223, %v6287
        %6289 = vmatmul.f32.gmra.mxu0 %v5547
        %v6290 = vpop.f32.mrf.mxu0
        %v6291 = vadd.f32 %v6226, %v6290
        %6292 = vmatmul.f32.gmra.mxu0 %v5554
        %v6293 = vpop.f32.mrf.mxu0
        %v6294 = vadd.f32 %v6229, %v6293
        %6295 = vmatmul.f32.gmra.mxu0 %v5561
        %v6296 = vpop.f32.mrf.mxu0
        %v6297 = vadd.f32 %v6232, %v6296
        %6298 = vmatmul.f32.gmra.mxu0 %v5568
        %v6299 = vpop.f32.mrf.mxu0
        %v6300 = vadd.f32 %v6235, %v6299
        %6301 = vmatmul.f32.gmra.mxu0 %v5575
        %v6302 = vpop.f32.mrf.mxu0
        %v6303 = vadd.f32 %v6238, %v6302
        %6304 = vmatmul.f32.gmra.mxu0 %v5582
        %v6305 = vpop.f32.mrf.mxu0
        %v6306 = vadd.f32 %v6241, %v6305
        %6307 = vmatmul.f32.gmra.mxu0 %v5589
        %v6308 = vpop.f32.mrf.mxu0
        %v6309 = vadd.f32 %v6244, %v6308
        %6310 = vmatmul.f32.gmra.mxu0 %v5596
        %v6311 = vpop.f32.mrf.mxu0
        %v6312 = vadd.f32 %v6247, %v6311
        %6313 = vmatmul.f32.gmra.mxu0 %v5603
        %v6314 = vpop.f32.mrf.mxu0
        %v6315 = vadd.f32 %v6250, %v6314
        %6316 = vmatmul.f32.gmra.mxu0 %v5610
        %v6317 = vpop.f32.mrf.mxu0
        %v6318 = vadd.f32 %v6253, %v6317
        %6319 = vmatmul.f32.gmra.mxu0 %v5617
        %v6320 = vpop.f32.mrf.mxu0
        %v6321 = vadd.f32 %v6256, %v6320
        %6322 = vmatmul.f32.gmra.mxu0 %v5624
        %v6323 = vpop.f32.mrf.mxu0
        %v6324 = vadd.f32 %v6259, %v6323
        %6325 = vmatmul.f32.gmra.mxu0 %v5631
        %v6326 = vpop.f32.mrf.mxu0
        %v6327 = vadd.f32 %v6262, %v6326
        %6328 = vdwg.mxu0
        %6329 = vmatpush.msra.mxu0 %v5999
        %6330 = vmatpush.msra.mxu0 %v5998
        %6331 = vmatpush.msra.mxu0 %v5997
        %6332 = vmatpush.msra.mxu0 %v5996
        %6333 = vmatpush.msra.mxu0 %v5995
        %6334 = vmatpush.msra.mxu0 %v5994
        %6335 = vmatpush.msra.mxu0 %v5993
        %6336 = vmatpush.msra.mxu0 %v5992
        %6337 = vmatpush.msra.mxu0 %v5991
        %6338 = vmatpush.msra.mxu0 %v5990
        %6339 = vmatpush.msra.mxu0 %v5989
        %6340 = vmatpush.msra.mxu0 %v5988
        %6341 = vmatpush.msra.mxu0 %v5987
        %6342 = vmatpush.msra.mxu0 %v5986
        %6343 = vmatpush.msra.mxu0 %v5985
        %6344 = vmatpush.msra.mxu0 %v5984
        %6345 = vmatmul.f32.gmra.mxu0 %v5782
        %v6346 = vpop.f32.mrf.mxu0
        %v6347 = vadd.f32 %v6282, %v6346
        %6348 = vmatmul.f32.gmra.mxu0 %v5789
        %v6349 = vpop.f32.mrf.mxu0
        %v6350 = vadd.f32 %v6285, %v6349
        %6351 = vmatmul.f32.gmra.mxu0 %v5796
        %v6352 = vpop.f32.mrf.mxu0
        %v6353 = vadd.f32 %v6288, %v6352
        %6354 = vmatmul.f32.gmra.mxu0 %v5803
        %v6355 = vpop.f32.mrf.mxu0
        %v6356 = vadd.f32 %v6291, %v6355
        %6357 = vmatmul.f32.gmra.mxu0 %v5810
        %v6358 = vpop.f32.mrf.mxu0
        %v6359 = vadd.f32 %v6294, %v6358
        %6360 = vmatmul.f32.gmra.mxu0 %v5817
        %v6361 = vpop.f32.mrf.mxu0
        %v6362 = vadd.f32 %v6297, %v6361
        %6363 = vmatmul.f32.gmra.mxu0 %v5824
        %v6364 = vpop.f32.mrf.mxu0
        %v6365 = vadd.f32 %v6300, %v6364
        %6366 = vmatmul.f32.gmra.mxu0 %v5831
        %v6367 = vpop.f32.mrf.mxu0
        %v6368 = vadd.f32 %v6303, %v6367
        %6369 = vmatmul.f32.gmra.mxu0 %v5838
        %v6370 = vpop.f32.mrf.mxu0
        %v6371 = vadd.f32 %v6306, %v6370
        %6372 = vmatmul.f32.gmra.mxu0 %v5845
        %v6373 = vpop.f32.mrf.mxu0
        %v6374 = vadd.f32 %v6309, %v6373
        %6375 = vmatmul.f32.gmra.mxu0 %v5852
        %v6376 = vpop.f32.mrf.mxu0
        %v6377 = vadd.f32 %v6312, %v6376
        %6378 = vmatmul.f32.gmra.mxu0 %v5859
        %v6379 = vpop.f32.mrf.mxu0
        %v6380 = vadd.f32 %v6315, %v6379
        %6381 = vmatmul.f32.gmra.mxu0 %v5866
        %v6382 = vpop.f32.mrf.mxu0
        %v6383 = vadd.f32 %v6318, %v6382
        %6384 = vmatmul.f32.gmra.mxu0 %v5873
        %v6385 = vpop.f32.mrf.mxu0
        %v6386 = vadd.f32 %v6321, %v6385
        %6387 = vmatmul.f32.gmra.mxu0 %v5880
        %v6388 = vpop.f32.mrf.mxu0
        %v6389 = vadd.f32 %v6324, %v6388
        %6390 = vmatmul.f32.gmra.mxu0 %v5887
        %v6391 = vpop.f32.mrf.mxu0
        %v6392 = vadd.f32 %v6327, %v6391
        %6393 = vdwg.mxu0
        %v6394 = vmax.f32 %v6347, 0.0
        %v6395 = vmax.f32 %v6350, 0.0
        %v6396 = vmax.f32 %v6353, 0.0
        %v6397 = vmax.f32 %v6356, 0.0
        %v6398 = vmax.f32 %v6359, 0.0
        %v6399 = vmax.f32 %v6362, 0.0
        %v6400 = vmax.f32 %v6365, 0.0
        %v6401 = vmax.f32 %v6368, 0.0
        %v6402 = vmax.f32 %v6371, 0.0
        %v6403 = vmax.f32 %v6374, 0.0
        %v6404 = vmax.f32 %v6377, 0.0
        %v6405 = vmax.f32 %v6380, 0.0
        %v6406 = vmax.f32 %v6383, 0.0
        %v6407 = vmax.f32 %v6386, 0.0
        %v6408 = vmax.f32 %v6389, 0.0
        %v6409 = vmax.f32 %v6392, 0.0
        %v6410 = vld [vmem:[%s8] sm:$0xff]
        %s6411 = sld [smem:[#allocation2]]
        %v6412 = vstv %s6411
        %6413 = vmatpush.xpose.msra.mxu0 %v6409
        %6414 = vmatpush.xpose.msra.mxu0 %v6408
        %6415 = vmatpush.xpose.msra.mxu0 %v6407
        %6416 = vmatpush.xpose.msra.mxu0 %v6406
        %6417 = vmatpush.xpose.msra.mxu0 %v6405
        %6418 = vmatpush.xpose.msra.mxu0 %v6404
        %6419 = vmatpush.xpose.msra.mxu0 %v6403
        %6420 = vmatpush.xpose.msra.mxu0 %v6402
        %6421 = vmatpush.xpose.msra.mxu0 %v6401
        %6422 = vmatpush.xpose.msra.mxu0 %v6400
        %6423 = vmatpush.xpose.msra.mxu0 %v6399
        %6424 = vmatpush.xpose.msra.mxu0 %v6398
        %6425 = vmatpush.xpose.msra.mxu0 %v6397
        %6426 = vmatpush.xpose.msra.mxu0 %v6396
        %6427 = vmatpush.xpose.msra.mxu0 %v6395
        %6428 = vmatpush.xpose.msra.mxu0 %v6394
        %6429 = vmatmul.f32.gmra.mxu0 %v6410
        %v6430 = vpop.f32.mrf.mxu0
        %v6431 = vadd.f32 %v6412, %v6430
        %6432 = vdwg.mxu0
        %v6433 = vxor.u32 %v6431, 2147483648
        %v6434 = vmul.f32 %v6433, 1.442695
        %v6435 = vpow.pop %v6434
        %v6436 = vadd.f32 %v6435, 1.0
        %v6437 = vrcp.pop %v6436
        %v6438 = vmul.f32 %v6436, %v6437
        %v6439 = vsub.f32 1.0, %v6438
        %v6440 = vmul.f32 %v6437, %v6439
        %v6441 = vadd.f32 %v6437, %v6440
        %vm6442 = vweird.f32 %v6436
        %vm6443 = vweird.f32 %v6437
        %vm6444 = vmor %vm6442, %vm6443
        %v6445 = vsel %vm6444, %v6437, %v6441
        %v6446 = vand.u32 2147483647, %v6436
        %vm6447 = vcmp.eq.f32.partialorder %v6446, 8.507059e+37
        %v6448 = vand.u32 %v6436, 2147483648
        %v6449 = vor.u32 1.1754944e-38, %v6448
        %v6450 = vsel %vm6447, %v6449, %v6445
        %v6451 = vmul.f32 1.0, %v6450
        %6452 = vst [vmem:[%s434] sm:$0xff] %v6451
        %s6453 = sand.u32 %s273, 1
        %s6454 = scalar_lea.sflag [#allocation4], %s6453
        %s6455 = sand.u32 %s273, 1
        %s6456 = smul.addr %s6455, 8
        %s6457 = scalar_lea.vmem [#allocation3], %s6456
        // Predicated region
        $region61: #{tpu_custom_call.1} parent=59 // pred_check
          %p6458 = pneg %p283
        $region62: #{tpu_custom_call.1} parent=59 // pred_check_branch
          %6460 = sbr.rel (%p6458) target = $region64
        $region63: #{tpu_custom_call.1} parent=59 // pred_region
          %6462 = vsyncadd %s6454, 0
          %s6463 = smul.addr %s25, 8
          %s6464 = scalar_lea.hbm %s10, %s6463
          %s6466 = sshll.u32 %s6457, 4
          %s6467 = int_to_ptr.vmem [resolvable:$true] %s6466
          %s6468 = sshll.u32 %s6464, 4
          %s6469 = int_to_ptr.hbm [resolvable:$true] %s6468
          %6471 = dma.vmem_to_hbm [thread:$0]  %s6467, 128, %s6469, %s6454
        $region64: #{tpu_custom_call.1} parent=59 // pred_fallthru
          _
      $region60: #{tpu_custom_call.1} parent=5 // pred_fallthru
        _
      %p6472 = scmp.le.s32.totalorder 2, %s20
      // Predicated region
      $region65: #{tpu_custom_call.1} parent=5 // pred_check
        %p6473 = pneg %p6472
      $region66: #{tpu_custom_call.1} parent=5 // pred_check_branch
        %6475 = sbr.rel (%p6473) target = $region68
      $region67: #{tpu_custom_call.1} parent=5 // pred_region
        %s6476 = ssub.s32 %s20, 2
        // Predicated region
        $region69: #{tpu_custom_call.1} parent=67 // pred_check
          %p6477 = pneg %p289
        $region70: #{tpu_custom_call.1} parent=67 // pred_check_branch
          %6479 = sbr.rel (%p6477) target = $region72
        $region71: #{tpu_custom_call.1} parent=67 // pred_region
          %s6480 = sand.u32 %s274, 1
          %s6481 = scalar_lea.sflag [#allocation4], %s6480
          %s6482 = sand.u32 %s274, 1
          %s6483 = smul.addr %s6482, 8
          %s6484 = scalar_lea.vmem [#allocation3], %s6483
          %6486 = dma.done %s6481, 128
        $region72: #{tpu_custom_call.1} parent=67 // pred_fallthru
          _
      $region68: #{tpu_custom_call.1} parent=5 // pred_fallthru
        _
    $region6: #{tpu_custom_call.1} parent=1 // loop_footer
      %s24 = sadd.s32 1, %s20
    $region7: #{tpu_custom_call.1} parent=1 // loop_footer_branch
      %19 = sbr.rel target = $region3
    $region8: #{tpu_custom_call.1} parent=1 // loop_exit
      _
    %6487 = vsyncpa [#allocation4], 1
    %s6488 = scalar_lea.sflag [#allocation4], 1
    %6489 = vsyncpa %s6488, 1

</llo_original>
